<compile_context>
chip_gen: v7x
topology: tpu7x:2x2x1
jax: 0.10.0
libtpu: 0.0.40
codegen_flags: <defaults>
</compile_context>

<pallas_src>
import jax
import jax.numpy as jnp
from jax.experimental import pallas as pl


def _round_up(v, m):
    return ((v + m - 1) // m) * m


# -----------------------------------------------------------------------------
# Pallas kernel: three fused (matmul -> ReLU) stages. Biases are pre-folded into
# the weight matrices, so the body is pure MXU work. Single step, no grid.
# -----------------------------------------------------------------------------
def _fused_mlp3_kernel(x_ref, a1_ref, a2_ref, a3_ref, o_ref):
    hp = jax.lax.Precision.HIGHEST
    x = x_ref[...]                                                  # (Kp, L)
    h1 = jnp.maximum(jnp.dot(a1_ref[...], x,
                             preferred_element_type=jnp.float32,
                             precision=hp), 0.0)                    # (2*HB, L)
    h2 = jnp.maximum(jnp.dot(a2_ref[...], h1,
                             preferred_element_type=jnp.float32,
                             precision=hp), 0.0)                    # (2*HB, L)
    h3 = jnp.maximum(jnp.dot(a3_ref[...], h2,
                             preferred_element_type=jnp.float32,
                             precision=hp), 0.0)                    # (OB, L)
    o_ref[...] = h3


def _fused_mlp3(x_cols, a1, a2, a3):
    ob = a3.shape[0]
    lt = x_cols.shape[1]
    return pl.pallas_call(
        _fused_mlp3_kernel,
        out_shape=jax.ShapeDtypeStruct((ob, lt), jnp.float32),
    )(x_cols, a1, a2, a3)


# -----------------------------------------------------------------------------
# Weight / input packing (all done once / in the wrapper by XLA).
# -----------------------------------------------------------------------------
def _pack_net(params, kp, hb):
    """Fold one conv_mlp_pppad into bias-folded matmul matrices.

    With an input column xext = [im2col(K=3*ref0); 1; 0-pad], the net is exactly
    ReLU(a3 @ ReLU(a2 @ ReLU(a1 @ xext))); row `ch` of a1/a2 carries the
    constant 1 through the ReLUs so the biases ride inside the matmuls.
    """
    w1, b1, w2, b2, w3, b3 = params
    ch, r = w1.shape[0], w1.shape[1]
    k = 3 * r
    # torch (Ch, R, 3, 1) -> (Ch, 3*R), K ordered (dh, r) to match im2col below.
    w1f = jnp.transpose(w1[:, :, :, 0], (0, 2, 1)).reshape(ch, k)
    a1 = jnp.zeros((hb, kp), jnp.float32)
    a1 = a1.at[:ch, :k].set(w1f).at[:ch, k].set(b1).at[ch, k].set(1.0)
    a2 = jnp.zeros((hb, hb), jnp.float32)
    a2 = a2.at[:ch, :ch].set(w2[:, :, 0, 0]).at[:ch, ch].set(b2).at[ch, ch].set(1.0)
    cout = w3.shape[0]
    a3 = jnp.zeros((cout, hb), jnp.float32)
    a3 = a3.at[:, :ch].set(w3[:, :, 0, 0]).at[:, ch].set(b3)
    return a1, a2, a3


def _stack_two_nets(net_a, net_b, ob):
    """Stack two packed nets so ONE matmul chain evaluates both on every lane.

    Output row 0 of the fused net is net_a's prediction, row 1 is net_b's
    (remaining rows up to `ob` are zero padding for sublane-aligned stores).
    """
    a1a, a2a, a3a = net_a
    a1b, a2b, a3b = net_b
    hb = a1a.shape[0]
    cout = a3a.shape[0]
    s1 = jnp.concatenate([a1a, a1b], axis=0)                         # (2hb, kp)
    s2 = jnp.zeros((2 * hb, 2 * hb), jnp.float32)
    s2 = s2.at[:hb, :hb].set(a2a).at[hb:, hb:].set(a2b)              # block-diag
    s3 = jnp.zeros((ob, 2 * hb), jnp.float32)
    s3 = s3.at[:cout, :hb].set(a3a).at[cout:2 * cout, hb:].set(a3b)
    return s1, s2, s3


def _build_cols(patch):
    """im2col for the (3,1) VALID conv, pre-packed in the wrapper.

    patch: (N, R, L, C) in the conv's NCHW layout (channels = R boundary rows,
    H = L border positions, W = C image channels).
    Returns (3*R, N*(L-2)*C): K ordered (dh, r); lanes ordered (n, h, c).
    """
    n, r, l, c = patch.shape
    lout = l - 2
    win = jnp.stack([patch[:, :, dh:dh + lout, :] for dh in range(3)], axis=1)
    cols = win.reshape(n, 3 * r, lout * c)
    return jnp.transpose(cols, (1, 0, 2)).reshape(3 * r, n * lout * c)


def _fused_two_side_mlp(cols_a, cols_b, weights):
    """Run two boundary nets on their respective patches in one pallas_call."""
    a1, a2, a3 = weights
    k3, la = cols_a.shape
    lb = cols_b.shape[1]
    lt = la + lb
    kp = a1.shape[1]
    lt_pad = _round_up(max(lt, 128), 128)            # lane-dense (multiple of 128)
    x = jnp.zeros((kp, lt_pad), jnp.float32)
    x = x.at[:k3, :la].set(cols_a)
    x = x.at[:k3, la:lt].set(cols_b)
    x = x.at[k3, :lt].set(1.0)                       # bias carrier row
    out = _fused_mlp3(x, a1, a2, a3)                 # (OB, lt_pad)
    # Row 0 = side A's prediction on every lane, row 1 = side B's; keep only the
    # valid lanes (padded / wrong-side lanes are garbage by construction).
    return out[0, :la], out[1, la:lt]


# -----------------------------------------------------------------------------
# calc_padding_pppad forward (Pallas-backed).
# -----------------------------------------------------------------------------
def _calc_padding_pppad_fwd(x, params_top, params_bottom, params_left,
                            params_right, *, padding):
    n, c, h, w = x.shape
    p = int(padding)
    if p == 0:
        return x

    ref0 = params_top[0].shape[1]          # boundary rows fed as conv channels
    ch = params_top[0].shape[0]            # hidden channels
    cout = params_top[4].shape[0]          # output channels (== 1 in the module)
    assert cout == 1, "calc_padding_pppad uses output_channels == 1"

    kp = _round_up(3 * ref0 + 1, 8)        # im2col K + bias carrier -> 16
    hb = _round_up(ch + 1, 8)              # hidden + carrier        -> 16
    ob = 8                                 # padded output sublanes (2 rows used)

    hpad, wpad = h + 2 * p, w + 2 * p
    padded = jnp.zeros((n, c, hpad, wpad), jnp.float32)
    padded = padded.at[:, :, p:h + p, p:w + p].set(x.astype(jnp.float32))

    w_tb = _stack_two_nets(_pack_net(params_top, kp, hb),
                           _pack_net(params_bottom, kp, hb), ob)
    w_lr = _stack_two_nets(_pack_net(params_left, kp, hb),
                           _pack_net(params_right, kp, hb), ob)

    for i in range(p):
        # ---- top & bottom (independent of each other): one fused call -------
        pt = jnp.transpose(padded[:, :, p - i:p - i + ref0, :], (0, 2, 3, 1))
        pb = jnp.transpose(padded[:, :, p + h - ref0 + i:p + h + i, :],
                           (0, 2, 3, 1))
        ot, obtm = _fused_two_side_mlp(_build_cols(pt), _build_cols(pb), w_tb)
        ot = ot.reshape(n, wpad - 2, c)
        obtm = obtm.reshape(n, wpad - 2, c)
        padded = padded.at[:, :, p - 1 - i, 1:wpad - 1].set(
            jnp.transpose(ot, (0, 2, 1)))
        padded = padded.at[:, :, p + h + i, 1:wpad - 1].set(
            jnp.transpose(obtm, (0, 2, 1)))

        # ---- left & right (read the rows just written): one fused call ------
        plft = jnp.transpose(padded[:, :, :, p - i:p - i + ref0], (0, 3, 2, 1))
        prgt = jnp.transpose(padded[:, :, :, p + w - ref0 + i:p + w + i],
                             (0, 3, 2, 1))
        ol, orgt = _fused_two_side_mlp(_build_cols(plft), _build_cols(prgt), w_lr)
        ol = ol.reshape(n, hpad - 2, c)
        orgt = orgt.reshape(n, hpad - 2, c)
        padded = padded.at[:, :, 1:hpad - 1, p - 1 - i].set(
            jnp.transpose(ol, (0, 2, 1)))
        padded = padded.at[:, :, 1:hpad - 1, p + w + i].set(
            jnp.transpose(orgt, (0, 2, 1)))

    return padded


calc_padding_pppad_forward = jax.jit(_calc_padding_pppad_fwd,
                                     static_argnames=("padding",))

# TODO(synk): the p padding rings are inherently sequential (ring i+1 reads the
# border cells written by ring i, and left/right read the rows written by
# top/bottom of the same ring), so the whole loop cannot be folded into a single
# pallas_call without changing the module's semantics; each ring uses two fused
# single-step calls (top+bottom, then left+right).


# -----------------------------------------------------------------------------
# Pure-JAX reference (transliteration of the PyTorch module).
# -----------------------------------------------------------------------------
def _conv_mlp_ref(xin, params):
    w1, b1, w2, b2, w3, b3 = params
    n, r, l, c = xin.shape
    lout = l - 2
    hp = jax.lax.Precision.HIGHEST
    y = jnp.zeros((n, lout, c, w1.shape[0]), jnp.float32)
    for dh in range(3):
        y = y + jnp.einsum('nrhc,dr->nhcd', xin[:, :, dh:dh + lout, :],
                           w1[:, :, dh, 0], precision=hp)
    y = jnp.maximum(y + b1, 0.0)
    y = jnp.maximum(jnp.einsum('nhcd,ed->nhce', y, w2[:, :, 0, 0],
                               precision=hp) + b2, 0.0)
    y = jnp.maximum(jnp.einsum('nhce,oe->nhco', y, w3[:, :, 0, 0],
                               precision=hp) + b3, 0.0)
    return jnp.transpose(y, (0, 3, 1, 2))                 # (N, Cout, L-2, C)


def _calc_padding_ref(x, params_top, params_bottom, params_left, params_right,
                      *, padding):
    n, c, h, w = x.shape
    p = int(padding)
    if p == 0:
        return x
    ref0 = params_top[0].shape[1]
    hpad, wpad = h + 2 * p, w + 2 * p
    xp_ = jnp.zeros((n, c, hpad, wpad), jnp.float32)
    xp_ = xp_.at[:, :, p:h + p, p:w + p].set(x.astype(jnp.float32))
    for i in range(p):
        xt = jnp.transpose(xp_[:, :, p - i:p + ref0 - i, :], (0, 2, 3, 1))
        xp_ = xp_.at[:, :, p - 1 - i:p - i, 1:wpad - 1].set(
            jnp.transpose(_conv_mlp_ref(xt, params_top), (0, 3, 1, 2)))
        xb = jnp.transpose(xp_[:, :, p + h - ref0 + i:p + h + i, :], (0, 2, 3, 1))
        xp_ = xp_.at[:, :, p + h + i:p + h + i + 1, 1:wpad - 1].set(
            jnp.transpose(_conv_mlp_ref(xb, params_bottom), (0, 3, 1, 2)))
        xl = jnp.transpose(xp_[:, :, :, p - i:p + ref0 - i], (0, 3, 2, 1))
        xp_ = xp_.at[:, :, 1:hpad - 1, p - 1 - i:p - i].set(
            jnp.transpose(_conv_mlp_ref(xl, params_left), (0, 3, 2, 1)))
        xr = jnp.transpose(xp_[:, :, :, p + w - ref0 + i:p + w + i], (0, 3, 2, 1))
        xp_ = xp_.at[:, :, 1:hpad - 1, p + w + i:p + w + i + 1].set(
            jnp.transpose(_conv_mlp_ref(xr, params_right), (0, 3, 2, 1)))
    return xp_


calc_padding_ref = jax.jit(_calc_padding_ref, static_argnames=("padding",))


def init_torch_params(key, cin, ch, cout, dtype=jnp.float32):
    """Deterministic synthetic params in PyTorch Conv2d (O, I, kh, kw) layout."""
    k1, k2, k3, k4, k5, k6 = jax.random.split(key, 6)
    w1 = 0.2 * jax.random.normal(k1, (ch, cin, 3, 1), dtype)   # Conv2d(cin, ch, (3,1))
    b1 = 0.1 * jax.random.normal(k2, (ch,), dtype)
    w2 = 0.2 * jax.random.normal(k3, (ch, ch, 1, 1), dtype)    # Conv2d(ch, ch, 1)
    b2 = 0.1 * jax.random.normal(k4, (ch,), dtype)
    w3 = 0.2 * jax.random.normal(k5, (cout, ch, 1, 1), dtype)  # Conv2d(ch, cout, 1)
    b3 = 0.1 * jax.random.normal(k6, (cout,), dtype)
    return (w1, b1, w2, b2, w3, b3)


if __name__ == "__main__":
    # Shapes consistent with the module: ref = prm.REF_PPPAD = (4, 3)
    # (4 boundary rows as conv channels, wp = 3), hidden_channels = 8,
    # output_channels = 1; image (N, C, H, W) = (2, 4, 16, 16); padding = 2.
    N, C, H, W = 2, 4, 16, 16
    PAD = 2
    REF0 = 4
    HIDDEN, COUT = 8, 1

    key = jax.random.PRNGKey(0)
    kx, kt, kb, kl, kr = jax.random.split(key, 5)
    x = jax.random.normal(kx, (N, C, H, W), jnp.float32)
    p_top = init_torch_params(kt, REF0, HIDDEN, COUT)
    p_bottom = init_torch_params(kb, REF0, HIDDEN, COUT)
    p_left = init_torch_params(kl, REF0, HIDDEN, COUT)
    p_right = init_torch_params(kr, REF0, HIDDEN, COUT)

    out = jax.block_until_ready(
        calc_padding_pppad_forward(x, p_top, p_bottom, p_left, p_right,
                                   padding=PAD))
    ref = jax.block_until_ready(
        calc_padding_ref(x, p_top, p_bottom, p_left, p_right, padding=PAD))

    assert out.shape == (N, C, H + 2 * PAD, W + 2 * PAD), out.shape
    max_err = float(jnp.max(jnp.abs(out - ref)))
    assert jnp.allclose(out, ref, atol=1e-4, rtol=1e-4), \
        f"mismatch vs reference (max abs err {max_err})"

    print("KERNEL_OK")
</pallas_src>

<mosaic_0001>
module attributes {stable_mosaic.version = 11 : i64} {
  func.func @_fused_mlp3_kernel(%arg0: memref<16x384xf32, #tpu.memory_space<vmem>>, %arg1: memref<32x16xf32, #tpu.memory_space<vmem>>, %arg2: memref<32x32xf32, #tpu.memory_space<vmem>>, %arg3: memref<8x32xf32, #tpu.memory_space<vmem>>, %arg4: memref<8x384xf32, #tpu.memory_space<vmem>>) attributes {dimension_semantics = [], scalar_prefetch = 0 : i64, scratch_operands = 0 : i64, tpu.core_type = #tpu.core_type<tc>} {
    %c0 = arith.constant 0 : index
    %c0_0 = arith.constant 0 : index
    %0 = vector.load %arg0[%c0, %c0_0] : memref<16x384xf32, #tpu.memory_space<vmem>>, vector<16x384xf32>
    %c0_1 = arith.constant 0 : index
    %c0_2 = arith.constant 0 : index
    %1 = vector.load %arg1[%c0_1, %c0_2] : memref<32x16xf32, #tpu.memory_space<vmem>>, vector<32x16xf32>
    %cst = arith.constant dense<0.000000e+00> : vector<32x384xf32>
    %2 = tpu.matmul %1, %0, %cst {dimension_numbers = #tpu.dot_dimension_numbers<[1], [0], [0], [1], [0, 0, 1, 1], [], []>, precision = #tpu.contract_precision<fp32>} : vector<32x16xf32>, vector<16x384xf32>, vector<32x384xf32> -> vector<32x384xf32>
    %cst_3 = arith.constant 0.000000e+00 : f32
    %3 = vector.broadcast %cst_3 : f32 to vector<32x384xf32>
    %4 = arith.maximumf %2, %3 : vector<32x384xf32>
    %c0_4 = arith.constant 0 : index
    %c0_5 = arith.constant 0 : index
    %5 = vector.load %arg2[%c0_4, %c0_5] : memref<32x32xf32, #tpu.memory_space<vmem>>, vector<32x32xf32>
    %cst_6 = arith.constant dense<0.000000e+00> : vector<32x384xf32>
    %6 = tpu.matmul %5, %4, %cst_6 {dimension_numbers = #tpu.dot_dimension_numbers<[1], [0], [0], [1], [0, 0, 1, 1], [], []>, precision = #tpu.contract_precision<fp32>} : vector<32x32xf32>, vector<32x384xf32>, vector<32x384xf32> -> vector<32x384xf32>
    %cst_7 = arith.constant 0.000000e+00 : f32
    %7 = vector.broadcast %cst_7 : f32 to vector<32x384xf32>
    %8 = arith.maximumf %6, %7 : vector<32x384xf32>
    %c0_8 = arith.constant 0 : index
    %c0_9 = arith.constant 0 : index
    %9 = vector.load %arg3[%c0_8, %c0_9] : memref<8x32xf32, #tpu.memory_space<vmem>>, vector<8x32xf32>
    %cst_10 = arith.constant dense<0.000000e+00> : vector<8x384xf32>
    %10 = tpu.matmul %9, %8, %cst_10 {dimension_numbers = #tpu.dot_dimension_numbers<[1], [0], [0], [1], [0, 0, 1, 1], [], []>, precision = #tpu.contract_precision<fp32>} : vector<8x32xf32>, vector<32x384xf32>, vector<8x384xf32> -> vector<8x384xf32>
    %cst_11 = arith.constant 0.000000e+00 : f32
    %11 = vector.broadcast %cst_11 : f32 to vector<8x384xf32>
    %12 = arith.maximumf %10, %11 : vector<8x384xf32>
    %c0_12 = arith.constant 0 : index
    %c0_13 = arith.constant 0 : index
    %13 = vector.load %arg4[%c0_12, %c0_13] : memref<8x384xf32, #tpu.memory_space<vmem>>, vector<8x384xf32>
    tpu.vector_store %arg4[%c0_12, %c0_13], %12 {strides = array<i32>} : memref<8x384xf32, #tpu.memory_space<vmem>>, vector<8x384xf32>,
    return
  }
}

</mosaic_0001>

<llo_original>
// kernel: squeeze.32
$region0: #{squeeze.32}
  %s0 = inlined_call_operand.vmem [shape: f32[144], index: 0, kind: input, shape index: {}]
  %s1 = inlined_call_operand.vmem [shape: f32[2,18,4], index: 1, kind: output, shape index: {}]
  $region1: #{squeeze.32} parent=0
    #allocation0 [shape = 'u8[4096]{0}', space=vmem, size = 0x1000, scoped, tag = 'scoped mem for input reshape']
    %s3 = sshllo.u32 0, 2
    %v4 = vld [vmem:[%s0] sm:%s3]
    %5 = vst [vmem:[#allocation0] sm:%s3] %v4
    %v6 = vld [vmem:[#allocation0] sm:$0x3]
    %vm7 = vcmask 31744
    %8 = vst.msk [vmem:[%s1] ss:$38 sm:$0x3] %vm7, %v6
    %v9 = vld [vmem:[#allocation0] sm:$0x3]
    %10 = vrot.lane.b32.xlu0 %v9, 124
    %v11 = vpop.permute.xlu0 %10
    %vm12 = vcmask 31744
    %s13 = scalar_lea.vmem %s1, 1
    %14 = vst.msk [vmem:[%s13] ss:$38 sm:$0x3] %vm12, %v11
    %v15 = vld [vmem:[#allocation0] sm:$0x3]
    %16 = vrot.lane.b32.xlu0 %v15, 120
    %v17 = vpop.permute.xlu0 %16
    %vm18 = vcmask 31744
    %s19 = scalar_lea.vmem %s1, 2
    %20 = vst.msk [vmem:[%s19] ss:$38 sm:$0x3] %vm18, %v17
    %v21 = vld [vmem:[#allocation0] sm:$0x3]
    %22 = vrot.lane.b32.xlu0 %v21, 116
    %v23 = vpop.permute.xlu0 %22
    %vm24 = vcmask 31744
    %s25 = scalar_lea.vmem %s1, 3
    %26 = vst.msk [vmem:[%s25] ss:$38 sm:$0x3] %vm24, %v23
    %v27 = vld [vmem:[#allocation0] sm:$0x1]
    %28 = vrot.lane.b32.xlu0 %v27, 112
    %v29 = vpop.permute.xlu0 %28
    %vm30 = vcmask 31744
    %s31 = scalar_lea.vmem %s1, 4
    %32 = vst.msk [vmem:[%s31] sm:$0x1] %vm30, %v29
    %v33 = vld [vmem:[#allocation0] sm:$0x1]
    %34 = vrot.lane.b32.xlu0 %v33, 108
    %v35 = vpop.permute.xlu0 %34
    %vm36 = vcmask 31744
    %s37 = scalar_lea.vmem %s1, 5
    %38 = vst.msk [vmem:[%s37] sm:$0x1] %vm36, %v35
    %v39 = vld [vmem:[#allocation0] sm:$0x1]
    %40 = vrot.lane.b32.xlu0 %v39, 104
    %v41 = vpop.permute.xlu0 %40
    %vm42 = vcmask 31744
    %s43 = scalar_lea.vmem %s1, 6
    %44 = vst.msk [vmem:[%s43] sm:$0x1] %vm42, %v41
    %v45 = vld [vmem:[#allocation0] sm:$0x1]
    %46 = vrot.lane.b32.xlu0 %v45, 100
    %v47 = vpop.permute.xlu0 %46
    %vm48 = vcmask 31744
    %s49 = scalar_lea.vmem %s1, 7
    %50 = vst.msk [vmem:[%s49] sm:$0x1] %vm48, %v47
    %v51 = vld [vmem:[#allocation0] sm:$0x1]
    %52 = vrot.lane.b32.xlu0 %v51, 96
    %v53 = vpop.permute.xlu0 %52
    %vm54 = vcmask 31744
    %s55 = scalar_lea.vmem %s1, 8
    %56 = vst.msk [vmem:[%s55] sm:$0x1] %vm54, %v53
    %v57 = vld [vmem:[#allocation0] sm:$0x1]
    %58 = vrot.lane.b32.xlu0 %v57, 92
    %v59 = vpop.permute.xlu0 %58
    %vm60 = vcmask 31744
    %s61 = scalar_lea.vmem %s1, 9
    %62 = vst.msk [vmem:[%s61] sm:$0x1] %vm60, %v59
    %v63 = vld [vmem:[#allocation0] sm:$0x1]
    %64 = vrot.lane.b32.xlu0 %v63, 88
    %v65 = vpop.permute.xlu0 %64
    %vm66 = vcmask 31744
    %s67 = scalar_lea.vmem %s1, 10
    %68 = vst.msk [vmem:[%s67] sm:$0x1] %vm66, %v65
    %v69 = vld [vmem:[#allocation0] sm:$0x1]
    %70 = vrot.lane.b32.xlu0 %v69, 84
    %v71 = vpop.permute.xlu0 %70
    %vm72 = vcmask 31744
    %s73 = scalar_lea.vmem %s1, 11
    %74 = vst.msk [vmem:[%s73] sm:$0x1] %vm72, %v71
    %v75 = vld [vmem:[#allocation0] sm:$0x1]
    %76 = vrot.lane.b32.xlu0 %v75, 80
    %v77 = vpop.permute.xlu0 %76
    %vm78 = vcmask 31744
    %s79 = scalar_lea.vmem %s1, 12
    %80 = vst.msk [vmem:[%s79] sm:$0x1] %vm78, %v77
    %v81 = vld [vmem:[#allocation0] sm:$0x1]
    %82 = vrot.lane.b32.xlu0 %v81, 76
    %v83 = vpop.permute.xlu0 %82
    %vm84 = vcmask 31744
    %s85 = scalar_lea.vmem %s1, 13
    %86 = vst.msk [vmem:[%s85] sm:$0x1] %vm84, %v83
    %v87 = vld [vmem:[#allocation0] sm:$0x1]
    %88 = vrot.lane.b32.xlu0 %v87, 72
    %v89 = vpop.permute.xlu0 %88
    %vm90 = vcmask 31744
    %s91 = scalar_lea.vmem %s1, 14
    %92 = vst.msk [vmem:[%s91] sm:$0x1] %vm90, %v89
    %v93 = vld [vmem:[#allocation0] sm:$0x1]
    %94 = vrot.lane.b32.xlu0 %v93, 68
    %v95 = vpop.permute.xlu0 %94
    %vm96 = vcmask 31744
    %s97 = scalar_lea.vmem %s1, 15
    %98 = vst.msk [vmem:[%s97] sm:$0x1] %vm96, %v95
    %v99 = vld [vmem:[#allocation0] sm:$0x1]
    %100 = vrot.lane.b32.xlu0 %v99, 64
    %v101 = vpop.permute.xlu0 %100
    %vm102 = vcmask 31744
    %s103 = scalar_lea.vmem %s1, 16
    %104 = vst.msk [vmem:[%s103] sm:$0x1] %vm102, %v101
    %v105 = vld [vmem:[#allocation0] sm:$0x1]
    %106 = vrot.lane.b32.xlu0 %v105, 60
    %v107 = vpop.permute.xlu0 %106
    %vm108 = vcmask 31744
    %s109 = scalar_lea.vmem %s1, 17
    %110 = vst.msk [vmem:[%s109] sm:$0x1] %vm108, %v107
    %v111 = vld [vmem:[#allocation0] sm:$0x1]
    %112 = vrot.lane.b32.xlu0 %v111, 56
    %v113 = vpop.permute.xlu0 %112
    %vm114 = vcmask 31744
    %s115 = scalar_lea.vmem %s1, 24
    %116 = vst.msk [vmem:[%s115] sm:$0x1] %vm114, %v113
    %v117 = vld [vmem:[#allocation0] sm:$0x1]
    %118 = vrot.lane.b32.xlu0 %v117, 52
    %v119 = vpop.permute.xlu0 %118
    %vm120 = vcmask 31744
    %s121 = scalar_lea.vmem %s1, 25
    %122 = vst.msk [vmem:[%s121] sm:$0x1] %vm120, %v119
    %v123 = vld [vmem:[#allocation0] sm:$0x1]
    %124 = vrot.lane.b32.xlu0 %v123, 48
    %v125 = vpop.permute.xlu0 %124
    %vm126 = vcmask 31744
    %s127 = scalar_lea.vmem %s1, 26
    %128 = vst.msk [vmem:[%s127] sm:$0x1] %vm126, %v125
    %v129 = vld [vmem:[#allocation0] sm:$0x1]
    %130 = vrot.lane.b32.xlu0 %v129, 44
    %v131 = vpop.permute.xlu0 %130
    %vm132 = vcmask 31744
    %s133 = scalar_lea.vmem %s1, 27
    %134 = vst.msk [vmem:[%s133] sm:$0x1] %vm132, %v131
    %v135 = vld [vmem:[#allocation0] sm:$0x1]
    %136 = vrot.lane.b32.xlu0 %v135, 40
    %v137 = vpop.permute.xlu0 %136
    %vm138 = vcmask 31744
    %s139 = scalar_lea.vmem %s1, 28
    %140 = vst.msk [vmem:[%s139] sm:$0x1] %vm138, %v137
    %v141 = vld [vmem:[#allocation0] sm:$0x1]
    %142 = vrot.lane.b32.xlu0 %v141, 36
    %v143 = vpop.permute.xlu0 %142
    %vm144 = vcmask 31744
    %s145 = scalar_lea.vmem %s1, 29
    %146 = vst.msk [vmem:[%s145] sm:$0x1] %vm144, %v143
    %v147 = vld [vmem:[#allocation0] sm:$0x1]
    %148 = vrot.lane.b32.xlu0 %v147, 32
    %v149 = vpop.permute.xlu0 %148
    %vm150 = vcmask 31744
    %s151 = scalar_lea.vmem %s1, 30
    %152 = vst.msk [vmem:[%s151] sm:$0x1] %vm150, %v149
    %v153 = vld [vmem:[#allocation0] sm:$0x1]
    %154 = vrot.lane.b32.xlu0 %v153, 28
    %v155 = vpop.permute.xlu0 %154
    %vm156 = vcmask 31744
    %s157 = scalar_lea.vmem %s1, 31
    %158 = vst.msk [vmem:[%s157] sm:$0x1] %vm156, %v155
    %v159 = vld [vmem:[#allocation0] sm:$0x1]
    %160 = vrot.lane.b32.xlu0 %v159, 24
    %v161 = vpop.permute.xlu0 %160
    %vm162 = vcmask 31744
    %s163 = scalar_lea.vmem %s1, 32
    %164 = vst.msk [vmem:[%s163] sm:$0x1] %vm162, %v161
    %v165 = vld [vmem:[#allocation0] sm:$0x1]
    %166 = vrot.lane.b32.xlu0 %v165, 20
    %v167 = vpop.permute.xlu0 %166
    %vm168 = vcmask 31744
    %s169 = scalar_lea.vmem %s1, 33
    %170 = vst.msk [vmem:[%s169] sm:$0x1] %vm168, %v167
    %v171 = vld [vmem:[#allocation0] sm:$0x1]
    %172 = vrot.lane.b32.xlu0 %v171, 16
    %v173 = vpop.permute.xlu0 %172
    %vm174 = vcmask 31744
    %s175 = scalar_lea.vmem %s1, 34
    %176 = vst.msk [vmem:[%s175] sm:$0x1] %vm174, %v173
    %v177 = vld [vmem:[#allocation0] sm:$0x1]
    %178 = vrot.lane.b32.xlu0 %v177, 12
    %v179 = vpop.permute.xlu0 %178
    %vm180 = vcmask 31744
    %s181 = scalar_lea.vmem %s1, 35
    %182 = vst.msk [vmem:[%s181] sm:$0x1] %vm180, %v179
    %v183 = vld [vmem:[#allocation0] sm:$0x1]
    %184 = vrot.lane.b32.xlu0 %v183, 8
    %v185 = vpop.permute.xlu0 %184
    %vm186 = vcmask 31744
    %s187 = scalar_lea.vmem %s1, 36
    %188 = vst.msk [vmem:[%s187] sm:$0x1] %vm186, %v185
    %v189 = vld [vmem:[#allocation0] sm:$0x1]
    %190 = vrot.lane.b32.xlu0 %v189, 4
    %v191 = vpop.permute.xlu0 %190
    %vm192 = vcmask 31744
    %s193 = scalar_lea.vmem %s1, 37
    %194 = vst.msk [vmem:[%s193] sm:$0x1] %vm192, %v191

// kernel: _calc_padding_pppad_fwd.4
$region0: #{_calc_padding_pppad_fwd.4}
  #allocation0 [shape = 'u32[]', space=smem, size = 0x4, offset = 0x4, fixed_abs, tag = 'smem constant byte address 0x4 - core index']
  #allocation1 [shape = 'u32[144,128]{1,0:T(1,128)}', space=vmem, size = 0x12000, scoped, tag = 'internal scratch']
  %s0 = inlined_call_operand.vmem [shape: f32[16,384], index: 0, kind: input, shape index: {}]
  %s1 = inlined_call_operand.vmem [shape: f32[32,16], index: 1, kind: input, shape index: {}]
  %s2 = inlined_call_operand.vmem [shape: f32[32,32], index: 2, kind: input, shape index: {}]
  %s3 = inlined_call_operand.vmem [shape: f32[8,32], index: 3, kind: input, shape index: {}]
  %s4 = inlined_call_operand.vmem [shape: f32[8,384], index: 4, kind: output, shape index: {}]
  %s5 = sld [smem:[#allocation0]]
  $region26: #{_calc_padding_pppad_fwd.4} parent=0
    _
  %s7 = ssub.s32 1, %s5
  %s8 = scalar_select 0, %s7, %s5
  // Predicated region
  $region2: #{_calc_padding_pppad_fwd.4} parent=0 // pred_check
    _
  $region3: #{_calc_padding_pppad_fwd.4} parent=0 // pred_check_branch
    %10 = sbr.rel (0) target = $region5
  $region4: #{_calc_padding_pppad_fwd.4} parent=0 // pred_region
    _
  $region5: #{_calc_padding_pppad_fwd.4} parent=0 // pred_fallthru
    _
  // Predicated region
  $region6: #{_calc_padding_pppad_fwd.4} parent=0 // pred_check
    _
  $region7: #{_calc_padding_pppad_fwd.4} parent=0 // pred_check_branch
    %12 = sbr.rel (0) target = $region9
  $region8: #{_calc_padding_pppad_fwd.4} parent=0 // pred_region
    _
  $region9: #{_calc_padding_pppad_fwd.4} parent=0 // pred_fallthru
    _
  // Predicated region
  $region10: #{_calc_padding_pppad_fwd.4} parent=0 // pred_check
    _
  $region11: #{_calc_padding_pppad_fwd.4} parent=0 // pred_check_branch
    %14 = sbr.rel (0) target = $region13
  $region12: #{_calc_padding_pppad_fwd.4} parent=0 // pred_region
    _
  $region13: #{_calc_padding_pppad_fwd.4} parent=0 // pred_fallthru
    _
  // Predicated region
  $region14: #{_calc_padding_pppad_fwd.4} parent=0 // pred_check
    _
  $region15: #{_calc_padding_pppad_fwd.4} parent=0 // pred_check_branch
    %16 = sbr.rel (0) target = $region17
  $region16: #{_calc_padding_pppad_fwd.4} parent=0 // pred_region
    _
  $region17: #{_calc_padding_pppad_fwd.4} parent=0 // pred_fallthru
    _
  %v17 = vld [vmem:[%s0] sm:$0xff]
  %v18 = vld [vmem:[%s0 + $0x8] sm:$0xff]
  %v19 = vld [vmem:[%s0 + $0x10] sm:$0xff]
  %v20 = vld [vmem:[%s0 + $0x18] sm:$0xff]
  %v21 = vld [vmem:[%s0 + $0x20] sm:$0xff]
  %v22 = vld [vmem:[%s0 + $0x28] sm:$0xff]
  %v23 = vld [vmem:[%s1] sm:$0xff]
  %v24 = vld [vmem:[%s1 + $0x8] sm:$0xff]
  %v25 = vld [vmem:[%s1 + $0x10] sm:$0xff]
  %v26 = vld [vmem:[%s1 + $0x18] sm:$0xff]
  %vm27 = vcmask 130048
  %v29 = vsel %vm27, %v23, 0
  %v32 = vsel %vm27, %v24, 0
  %v35 = vsel %vm27, %v25, 0
  %v38 = vsel %vm27, %v26, 0
  %v40 = vand.u32 %v18, 4294901760
  %41 = vmatprep.subr.mxu0 %v40
  %v42 = vand.u32 %v17, 4294901760
  %43 = vmatpush1.msra.mxu0 %v42
  %v44 = vand.u32 %v21, 4294901760
  %45 = vmatprep.subr.mxu0 %v44
  %v46 = vand.u32 %v20, 4294901760
  %47 = vmatpush1.msra.mxu0 %v46
  %48 = vmatprep.subr.mxu0 0.0
  %49 = vmatpush1.msra.mxu0 0.0
  %50 = vmatprep.subr.mxu0 0.0
  %51 = vmatpush1.msra.mxu0 0.0
  %52 = vmatprep.subr.mxu0 0.0
  %53 = vmatpush1.msra.mxu0 0.0
  %54 = vmatprep.subr.mxu0 0.0
  %55 = vmatpush1.msra.mxu0 0.0
  %56 = vmatprep.subr.mxu0 0.0
  %57 = vmatpush1.msra.mxu0 0.0
  %58 = vmatprep.subr.mxu0 0.0
  %59 = vmatpush1.msra.mxu0 0.0
  %60 = vmatprep.subr.mxu0 0.0
  %61 = vmatpush1.msra.mxu0 0.0
  %62 = vmatprep.subr.mxu0 0.0
  %63 = vmatpush1.msra.mxu0 0.0
  %64 = vmatprep.subr.mxu0 0.0
  %65 = vmatpush1.msra.mxu0 0.0
  %66 = vmatprep.subr.mxu0 0.0
  %67 = vmatpush1.msra.mxu0 0.0
  %68 = vmatprep.subr.mxu0 0.0
  %69 = vmatpush1.msra.mxu0 0.0
  %70 = vmatprep.subr.mxu0 0.0
  %71 = vmatpush1.msra.mxu0 0.0
  %72 = vmatprep.subr.mxu0 0.0
  %73 = vmatpush1.msra.mxu0 0.0
  %74 = vmatprep.subr.mxu0 0.0
  %75 = vmatpush1.msra.mxu0 0.0
  %76 = vmatprep.subr.mxu0 0.0
  %77 = vmatpush1.msra.mxu0 0.0
  %78 = vmatprep.subr.mxu0 0.0
  %79 = vmatpush1.msra.mxu0 0.0
  %80 = vmatprep.subr.mxu0 0.0
  %81 = vmatpush1.msra.mxu0 0.0
  %82 = vmatprep.subr.mxu0 0.0
  %83 = vmatpush1.msra.mxu0 0.0
  %84 = vmatprep.subr.mxu0 0.0
  %85 = vmatpush1.msra.mxu0 0.0
  %86 = vmatprep.subr.mxu0 0.0
  %87 = vmatpush1.msra.mxu0 0.0
  %88 = vmatprep.subr.mxu0 0.0
  %89 = vmatpush1.msra.mxu0 0.0
  %90 = vmatprep.subr.mxu0 0.0
  %91 = vmatpush1.msra.mxu0 0.0
  %92 = vmatprep.subr.mxu0 0.0
  %93 = vmatpush1.msra.mxu0 0.0
  %94 = vmatprep.subr.mxu0 0.0
  %95 = vmatpush1.msra.mxu0 0.0
  %96 = vmatprep.subr.mxu0 0.0
  %97 = vmatpush1.msra.mxu0 0.0
  %98 = vmatprep.subr.mxu0 0.0
  %99 = vmatpush1.msra.mxu0 0.0
  %100 = vmatprep.subr.mxu0 0.0
  %101 = vmatpush1.msra.mxu0 0.0
  %102 = vmatprep.subr.mxu0 0.0
  %103 = vmatpush1.msra.mxu0 0.0
  %104 = vmatprep.subr.mxu0 0.0
  %105 = vmatpush1.msra.mxu0 0.0
  %106 = vmatprep.subr.mxu0 0.0
  %107 = vmatpush1.msra.mxu0 0.0
  %108 = vmatprep.mubr.f32.mxu0 0.0
  %v109 = vand.u32 %v29, 4294901760
  %v110 = vsub.f32 %v29, %v109
  %v111 = vand.u32 %v110, 4294901760
  %v112 = vsub.f32 %v110, %v111
  %v113 = vand.u32 %v112, 4294901760
  %114 = vmatmul.mubr.f32.gmra.mrb[0].mxu0 %v113
  %v115 = vpop.f32.mrb[0].mxu0
  %v116 = vadd.f32 0.0, %v115
  %v117 = vpop.f32.mrb[0].mxu0
  %v118 = vadd.f32 0.0, %v117
  %119 = vmatprep.mubr.f32.mxu0 0.0
  %v120 = vand.u32 %v32, 4294901760
  %v121 = vsub.f32 %v32, %v120
  %v122 = vand.u32 %v121, 4294901760
  %v123 = vsub.f32 %v121, %v122
  %v124 = vand.u32 %v123, 4294901760
  %125 = vmatmul.mubr.f32.gmra.mrb[0].mxu0 %v124
  %v126 = vpop.f32.mrb[0].mxu0
  %v127 = vadd.f32 0.0, %v126
  %v128 = vpop.f32.mrb[0].mxu0
  %v129 = vadd.f32 0.0, %v128
  %130 = vmatprep.mubr.f32.mxu0 0.0
  %v131 = vand.u32 %v35, 4294901760
  %v132 = vsub.f32 %v35, %v131
  %v133 = vand.u32 %v132, 4294901760
  %v134 = vsub.f32 %v132, %v133
  %v135 = vand.u32 %v134, 4294901760
  %136 = vmatmul.mubr.f32.gmra.mrb[0].mxu0 %v135
  %v137 = vpop.f32.mrb[0].mxu0
  %v138 = vadd.f32 0.0, %v137
  %v139 = vpop.f32.mrb[0].mxu0
  %v140 = vadd.f32 0.0, %v139
  %141 = vmatprep.mubr.f32.mxu0 0.0
  %v142 = vand.u32 %v38, 4294901760
  %v143 = vsub.f32 %v38, %v142
  %v144 = vand.u32 %v143, 4294901760
  %v145 = vsub.f32 %v143, %v144
  %v146 = vand.u32 %v145, 4294901760
  %147 = vmatmul.mubr.f32.gmra.mrb[0].mxu0 %v146
  %v148 = vpop.f32.mrb[0].mxu0
  %v149 = vadd.f32 0.0, %v148
  %v150 = vpop.f32.mrb[0].mxu0
  %v151 = vadd.f32 0.0, %v150
  %152 = vdwg.mxu0
  %v153 = vand.u32 %v18, 4294901760
  %v154 = vsub.f32 %v18, %v153
  %v155 = vand.u32 %v154, 4294901760
  %v156 = vsub.f32 %v154, %v155
  %v157 = vand.u32 %v156, 4294901760
  %158 = vmatprep.subr.mxu0 %v157
  %v159 = vand.u32 %v17, 4294901760
  %v160 = vsub.f32 %v17, %v159
  %v161 = vand.u32 %v160, 4294901760
  %v162 = vsub.f32 %v160, %v161
  %v163 = vand.u32 %v162, 4294901760
  %164 = vmatpush1.msra.mxu0 %v163
  %v165 = vand.u32 %v21, 4294901760
  %v166 = vsub.f32 %v21, %v165
  %v167 = vand.u32 %v166, 4294901760
  %v168 = vsub.f32 %v166, %v167
  %v169 = vand.u32 %v168, 4294901760
  %170 = vmatprep.subr.mxu0 %v169
  %v171 = vand.u32 %v20, 4294901760
  %v172 = vsub.f32 %v20, %v171
  %v173 = vand.u32 %v172, 4294901760
  %v174 = vsub.f32 %v172, %v173
  %v175 = vand.u32 %v174, 4294901760
  %176 = vmatpush1.msra.mxu0 %v175
  %177 = vmatprep.subr.mxu0 0.0
  %178 = vmatpush1.msra.mxu0 0.0
  %179 = vmatprep.subr.mxu0 0.0
  %180 = vmatpush1.msra.mxu0 0.0
  %181 = vmatprep.subr.mxu0 0.0
  %182 = vmatpush1.msra.mxu0 0.0
  %183 = vmatprep.subr.mxu0 0.0
  %184 = vmatpush1.msra.mxu0 0.0
  %185 = vmatprep.subr.mxu0 0.0
  %186 = vmatpush1.msra.mxu0 0.0
  %187 = vmatprep.subr.mxu0 0.0
  %188 = vmatpush1.msra.mxu0 0.0
  %189 = vmatprep.subr.mxu0 0.0
  %190 = vmatpush1.msra.mxu0 0.0
  %191 = vmatprep.subr.mxu0 0.0
  %192 = vmatpush1.msra.mxu0 0.0
  %193 = vmatprep.subr.mxu0 0.0
  %194 = vmatpush1.msra.mxu0 0.0
  %195 = vmatprep.subr.mxu0 0.0
  %196 = vmatpush1.msra.mxu0 0.0
  %197 = vmatprep.subr.mxu0 0.0
  %198 = vmatpush1.msra.mxu0 0.0
  %199 = vmatprep.subr.mxu0 0.0
  %200 = vmatpush1.msra.mxu0 0.0
  %201 = vmatprep.subr.mxu0 0.0
  %202 = vmatpush1.msra.mxu0 0.0
  %203 = vmatprep.subr.mxu0 0.0
  %204 = vmatpush1.msra.mxu0 0.0
  %205 = vmatprep.subr.mxu0 0.0
  %206 = vmatpush1.msra.mxu0 0.0
  %207 = vmatprep.subr.mxu0 0.0
  %208 = vmatpush1.msra.mxu0 0.0
  %209 = vmatprep.subr.mxu0 0.0
  %210 = vmatpush1.msra.mxu0 0.0
  %211 = vmatprep.subr.mxu0 0.0
  %212 = vmatpush1.msra.mxu0 0.0
  %213 = vmatprep.subr.mxu0 0.0
  %214 = vmatpush1.msra.mxu0 0.0
  %215 = vmatprep.subr.mxu0 0.0
  %216 = vmatpush1.msra.mxu0 0.0
  %217 = vmatprep.subr.mxu0 0.0
  %218 = vmatpush1.msra.mxu0 0.0
  %219 = vmatprep.subr.mxu0 0.0
  %220 = vmatpush1.msra.mxu0 0.0
  %221 = vmatprep.subr.mxu0 0.0
  %222 = vmatpush1.msra.mxu0 0.0
  %223 = vmatprep.subr.mxu0 0.0
  %224 = vmatpush1.msra.mxu0 0.0
  %225 = vmatprep.subr.mxu0 0.0
  %226 = vmatpush1.msra.mxu0 0.0
  %227 = vmatprep.subr.mxu0 0.0
  %228 = vmatpush1.msra.mxu0 0.0
  %229 = vmatprep.subr.mxu0 0.0
  %230 = vmatpush1.msra.mxu0 0.0
  %231 = vmatprep.subr.mxu0 0.0
  %232 = vmatpush1.msra.mxu0 0.0
  %233 = vmatprep.subr.mxu0 0.0
  %234 = vmatpush1.msra.mxu0 0.0
  %235 = vmatprep.subr.mxu0 0.0
  %236 = vmatpush1.msra.mxu0 0.0
  %237 = vmatprep.mubr.f32.mxu0 0.0
  %v238 = vand.u32 %v29, 4294901760
  %239 = vmatmul.mubr.f32.gmra.mrb[0].mxu0 %v238
  %v240 = vpop.f32.mrb[0].mxu0
  %v241 = vadd.f32 %v116, %v240
  %v242 = vpop.f32.mrb[0].mxu0
  %v243 = vadd.f32 %v118, %v242
  %244 = vmatprep.mubr.f32.mxu0 0.0
  %v245 = vand.u32 %v32, 4294901760
  %246 = vmatmul.mubr.f32.gmra.mrb[0].mxu0 %v245
  %v247 = vpop.f32.mrb[0].mxu0
  %v248 = vadd.f32 %v127, %v247
  %v249 = vpop.f32.mrb[0].mxu0
  %v250 = vadd.f32 %v129, %v249
  %251 = vmatprep.mubr.f32.mxu0 0.0
  %v252 = vand.u32 %v35, 4294901760
  %253 = vmatmul.mubr.f32.gmra.mrb[0].mxu0 %v252
  %v254 = vpop.f32.mrb[0].mxu0
  %v255 = vadd.f32 %v138, %v254
  %v256 = vpop.f32.mrb[0].mxu0
  %v257 = vadd.f32 %v140, %v256
  %258 = vmatprep.mubr.f32.mxu0 0.0
  %v259 = vand.u32 %v38, 4294901760
  %260 = vmatmul.mubr.f32.gmra.mrb[0].mxu0 %v259
  %v261 = vpop.f32.mrb[0].mxu0
  %v262 = vadd.f32 %v149, %v261
  %v263 = vpop.f32.mrb[0].mxu0
  %v264 = vadd.f32 %v151, %v263
  %265 = vdwg.mxu0
  %v266 = vand.u32 %v18, 4294901760
  %v267 = vsub.f32 %v18, %v266
  %268 = vmatprep.subr.mxu0 %v267
  %v269 = vand.u32 %v17, 4294901760
  %v270 = vsub.f32 %v17, %v269
  %271 = vmatpush1.msra.mxu0 %v270
  %v272 = vand.u32 %v21, 4294901760
  %v273 = vsub.f32 %v21, %v272
  %274 = vmatprep.subr.mxu0 %v273
  %v275 = vand.u32 %v20, 4294901760
  %v276 = vsub.f32 %v20, %v275
  %277 = vmatpush1.msra.mxu0 %v276
  %278 = vmatprep.subr.mxu0 0.0
  %279 = vmatpush1.msra.mxu0 0.0
  %280 = vmatprep.subr.mxu0 0.0
  %281 = vmatpush1.msra.mxu0 0.0
  %282 = vmatprep.subr.mxu0 0.0
  %283 = vmatpush1.msra.mxu0 0.0
  %284 = vmatprep.subr.mxu0 0.0
  %285 = vmatpush1.msra.mxu0 0.0
  %286 = vmatprep.subr.mxu0 0.0
  %287 = vmatpush1.msra.mxu0 0.0
  %288 = vmatprep.subr.mxu0 0.0
  %289 = vmatpush1.msra.mxu0 0.0
  %290 = vmatprep.subr.mxu0 0.0
  %291 = vmatpush1.msra.mxu0 0.0
  %292 = vmatprep.subr.mxu0 0.0
  %293 = vmatpush1.msra.mxu0 0.0
  %294 = vmatprep.subr.mxu0 0.0
  %295 = vmatpush1.msra.mxu0 0.0
  %296 = vmatprep.subr.mxu0 0.0
  %297 = vmatpush1.msra.mxu0 0.0
  %298 = vmatprep.subr.mxu0 0.0
  %299 = vmatpush1.msra.mxu0 0.0
  %300 = vmatprep.subr.mxu0 0.0
  %301 = vmatpush1.msra.mxu0 0.0
  %302 = vmatprep.subr.mxu0 0.0
  %303 = vmatpush1.msra.mxu0 0.0
  %304 = vmatprep.subr.mxu0 0.0
  %305 = vmatpush1.msra.mxu0 0.0
  %306 = vmatprep.subr.mxu0 0.0
  %307 = vmatpush1.msra.mxu0 0.0
  %308 = vmatprep.subr.mxu0 0.0
  %309 = vmatpush1.msra.mxu0 0.0
  %310 = vmatprep.subr.mxu0 0.0
  %311 = vmatpush1.msra.mxu0 0.0
  %312 = vmatprep.subr.mxu0 0.0
  %313 = vmatpush1.msra.mxu0 0.0
  %314 = vmatprep.subr.mxu0 0.0
  %315 = vmatpush1.msra.mxu0 0.0
  %316 = vmatprep.subr.mxu0 0.0
  %317 = vmatpush1.msra.mxu0 0.0
  %318 = vmatprep.subr.mxu0 0.0
  %319 = vmatpush1.msra.mxu0 0.0
  %320 = vmatprep.subr.mxu0 0.0
  %321 = vmatpush1.msra.mxu0 0.0
  %322 = vmatprep.subr.mxu0 0.0
  %323 = vmatpush1.msra.mxu0 0.0
  %324 = vmatprep.subr.mxu0 0.0
  %325 = vmatpush1.msra.mxu0 0.0
  %326 = vmatprep.subr.mxu0 0.0
  %327 = vmatpush1.msra.mxu0 0.0
  %328 = vmatprep.subr.mxu0 0.0
  %329 = vmatpush1.msra.mxu0 0.0
  %330 = vmatprep.subr.mxu0 0.0
  %331 = vmatpush1.msra.mxu0 0.0
  %332 = vmatprep.subr.mxu0 0.0
  %333 = vmatpush1.msra.mxu0 0.0
  %334 = vmatprep.subr.mxu0 0.0
  %335 = vmatpush1.msra.mxu0 0.0
  %336 = vmatprep.subr.mxu0 0.0
  %337 = vmatpush1.msra.mxu0 0.0
  %338 = vmatprep.mubr.f32.mxu0 0.0
  %v339 = vand.u32 %v29, 4294901760
  %v340 = vsub.f32 %v29, %v339
  %341 = vmatmul.mubr.f32.gmra.mrb[0].mxu0 %v340
  %v342 = vpop.f32.mrb[0].mxu0
  %v343 = vadd.f32 %v241, %v342
  %v344 = vpop.f32.mrb[0].mxu0
  %v345 = vadd.f32 %v243, %v344
  %346 = vmatprep.mubr.f32.mxu0 0.0
  %v347 = vand.u32 %v32, 4294901760
  %v348 = vsub.f32 %v32, %v347
  %349 = vmatmul.mubr.f32.gmra.mrb[0].mxu0 %v348
  %v350 = vpop.f32.mrb[0].mxu0
  %v351 = vadd.f32 %v248, %v350
  %v352 = vpop.f32.mrb[0].mxu0
  %v353 = vadd.f32 %v250, %v352
  %354 = vmatprep.mubr.f32.mxu0 0.0
  %v355 = vand.u32 %v35, 4294901760
  %v356 = vsub.f32 %v35, %v355
  %357 = vmatmul.mubr.f32.gmra.mrb[0].mxu0 %v356
  %v358 = vpop.f32.mrb[0].mxu0
  %v359 = vadd.f32 %v255, %v358
  %v360 = vpop.f32.mrb[0].mxu0
  %v361 = vadd.f32 %v257, %v360
  %362 = vmatprep.mubr.f32.mxu0 0.0
  %v363 = vand.u32 %v38, 4294901760
  %v364 = vsub.f32 %v38, %v363
  %365 = vmatmul.mubr.f32.gmra.mrb[0].mxu0 %v364
  %v366 = vpop.f32.mrb[0].mxu0
  %v367 = vadd.f32 %v262, %v366
  %v368 = vpop.f32.mrb[0].mxu0
  %v369 = vadd.f32 %v264, %v368
  %370 = vdwg.mxu0
  %v371 = vand.u32 %v18, 4294901760
  %372 = vmatprep.subr.mxu0 %v371
  %v373 = vand.u32 %v17, 4294901760
  %374 = vmatpush1.msra.mxu0 %v373
  %v375 = vand.u32 %v21, 4294901760
  %376 = vmatprep.subr.mxu0 %v375
  %v377 = vand.u32 %v20, 4294901760
  %378 = vmatpush1.msra.mxu0 %v377
  %379 = vmatprep.subr.mxu0 0.0
  %380 = vmatpush1.msra.mxu0 0.0
  %381 = vmatprep.subr.mxu0 0.0
  %382 = vmatpush1.msra.mxu0 0.0
  %383 = vmatprep.subr.mxu0 0.0
  %384 = vmatpush1.msra.mxu0 0.0
  %385 = vmatprep.subr.mxu0 0.0
  %386 = vmatpush1.msra.mxu0 0.0
  %387 = vmatprep.subr.mxu0 0.0
  %388 = vmatpush1.msra.mxu0 0.0
  %389 = vmatprep.subr.mxu0 0.0
  %390 = vmatpush1.msra.mxu0 0.0
  %391 = vmatprep.subr.mxu0 0.0
  %392 = vmatpush1.msra.mxu0 0.0
  %393 = vmatprep.subr.mxu0 0.0
  %394 = vmatpush1.msra.mxu0 0.0
  %395 = vmatprep.subr.mxu0 0.0
  %396 = vmatpush1.msra.mxu0 0.0
  %397 = vmatprep.subr.mxu0 0.0
  %398 = vmatpush1.msra.mxu0 0.0
  %399 = vmatprep.subr.mxu0 0.0
  %400 = vmatpush1.msra.mxu0 0.0
  %401 = vmatprep.subr.mxu0 0.0
  %402 = vmatpush1.msra.mxu0 0.0
  %403 = vmatprep.subr.mxu0 0.0
  %404 = vmatpush1.msra.mxu0 0.0
  %405 = vmatprep.subr.mxu0 0.0
  %406 = vmatpush1.msra.mxu0 0.0
  %407 = vmatprep.subr.mxu0 0.0
  %408 = vmatpush1.msra.mxu0 0.0
  %409 = vmatprep.subr.mxu0 0.0
  %410 = vmatpush1.msra.mxu0 0.0
  %411 = vmatprep.subr.mxu0 0.0
  %412 = vmatpush1.msra.mxu0 0.0
  %413 = vmatprep.subr.mxu0 0.0
  %414 = vmatpush1.msra.mxu0 0.0
  %415 = vmatprep.subr.mxu0 0.0
  %416 = vmatpush1.msra.mxu0 0.0
  %417 = vmatprep.subr.mxu0 0.0
  %418 = vmatpush1.msra.mxu0 0.0
  %419 = vmatprep.subr.mxu0 0.0
  %420 = vmatpush1.msra.mxu0 0.0
  %421 = vmatprep.subr.mxu0 0.0
  %422 = vmatpush1.msra.mxu0 0.0
  %423 = vmatprep.subr.mxu0 0.0
  %424 = vmatpush1.msra.mxu0 0.0
  %425 = vmatprep.subr.mxu0 0.0
  %426 = vmatpush1.msra.mxu0 0.0
  %427 = vmatprep.subr.mxu0 0.0
  %428 = vmatpush1.msra.mxu0 0.0
  %429 = vmatprep.subr.mxu0 0.0
  %430 = vmatpush1.msra.mxu0 0.0
  %431 = vmatprep.subr.mxu0 0.0
  %432 = vmatpush1.msra.mxu0 0.0
  %433 = vmatprep.subr.mxu0 0.0
  %434 = vmatpush1.msra.mxu0 0.0
  %435 = vmatprep.subr.mxu0 0.0
  %436 = vmatpush1.msra.mxu0 0.0
  %437 = vmatprep.subr.mxu0 0.0
  %438 = vmatpush1.msra.mxu0 0.0
  %439 = vmatprep.mubr.f32.mxu0 0.0
  %v440 = vand.u32 %v29, 4294901760
  %v441 = vsub.f32 %v29, %v440
  %v442 = vand.u32 %v441, 4294901760
  %443 = vmatmul.mubr.f32.gmra.mrb[0].mxu0 %v442
  %v444 = vpop.f32.mrb[0].mxu0
  %v445 = vadd.f32 %v343, %v444
  %v446 = vpop.f32.mrb[0].mxu0
  %v447 = vadd.f32 %v345, %v446
  %448 = vmatprep.mubr.f32.mxu0 0.0
  %v449 = vand.u32 %v32, 4294901760
  %v450 = vsub.f32 %v32, %v449
  %v451 = vand.u32 %v450, 4294901760
  %452 = vmatmul.mubr.f32.gmra.mrb[0].mxu0 %v451
  %v453 = vpop.f32.mrb[0].mxu0
  %v454 = vadd.f32 %v351, %v453
  %v455 = vpop.f32.mrb[0].mxu0
  %v456 = vadd.f32 %v353, %v455
  %457 = vmatprep.mubr.f32.mxu0 0.0
  %v458 = vand.u32 %v35, 4294901760
  %v459 = vsub.f32 %v35, %v458
  %v460 = vand.u32 %v459, 4294901760
  %461 = vmatmul.mubr.f32.gmra.mrb[0].mxu0 %v460
  %v462 = vpop.f32.mrb[0].mxu0
  %v463 = vadd.f32 %v359, %v462
  %v464 = vpop.f32.mrb[0].mxu0
  %v465 = vadd.f32 %v361, %v464
  %466 = vmatprep.mubr.f32.mxu0 0.0
  %v467 = vand.u32 %v38, 4294901760
  %v468 = vsub.f32 %v38, %v467
  %v469 = vand.u32 %v468, 4294901760
  %470 = vmatmul.mubr.f32.gmra.mrb[0].mxu0 %v469
  %v471 = vpop.f32.mrb[0].mxu0
  %v472 = vadd.f32 %v367, %v471
  %v473 = vpop.f32.mrb[0].mxu0
  %v474 = vadd.f32 %v369, %v473
  %475 = vdwg.mxu0
  %v476 = vand.u32 %v18, 4294901760
  %v477 = vsub.f32 %v18, %v476
  %v478 = vand.u32 %v477, 4294901760
  %479 = vmatprep.subr.mxu0 %v478
  %v480 = vand.u32 %v17, 4294901760
  %v481 = vsub.f32 %v17, %v480
  %v482 = vand.u32 %v481, 4294901760
  %483 = vmatpush1.msra.mxu0 %v482
  %v484 = vand.u32 %v21, 4294901760
  %v485 = vsub.f32 %v21, %v484
  %v486 = vand.u32 %v485, 4294901760
  %487 = vmatprep.subr.mxu0 %v486
  %v488 = vand.u32 %v20, 4294901760
  %v489 = vsub.f32 %v20, %v488
  %v490 = vand.u32 %v489, 4294901760
  %491 = vmatpush1.msra.mxu0 %v490
  %492 = vmatprep.subr.mxu0 0.0
  %493 = vmatpush1.msra.mxu0 0.0
  %494 = vmatprep.subr.mxu0 0.0
  %495 = vmatpush1.msra.mxu0 0.0
  %496 = vmatprep.subr.mxu0 0.0
  %497 = vmatpush1.msra.mxu0 0.0
  %498 = vmatprep.subr.mxu0 0.0
  %499 = vmatpush1.msra.mxu0 0.0
  %500 = vmatprep.subr.mxu0 0.0
  %501 = vmatpush1.msra.mxu0 0.0
  %502 = vmatprep.subr.mxu0 0.0
  %503 = vmatpush1.msra.mxu0 0.0
  %504 = vmatprep.subr.mxu0 0.0
  %505 = vmatpush1.msra.mxu0 0.0
  %506 = vmatprep.subr.mxu0 0.0
  %507 = vmatpush1.msra.mxu0 0.0
  %508 = vmatprep.subr.mxu0 0.0
  %509 = vmatpush1.msra.mxu0 0.0
  %510 = vmatprep.subr.mxu0 0.0
  %511 = vmatpush1.msra.mxu0 0.0
  %512 = vmatprep.subr.mxu0 0.0
  %513 = vmatpush1.msra.mxu0 0.0
  %514 = vmatprep.subr.mxu0 0.0
  %515 = vmatpush1.msra.mxu0 0.0
  %516 = vmatprep.subr.mxu0 0.0
  %517 = vmatpush1.msra.mxu0 0.0
  %518 = vmatprep.subr.mxu0 0.0
  %519 = vmatpush1.msra.mxu0 0.0
  %520 = vmatprep.subr.mxu0 0.0
  %521 = vmatpush1.msra.mxu0 0.0
  %522 = vmatprep.subr.mxu0 0.0
  %523 = vmatpush1.msra.mxu0 0.0
  %524 = vmatprep.subr.mxu0 0.0
  %525 = vmatpush1.msra.mxu0 0.0
  %526 = vmatprep.subr.mxu0 0.0
  %527 = vmatpush1.msra.mxu0 0.0
  %528 = vmatprep.subr.mxu0 0.0
  %529 = vmatpush1.msra.mxu0 0.0
  %530 = vmatprep.subr.mxu0 0.0
  %531 = vmatpush1.msra.mxu0 0.0
  %532 = vmatprep.subr.mxu0 0.0
  %533 = vmatpush1.msra.mxu0 0.0
  %534 = vmatprep.subr.mxu0 0.0
  %535 = vmatpush1.msra.mxu0 0.0
  %536 = vmatprep.subr.mxu0 0.0
  %537 = vmatpush1.msra.mxu0 0.0
  %538 = vmatprep.subr.mxu0 0.0
  %539 = vmatpush1.msra.mxu0 0.0
  %540 = vmatprep.subr.mxu0 0.0
  %541 = vmatpush1.msra.mxu0 0.0
  %542 = vmatprep.subr.mxu0 0.0
  %543 = vmatpush1.msra.mxu0 0.0
  %544 = vmatprep.subr.mxu0 0.0
  %545 = vmatpush1.msra.mxu0 0.0
  %546 = vmatprep.subr.mxu0 0.0
  %547 = vmatpush1.msra.mxu0 0.0
  %548 = vmatprep.subr.mxu0 0.0
  %549 = vmatpush1.msra.mxu0 0.0
  %550 = vmatprep.subr.mxu0 0.0
  %551 = vmatpush1.msra.mxu0 0.0
  %552 = vmatprep.mubr.f32.mxu0 0.0
  %v553 = vand.u32 %v29, 4294901760
  %554 = vmatmul.mubr.f32.gmra.mrb[0].mxu0 %v553
  %v555 = vpop.f32.mrb[0].mxu0
  %v556 = vadd.f32 %v445, %v555
  %v557 = vpop.f32.mrb[0].mxu0
  %v558 = vadd.f32 %v447, %v557
  %559 = vmatprep.mubr.f32.mxu0 0.0
  %v560 = vand.u32 %v32, 4294901760
  %561 = vmatmul.mubr.f32.gmra.mrb[0].mxu0 %v560
  %v562 = vpop.f32.mrb[0].mxu0
  %v563 = vadd.f32 %v454, %v562
  %v564 = vpop.f32.mrb[0].mxu0
  %v565 = vadd.f32 %v456, %v564
  %566 = vmatprep.mubr.f32.mxu0 0.0
  %v567 = vand.u32 %v35, 4294901760
  %568 = vmatmul.mubr.f32.gmra.mrb[0].mxu0 %v567
  %v569 = vpop.f32.mrb[0].mxu0
  %v570 = vadd.f32 %v463, %v569
  %v571 = vpop.f32.mrb[0].mxu0
  %v572 = vadd.f32 %v465, %v571
  %573 = vmatprep.mubr.f32.mxu0 0.0
  %v574 = vand.u32 %v38, 4294901760
  %575 = vmatmul.mubr.f32.gmra.mrb[0].mxu0 %v574
  %v576 = vpop.f32.mrb[0].mxu0
  %v577 = vadd.f32 %v472, %v576
  %v578 = vpop.f32.mrb[0].mxu0
  %v579 = vadd.f32 %v474, %v578
  %580 = vdwg.mxu0
  %v581 = vand.u32 %v18, 4294901760
  %582 = vmatprep.subr.mxu0 %v581
  %v583 = vand.u32 %v17, 4294901760
  %584 = vmatpush1.msra.mxu0 %v583
  %v585 = vand.u32 %v21, 4294901760
  %586 = vmatprep.subr.mxu0 %v585
  %v587 = vand.u32 %v20, 4294901760
  %588 = vmatpush1.msra.mxu0 %v587
  %589 = vmatprep.subr.mxu0 0.0
  %590 = vmatpush1.msra.mxu0 0.0
  %591 = vmatprep.subr.mxu0 0.0
  %592 = vmatpush1.msra.mxu0 0.0
  %593 = vmatprep.subr.mxu0 0.0
  %594 = vmatpush1.msra.mxu0 0.0
  %595 = vmatprep.subr.mxu0 0.0
  %596 = vmatpush1.msra.mxu0 0.0
  %597 = vmatprep.subr.mxu0 0.0
  %598 = vmatpush1.msra.mxu0 0.0
  %599 = vmatprep.subr.mxu0 0.0
  %600 = vmatpush1.msra.mxu0 0.0
  %601 = vmatprep.subr.mxu0 0.0
  %602 = vmatpush1.msra.mxu0 0.0
  %603 = vmatprep.subr.mxu0 0.0
  %604 = vmatpush1.msra.mxu0 0.0
  %605 = vmatprep.subr.mxu0 0.0
  %606 = vmatpush1.msra.mxu0 0.0
  %607 = vmatprep.subr.mxu0 0.0
  %608 = vmatpush1.msra.mxu0 0.0
  %609 = vmatprep.subr.mxu0 0.0
  %610 = vmatpush1.msra.mxu0 0.0
  %611 = vmatprep.subr.mxu0 0.0
  %612 = vmatpush1.msra.mxu0 0.0
  %613 = vmatprep.subr.mxu0 0.0
  %614 = vmatpush1.msra.mxu0 0.0
  %615 = vmatprep.subr.mxu0 0.0
  %616 = vmatpush1.msra.mxu0 0.0
  %617 = vmatprep.subr.mxu0 0.0
  %618 = vmatpush1.msra.mxu0 0.0
  %619 = vmatprep.subr.mxu0 0.0
  %620 = vmatpush1.msra.mxu0 0.0
  %621 = vmatprep.subr.mxu0 0.0
  %622 = vmatpush1.msra.mxu0 0.0
  %623 = vmatprep.subr.mxu0 0.0
  %624 = vmatpush1.msra.mxu0 0.0
  %625 = vmatprep.subr.mxu0 0.0
  %626 = vmatpush1.msra.mxu0 0.0
  %627 = vmatprep.subr.mxu0 0.0
  %628 = vmatpush1.msra.mxu0 0.0
  %629 = vmatprep.subr.mxu0 0.0
  %630 = vmatpush1.msra.mxu0 0.0
  %631 = vmatprep.subr.mxu0 0.0
  %632 = vmatpush1.msra.mxu0 0.0
  %633 = vmatprep.subr.mxu0 0.0
  %634 = vmatpush1.msra.mxu0 0.0
  %635 = vmatprep.subr.mxu0 0.0
  %636 = vmatpush1.msra.mxu0 0.0
  %637 = vmatprep.subr.mxu0 0.0
  %638 = vmatpush1.msra.mxu0 0.0
  %639 = vmatprep.subr.mxu0 0.0
  %640 = vmatpush1.msra.mxu0 0.0
  %641 = vmatprep.subr.mxu0 0.0
  %642 = vmatpush1.msra.mxu0 0.0
  %643 = vmatprep.subr.mxu0 0.0
  %644 = vmatpush1.msra.mxu0 0.0
  %645 = vmatprep.subr.mxu0 0.0
  %646 = vmatpush1.msra.mxu0 0.0
  %647 = vmatprep.subr.mxu0 0.0
  %648 = vmatpush1.msra.mxu0 0.0
  %649 = vmatprep.mubr.f32.mxu0 0.0
  %v650 = vand.u32 %v29, 4294901760
  %651 = vmatmul.mubr.f32.gmra.mrb[0].mxu0 %v650
  %v652 = vpop.f32.mrb[0].mxu0
  %v653 = vadd.f32 %v556, %v652
  %v654 = vpop.f32.mrb[0].mxu0
  %v655 = vadd.f32 %v558, %v654
  %656 = vmatprep.mubr.f32.mxu0 0.0
  %v657 = vand.u32 %v32, 4294901760
  %658 = vmatmul.mubr.f32.gmra.mrb[0].mxu0 %v657
  %v659 = vpop.f32.mrb[0].mxu0
  %v660 = vadd.f32 %v563, %v659
  %v661 = vpop.f32.mrb[0].mxu0
  %v662 = vadd.f32 %v565, %v661
  %663 = vmatprep.mubr.f32.mxu0 0.0
  %v664 = vand.u32 %v35, 4294901760
  %665 = vmatmul.mubr.f32.gmra.mrb[0].mxu0 %v664
  %v666 = vpop.f32.mrb[0].mxu0
  %v667 = vadd.f32 %v570, %v666
  %v668 = vpop.f32.mrb[0].mxu0
  %v669 = vadd.f32 %v572, %v668
  %670 = vmatprep.mubr.f32.mxu0 0.0
  %v671 = vand.u32 %v38, 4294901760
  %672 = vmatmul.mubr.f32.gmra.mrb[0].mxu0 %v671
  %v673 = vpop.f32.mrb[0].mxu0
  %v674 = vadd.f32 %v577, %v673
  %v675 = vpop.f32.mrb[0].mxu0
  %v676 = vadd.f32 %v579, %v675
  %677 = vdwg.mxu0
  %678 = vmatprep.subr.mxu0 0.0
  %v679 = vand.u32 %v19, 4294901760
  %680 = vmatpush1.msra.mxu0 %v679
  %681 = vmatprep.subr.mxu0 0.0
  %v682 = vand.u32 %v22, 4294901760
  %683 = vmatpush1.msra.mxu0 %v682
  %684 = vmatprep.subr.mxu0 0.0
  %685 = vmatpush1.msra.mxu0 0.0
  %686 = vmatprep.subr.mxu0 0.0
  %687 = vmatpush1.msra.mxu0 0.0
  %688 = vmatprep.subr.mxu0 0.0
  %689 = vmatpush1.msra.mxu0 0.0
  %690 = vmatprep.subr.mxu0 0.0
  %691 = vmatpush1.msra.mxu0 0.0
  %692 = vmatprep.subr.mxu0 0.0
  %693 = vmatpush1.msra.mxu0 0.0
  %694 = vmatprep.subr.mxu0 0.0
  %695 = vmatpush1.msra.mxu0 0.0
  %696 = vmatprep.subr.mxu0 0.0
  %697 = vmatpush1.msra.mxu0 0.0
  %698 = vmatprep.subr.mxu0 0.0
  %699 = vmatpush1.msra.mxu0 0.0
  %700 = vmatprep.subr.mxu0 0.0
  %701 = vmatpush1.msra.mxu0 0.0
  %702 = vmatprep.subr.mxu0 0.0
  %703 = vmatpush1.msra.mxu0 0.0
  %704 = vmatprep.subr.mxu0 0.0
  %705 = vmatpush1.msra.mxu0 0.0
  %706 = vmatprep.subr.mxu0 0.0
  %707 = vmatpush1.msra.mxu0 0.0
  %708 = vmatprep.subr.mxu0 0.0
  %709 = vmatpush1.msra.mxu0 0.0
  %710 = vmatprep.subr.mxu0 0.0
  %711 = vmatpush1.msra.mxu0 0.0
  %712 = vmatprep.subr.mxu0 0.0
  %713 = vmatpush1.msra.mxu0 0.0
  %714 = vmatprep.subr.mxu0 0.0
  %715 = vmatpush1.msra.mxu0 0.0
  %716 = vmatprep.subr.mxu0 0.0
  %717 = vmatpush1.msra.mxu0 0.0
  %718 = vmatprep.subr.mxu0 0.0
  %719 = vmatpush1.msra.mxu0 0.0
  %720 = vmatprep.subr.mxu0 0.0
  %721 = vmatpush1.msra.mxu0 0.0
  %722 = vmatprep.subr.mxu0 0.0
  %723 = vmatpush1.msra.mxu0 0.0
  %724 = vmatprep.subr.mxu0 0.0
  %725 = vmatpush1.msra.mxu0 0.0
  %726 = vmatprep.subr.mxu0 0.0
  %727 = vmatpush1.msra.mxu0 0.0
  %728 = vmatprep.subr.mxu0 0.0
  %729 = vmatpush1.msra.mxu0 0.0
  %730 = vmatprep.subr.mxu0 0.0
  %731 = vmatpush1.msra.mxu0 0.0
  %732 = vmatprep.subr.mxu0 0.0
  %733 = vmatpush1.msra.mxu0 0.0
  %734 = vmatprep.subr.mxu0 0.0
  %735 = vmatpush1.msra.mxu0 0.0
  %736 = vmatprep.subr.mxu0 0.0
  %737 = vmatpush1.msra.mxu0 0.0
  %738 = vmatprep.subr.mxu0 0.0
  %739 = vmatpush1.msra.mxu0 0.0
  %740 = vmatprep.subr.mxu0 0.0
  %741 = vmatpush1.msra.mxu0 0.0
  %742 = vmatprep.subr.mxu0 0.0
  %743 = vmatpush1.msra.mxu0 0.0
  %744 = vmatprep.mubr.f32.mxu0 0.0
  %v745 = vand.u32 %v29, 4294901760
  %v746 = vsub.f32 %v29, %v745
  %v747 = vand.u32 %v746, 4294901760
  %v748 = vsub.f32 %v746, %v747
  %v749 = vand.u32 %v748, 4294901760
  %750 = vmatmul.mubr.f32.gmra.mrb[0].mxu0 %v749
  %v751 = vpop.f32.mrb[0].mxu0
  %v752 = vadd.f32 0.0, %v751
  %v753 = vpop.f32.mrb[0].mxu0
  %754 = vmatprep.mubr.f32.mxu0 0.0
  %v755 = vand.u32 %v32, 4294901760
  %v756 = vsub.f32 %v32, %v755
  %v757 = vand.u32 %v756, 4294901760
  %v758 = vsub.f32 %v756, %v757
  %v759 = vand.u32 %v758, 4294901760
  %760 = vmatmul.mubr.f32.gmra.mrb[0].mxu0 %v759
  %v761 = vpop.f32.mrb[0].mxu0
  %v762 = vadd.f32 0.0, %v761
  %v763 = vpop.f32.mrb[0].mxu0
  %764 = vmatprep.mubr.f32.mxu0 0.0
  %v765 = vand.u32 %v35, 4294901760
  %v766 = vsub.f32 %v35, %v765
  %v767 = vand.u32 %v766, 4294901760
  %v768 = vsub.f32 %v766, %v767
  %v769 = vand.u32 %v768, 4294901760
  %770 = vmatmul.mubr.f32.gmra.mrb[0].mxu0 %v769
  %v771 = vpop.f32.mrb[0].mxu0
  %v772 = vadd.f32 0.0, %v771
  %v773 = vpop.f32.mrb[0].mxu0
  %774 = vmatprep.mubr.f32.mxu0 0.0
  %v775 = vand.u32 %v38, 4294901760
  %v776 = vsub.f32 %v38, %v775
  %v777 = vand.u32 %v776, 4294901760
  %v778 = vsub.f32 %v776, %v777
  %v779 = vand.u32 %v778, 4294901760
  %780 = vmatmul.mubr.f32.gmra.mrb[0].mxu0 %v779
  %v781 = vpop.f32.mrb[0].mxu0
  %v782 = vadd.f32 0.0, %v781
  %v783 = vpop.f32.mrb[0].mxu0
  %784 = vdwg.mxu0
  %785 = vmatprep.subr.mxu0 0.0
  %v786 = vand.u32 %v19, 4294901760
  %v787 = vsub.f32 %v19, %v786
  %v788 = vand.u32 %v787, 4294901760
  %v789 = vsub.f32 %v787, %v788
  %v790 = vand.u32 %v789, 4294901760
  %791 = vmatpush1.msra.mxu0 %v790
  %792 = vmatprep.subr.mxu0 0.0
  %v793 = vand.u32 %v22, 4294901760
  %v794 = vsub.f32 %v22, %v793
  %v795 = vand.u32 %v794, 4294901760
  %v796 = vsub.f32 %v794, %v795
  %v797 = vand.u32 %v796, 4294901760
  %798 = vmatpush1.msra.mxu0 %v797
  %799 = vmatprep.subr.mxu0 0.0
  %800 = vmatpush1.msra.mxu0 0.0
  %801 = vmatprep.subr.mxu0 0.0
  %802 = vmatpush1.msra.mxu0 0.0
  %803 = vmatprep.subr.mxu0 0.0
  %804 = vmatpush1.msra.mxu0 0.0
  %805 = vmatprep.subr.mxu0 0.0
  %806 = vmatpush1.msra.mxu0 0.0
  %807 = vmatprep.subr.mxu0 0.0
  %808 = vmatpush1.msra.mxu0 0.0
  %809 = vmatprep.subr.mxu0 0.0
  %810 = vmatpush1.msra.mxu0 0.0
  %811 = vmatprep.subr.mxu0 0.0
  %812 = vmatpush1.msra.mxu0 0.0
  %813 = vmatprep.subr.mxu0 0.0
  %814 = vmatpush1.msra.mxu0 0.0
  %815 = vmatprep.subr.mxu0 0.0
  %816 = vmatpush1.msra.mxu0 0.0
  %817 = vmatprep.subr.mxu0 0.0
  %818 = vmatpush1.msra.mxu0 0.0
  %819 = vmatprep.subr.mxu0 0.0
  %820 = vmatpush1.msra.mxu0 0.0
  %821 = vmatprep.subr.mxu0 0.0
  %822 = vmatpush1.msra.mxu0 0.0
  %823 = vmatprep.subr.mxu0 0.0
  %824 = vmatpush1.msra.mxu0 0.0
  %825 = vmatprep.subr.mxu0 0.0
  %826 = vmatpush1.msra.mxu0 0.0
  %827 = vmatprep.subr.mxu0 0.0
  %828 = vmatpush1.msra.mxu0 0.0
  %829 = vmatprep.subr.mxu0 0.0
  %830 = vmatpush1.msra.mxu0 0.0
  %831 = vmatprep.subr.mxu0 0.0
  %832 = vmatpush1.msra.mxu0 0.0
  %833 = vmatprep.subr.mxu0 0.0
  %834 = vmatpush1.msra.mxu0 0.0
  %835 = vmatprep.subr.mxu0 0.0
  %836 = vmatpush1.msra.mxu0 0.0
  %837 = vmatprep.subr.mxu0 0.0
  %838 = vmatpush1.msra.mxu0 0.0
  %839 = vmatprep.subr.mxu0 0.0
  %840 = vmatpush1.msra.mxu0 0.0
  %841 = vmatprep.subr.mxu0 0.0
  %842 = vmatpush1.msra.mxu0 0.0
  %843 = vmatprep.subr.mxu0 0.0
  %844 = vmatpush1.msra.mxu0 0.0
  %845 = vmatprep.subr.mxu0 0.0
  %846 = vmatpush1.msra.mxu0 0.0
  %847 = vmatprep.subr.mxu0 0.0
  %848 = vmatpush1.msra.mxu0 0.0
  %849 = vmatprep.subr.mxu0 0.0
  %850 = vmatpush1.msra.mxu0 0.0
  %851 = vmatprep.subr.mxu0 0.0
  %852 = vmatpush1.msra.mxu0 0.0
  %853 = vmatprep.subr.mxu0 0.0
  %854 = vmatpush1.msra.mxu0 0.0
  %855 = vmatprep.subr.mxu0 0.0
  %856 = vmatpush1.msra.mxu0 0.0
  %857 = vmatprep.subr.mxu0 0.0
  %858 = vmatpush1.msra.mxu0 0.0
  %859 = vmatprep.mubr.f32.mxu0 0.0
  %v860 = vand.u32 %v29, 4294901760
  %861 = vmatmul.mubr.f32.gmra.mrb[0].mxu0 %v860
  %v862 = vpop.f32.mrb[0].mxu0
  %v863 = vadd.f32 %v752, %v862
  %v864 = vpop.f32.mrb[0].mxu0
  %865 = vmatprep.mubr.f32.mxu0 0.0
  %v866 = vand.u32 %v32, 4294901760
  %867 = vmatmul.mubr.f32.gmra.mrb[0].mxu0 %v866
  %v868 = vpop.f32.mrb[0].mxu0
  %v869 = vadd.f32 %v762, %v868
  %v870 = vpop.f32.mrb[0].mxu0
  %871 = vmatprep.mubr.f32.mxu0 0.0
  %v872 = vand.u32 %v35, 4294901760
  %873 = vmatmul.mubr.f32.gmra.mrb[0].mxu0 %v872
  %v874 = vpop.f32.mrb[0].mxu0
  %v875 = vadd.f32 %v772, %v874
  %v876 = vpop.f32.mrb[0].mxu0
  %877 = vmatprep.mubr.f32.mxu0 0.0
  %v878 = vand.u32 %v38, 4294901760
  %879 = vmatmul.mubr.f32.gmra.mrb[0].mxu0 %v878
  %v880 = vpop.f32.mrb[0].mxu0
  %v881 = vadd.f32 %v782, %v880
  %v882 = vpop.f32.mrb[0].mxu0
  %883 = vdwg.mxu0
  %884 = vmatprep.subr.mxu0 0.0
  %v885 = vand.u32 %v19, 4294901760
  %v886 = vsub.f32 %v19, %v885
  %887 = vmatpush1.msra.mxu0 %v886
  %888 = vmatprep.subr.mxu0 0.0
  %v889 = vand.u32 %v22, 4294901760
  %v890 = vsub.f32 %v22, %v889
  %891 = vmatpush1.msra.mxu0 %v890
  %892 = vmatprep.subr.mxu0 0.0
  %893 = vmatpush1.msra.mxu0 0.0
  %894 = vmatprep.subr.mxu0 0.0
  %895 = vmatpush1.msra.mxu0 0.0
  %896 = vmatprep.subr.mxu0 0.0
  %897 = vmatpush1.msra.mxu0 0.0
  %898 = vmatprep.subr.mxu0 0.0
  %899 = vmatpush1.msra.mxu0 0.0
  %900 = vmatprep.subr.mxu0 0.0
  %901 = vmatpush1.msra.mxu0 0.0
  %902 = vmatprep.subr.mxu0 0.0
  %903 = vmatpush1.msra.mxu0 0.0
  %904 = vmatprep.subr.mxu0 0.0
  %905 = vmatpush1.msra.mxu0 0.0
  %906 = vmatprep.subr.mxu0 0.0
  %907 = vmatpush1.msra.mxu0 0.0
  %908 = vmatprep.subr.mxu0 0.0
  %909 = vmatpush1.msra.mxu0 0.0
  %910 = vmatprep.subr.mxu0 0.0
  %911 = vmatpush1.msra.mxu0 0.0
  %912 = vmatprep.subr.mxu0 0.0
  %913 = vmatpush1.msra.mxu0 0.0
  %914 = vmatprep.subr.mxu0 0.0
  %915 = vmatpush1.msra.mxu0 0.0
  %916 = vmatprep.subr.mxu0 0.0
  %917 = vmatpush1.msra.mxu0 0.0
  %918 = vmatprep.subr.mxu0 0.0
  %919 = vmatpush1.msra.mxu0 0.0
  %920 = vmatprep.subr.mxu0 0.0
  %921 = vmatpush1.msra.mxu0 0.0
  %922 = vmatprep.subr.mxu0 0.0
  %923 = vmatpush1.msra.mxu0 0.0
  %924 = vmatprep.subr.mxu0 0.0
  %925 = vmatpush1.msra.mxu0 0.0
  %926 = vmatprep.subr.mxu0 0.0
  %927 = vmatpush1.msra.mxu0 0.0
  %928 = vmatprep.subr.mxu0 0.0
  %929 = vmatpush1.msra.mxu0 0.0
  %930 = vmatprep.subr.mxu0 0.0
  %931 = vmatpush1.msra.mxu0 0.0
  %932 = vmatprep.subr.mxu0 0.0
  %933 = vmatpush1.msra.mxu0 0.0
  %934 = vmatprep.subr.mxu0 0.0
  %935 = vmatpush1.msra.mxu0 0.0
  %936 = vmatprep.subr.mxu0 0.0
  %937 = vmatpush1.msra.mxu0 0.0
  %938 = vmatprep.subr.mxu0 0.0
  %939 = vmatpush1.msra.mxu0 0.0
  %940 = vmatprep.subr.mxu0 0.0
  %941 = vmatpush1.msra.mxu0 0.0
  %942 = vmatprep.subr.mxu0 0.0
  %943 = vmatpush1.msra.mxu0 0.0
  %944 = vmatprep.subr.mxu0 0.0
  %945 = vmatpush1.msra.mxu0 0.0
  %946 = vmatprep.subr.mxu0 0.0
  %947 = vmatpush1.msra.mxu0 0.0
  %948 = vmatprep.subr.mxu0 0.0
  %949 = vmatpush1.msra.mxu0 0.0
  %950 = vmatprep.subr.mxu0 0.0
  %951 = vmatpush1.msra.mxu0 0.0
  %952 = vmatprep.mubr.f32.mxu0 0.0
  %v953 = vand.u32 %v29, 4294901760
  %v954 = vsub.f32 %v29, %v953
  %955 = vmatmul.mubr.f32.gmra.mrb[0].mxu0 %v954
  %v956 = vpop.f32.mrb[0].mxu0
  %v957 = vadd.f32 %v863, %v956
  %v958 = vpop.f32.mrb[0].mxu0
  %959 = vmatprep.mubr.f32.mxu0 0.0
  %v960 = vand.u32 %v32, 4294901760
  %v961 = vsub.f32 %v32, %v960
  %962 = vmatmul.mubr.f32.gmra.mrb[0].mxu0 %v961
  %v963 = vpop.f32.mrb[0].mxu0
  %v964 = vadd.f32 %v869, %v963
  %v965 = vpop.f32.mrb[0].mxu0
  %966 = vmatprep.mubr.f32.mxu0 0.0
  %v967 = vand.u32 %v35, 4294901760
  %v968 = vsub.f32 %v35, %v967
  %969 = vmatmul.mubr.f32.gmra.mrb[0].mxu0 %v968
  %v970 = vpop.f32.mrb[0].mxu0
  %v971 = vadd.f32 %v875, %v970
  %v972 = vpop.f32.mrb[0].mxu0
  %973 = vmatprep.mubr.f32.mxu0 0.0
  %v974 = vand.u32 %v38, 4294901760
  %v975 = vsub.f32 %v38, %v974
  %976 = vmatmul.mubr.f32.gmra.mrb[0].mxu0 %v975
  %v977 = vpop.f32.mrb[0].mxu0
  %v978 = vadd.f32 %v881, %v977
  %v979 = vpop.f32.mrb[0].mxu0
  %980 = vdwg.mxu0
  %981 = vmatprep.subr.mxu0 0.0
  %v982 = vand.u32 %v19, 4294901760
  %983 = vmatpush1.msra.mxu0 %v982
  %984 = vmatprep.subr.mxu0 0.0
  %v985 = vand.u32 %v22, 4294901760
  %986 = vmatpush1.msra.mxu0 %v985
  %987 = vmatprep.subr.mxu0 0.0
  %988 = vmatpush1.msra.mxu0 0.0
  %989 = vmatprep.subr.mxu0 0.0
  %990 = vmatpush1.msra.mxu0 0.0
  %991 = vmatprep.subr.mxu0 0.0
  %992 = vmatpush1.msra.mxu0 0.0
  %993 = vmatprep.subr.mxu0 0.0
  %994 = vmatpush1.msra.mxu0 0.0
  %995 = vmatprep.subr.mxu0 0.0
  %996 = vmatpush1.msra.mxu0 0.0
  %997 = vmatprep.subr.mxu0 0.0
  %998 = vmatpush1.msra.mxu0 0.0
  %999 = vmatprep.subr.mxu0 0.0
  %1000 = vmatpush1.msra.mxu0 0.0
  %1001 = vmatprep.subr.mxu0 0.0
  %1002 = vmatpush1.msra.mxu0 0.0
  %1003 = vmatprep.subr.mxu0 0.0
  %1004 = vmatpush1.msra.mxu0 0.0
  %1005 = vmatprep.subr.mxu0 0.0
  %1006 = vmatpush1.msra.mxu0 0.0
  %1007 = vmatprep.subr.mxu0 0.0
  %1008 = vmatpush1.msra.mxu0 0.0
  %1009 = vmatprep.subr.mxu0 0.0
  %1010 = vmatpush1.msra.mxu0 0.0
  %1011 = vmatprep.subr.mxu0 0.0
  %1012 = vmatpush1.msra.mxu0 0.0
  %1013 = vmatprep.subr.mxu0 0.0
  %1014 = vmatpush1.msra.mxu0 0.0
  %1015 = vmatprep.subr.mxu0 0.0
  %1016 = vmatpush1.msra.mxu0 0.0
  %1017 = vmatprep.subr.mxu0 0.0
  %1018 = vmatpush1.msra.mxu0 0.0
  %1019 = vmatprep.subr.mxu0 0.0
  %1020 = vmatpush1.msra.mxu0 0.0
  %1021 = vmatprep.subr.mxu0 0.0
  %1022 = vmatpush1.msra.mxu0 0.0
  %1023 = vmatprep.subr.mxu0 0.0
  %1024 = vmatpush1.msra.mxu0 0.0
  %1025 = vmatprep.subr.mxu0 0.0
  %1026 = vmatpush1.msra.mxu0 0.0
  %1027 = vmatprep.subr.mxu0 0.0
  %1028 = vmatpush1.msra.mxu0 0.0
  %1029 = vmatprep.subr.mxu0 0.0
  %1030 = vmatpush1.msra.mxu0 0.0
  %1031 = vmatprep.subr.mxu0 0.0
  %1032 = vmatpush1.msra.mxu0 0.0
  %1033 = vmatprep.subr.mxu0 0.0
  %1034 = vmatpush1.msra.mxu0 0.0
  %1035 = vmatprep.subr.mxu0 0.0
  %1036 = vmatpush1.msra.mxu0 0.0
  %1037 = vmatprep.subr.mxu0 0.0
  %1038 = vmatpush1.msra.mxu0 0.0
  %1039 = vmatprep.subr.mxu0 0.0
  %1040 = vmatpush1.msra.mxu0 0.0
  %1041 = vmatprep.subr.mxu0 0.0
  %1042 = vmatpush1.msra.mxu0 0.0
  %1043 = vmatprep.subr.mxu0 0.0
  %1044 = vmatpush1.msra.mxu0 0.0
  %1045 = vmatprep.subr.mxu0 0.0
  %1046 = vmatpush1.msra.mxu0 0.0
  %1047 = vmatprep.mubr.f32.mxu0 0.0
  %v1048 = vand.u32 %v29, 4294901760
  %v1049 = vsub.f32 %v29, %v1048
  %v1050 = vand.u32 %v1049, 4294901760
  %1051 = vmatmul.mubr.f32.gmra.mrb[0].mxu0 %v1050
  %v1052 = vpop.f32.mrb[0].mxu0
  %v1053 = vadd.f32 %v957, %v1052
  %v1054 = vpop.f32.mrb[0].mxu0
  %1055 = vmatprep.mubr.f32.mxu0 0.0
  %v1056 = vand.u32 %v32, 4294901760
  %v1057 = vsub.f32 %v32, %v1056
  %v1058 = vand.u32 %v1057, 4294901760
  %1059 = vmatmul.mubr.f32.gmra.mrb[0].mxu0 %v1058
  %v1060 = vpop.f32.mrb[0].mxu0
  %v1061 = vadd.f32 %v964, %v1060
  %v1062 = vpop.f32.mrb[0].mxu0
  %1063 = vmatprep.mubr.f32.mxu0 0.0
  %v1064 = vand.u32 %v35, 4294901760
  %v1065 = vsub.f32 %v35, %v1064
  %v1066 = vand.u32 %v1065, 4294901760
  %1067 = vmatmul.mubr.f32.gmra.mrb[0].mxu0 %v1066
  %v1068 = vpop.f32.mrb[0].mxu0
  %v1069 = vadd.f32 %v971, %v1068
  %v1070 = vpop.f32.mrb[0].mxu0
  %1071 = vmatprep.mubr.f32.mxu0 0.0
  %v1072 = vand.u32 %v38, 4294901760
  %v1073 = vsub.f32 %v38, %v1072
  %v1074 = vand.u32 %v1073, 4294901760
  %1075 = vmatmul.mubr.f32.gmra.mrb[0].mxu0 %v1074
  %v1076 = vpop.f32.mrb[0].mxu0
  %v1077 = vadd.f32 %v978, %v1076
  %v1078 = vpop.f32.mrb[0].mxu0
  %1079 = vdwg.mxu0
  %1080 = vmatprep.subr.mxu0 0.0
  %v1081 = vand.u32 %v19, 4294901760
  %v1082 = vsub.f32 %v19, %v1081
  %v1083 = vand.u32 %v1082, 4294901760
  %1084 = vmatpush1.msra.mxu0 %v1083
  %1085 = vmatprep.subr.mxu0 0.0
  %v1086 = vand.u32 %v22, 4294901760
  %v1087 = vsub.f32 %v22, %v1086
  %v1088 = vand.u32 %v1087, 4294901760
  %1089 = vmatpush1.msra.mxu0 %v1088
  %1090 = vmatprep.subr.mxu0 0.0
  %1091 = vmatpush1.msra.mxu0 0.0
  %1092 = vmatprep.subr.mxu0 0.0
  %1093 = vmatpush1.msra.mxu0 0.0
  %1094 = vmatprep.subr.mxu0 0.0
  %1095 = vmatpush1.msra.mxu0 0.0
  %1096 = vmatprep.subr.mxu0 0.0
  %1097 = vmatpush1.msra.mxu0 0.0
  %1098 = vmatprep.subr.mxu0 0.0
  %1099 = vmatpush1.msra.mxu0 0.0
  %1100 = vmatprep.subr.mxu0 0.0
  %1101 = vmatpush1.msra.mxu0 0.0
  %1102 = vmatprep.subr.mxu0 0.0
  %1103 = vmatpush1.msra.mxu0 0.0
  %1104 = vmatprep.subr.mxu0 0.0
  %1105 = vmatpush1.msra.mxu0 0.0
  %1106 = vmatprep.subr.mxu0 0.0
  %1107 = vmatpush1.msra.mxu0 0.0
  %1108 = vmatprep.subr.mxu0 0.0
  %1109 = vmatpush1.msra.mxu0 0.0
  %1110 = vmatprep.subr.mxu0 0.0
  %1111 = vmatpush1.msra.mxu0 0.0
  %1112 = vmatprep.subr.mxu0 0.0
  %1113 = vmatpush1.msra.mxu0 0.0
  %1114 = vmatprep.subr.mxu0 0.0
  %1115 = vmatpush1.msra.mxu0 0.0
  %1116 = vmatprep.subr.mxu0 0.0
  %1117 = vmatpush1.msra.mxu0 0.0
  %1118 = vmatprep.subr.mxu0 0.0
  %1119 = vmatpush1.msra.mxu0 0.0
  %1120 = vmatprep.subr.mxu0 0.0
  %1121 = vmatpush1.msra.mxu0 0.0
  %1122 = vmatprep.subr.mxu0 0.0
  %1123 = vmatpush1.msra.mxu0 0.0
  %1124 = vmatprep.subr.mxu0 0.0
  %1125 = vmatpush1.msra.mxu0 0.0
  %1126 = vmatprep.subr.mxu0 0.0
  %1127 = vmatpush1.msra.mxu0 0.0
  %1128 = vmatprep.subr.mxu0 0.0
  %1129 = vmatpush1.msra.mxu0 0.0
  %1130 = vmatprep.subr.mxu0 0.0
  %1131 = vmatpush1.msra.mxu0 0.0
  %1132 = vmatprep.subr.mxu0 0.0
  %1133 = vmatpush1.msra.mxu0 0.0
  %1134 = vmatprep.subr.mxu0 0.0
  %1135 = vmatpush1.msra.mxu0 0.0
  %1136 = vmatprep.subr.mxu0 0.0
  %1137 = vmatpush1.msra.mxu0 0.0
  %1138 = vmatprep.subr.mxu0 0.0
  %1139 = vmatpush1.msra.mxu0 0.0
  %1140 = vmatprep.subr.mxu0 0.0
  %1141 = vmatpush1.msra.mxu0 0.0
  %1142 = vmatprep.subr.mxu0 0.0
  %1143 = vmatpush1.msra.mxu0 0.0
  %1144 = vmatprep.subr.mxu0 0.0
  %1145 = vmatpush1.msra.mxu0 0.0
  %1146 = vmatprep.subr.mxu0 0.0
  %1147 = vmatpush1.msra.mxu0 0.0
  %1148 = vmatprep.subr.mxu0 0.0
  %1149 = vmatpush1.msra.mxu0 0.0
  %1150 = vmatprep.mubr.f32.mxu0 0.0
  %v1151 = vand.u32 %v29, 4294901760
  %1152 = vmatmul.mubr.f32.gmra.mrb[0].mxu0 %v1151
  %v1153 = vpop.f32.mrb[0].mxu0
  %v1154 = vadd.f32 %v1053, %v1153
  %v1155 = vpop.f32.mrb[0].mxu0
  %1156 = vmatprep.mubr.f32.mxu0 0.0
  %v1157 = vand.u32 %v32, 4294901760
  %1158 = vmatmul.mubr.f32.gmra.mrb[0].mxu0 %v1157
  %v1159 = vpop.f32.mrb[0].mxu0
  %v1160 = vadd.f32 %v1061, %v1159
  %v1161 = vpop.f32.mrb[0].mxu0
  %1162 = vmatprep.mubr.f32.mxu0 0.0
  %v1163 = vand.u32 %v35, 4294901760
  %1164 = vmatmul.mubr.f32.gmra.mrb[0].mxu0 %v1163
  %v1165 = vpop.f32.mrb[0].mxu0
  %v1166 = vadd.f32 %v1069, %v1165
  %v1167 = vpop.f32.mrb[0].mxu0
  %1168 = vmatprep.mubr.f32.mxu0 0.0
  %v1169 = vand.u32 %v38, 4294901760
  %1170 = vmatmul.mubr.f32.gmra.mrb[0].mxu0 %v1169
  %v1171 = vpop.f32.mrb[0].mxu0
  %v1172 = vadd.f32 %v1077, %v1171
  %v1173 = vpop.f32.mrb[0].mxu0
  %1174 = vdwg.mxu0
  %1175 = vmatprep.subr.mxu0 0.0
  %v1176 = vand.u32 %v19, 4294901760
  %1177 = vmatpush1.msra.mxu0 %v1176
  %1178 = vmatprep.subr.mxu0 0.0
  %v1179 = vand.u32 %v22, 4294901760
  %1180 = vmatpush1.msra.mxu0 %v1179
  %1181 = vmatprep.subr.mxu0 0.0
  %1182 = vmatpush1.msra.mxu0 0.0
  %1183 = vmatprep.subr.mxu0 0.0
  %1184 = vmatpush1.msra.mxu0 0.0
  %1185 = vmatprep.subr.mxu0 0.0
  %1186 = vmatpush1.msra.mxu0 0.0
  %1187 = vmatprep.subr.mxu0 0.0
  %1188 = vmatpush1.msra.mxu0 0.0
  %1189 = vmatprep.subr.mxu0 0.0
  %1190 = vmatpush1.msra.mxu0 0.0
  %1191 = vmatprep.subr.mxu0 0.0
  %1192 = vmatpush1.msra.mxu0 0.0
  %1193 = vmatprep.subr.mxu0 0.0
  %1194 = vmatpush1.msra.mxu0 0.0
  %1195 = vmatprep.subr.mxu0 0.0
  %1196 = vmatpush1.msra.mxu0 0.0
  %1197 = vmatprep.subr.mxu0 0.0
  %1198 = vmatpush1.msra.mxu0 0.0
  %1199 = vmatprep.subr.mxu0 0.0
  %1200 = vmatpush1.msra.mxu0 0.0
  %1201 = vmatprep.subr.mxu0 0.0
  %1202 = vmatpush1.msra.mxu0 0.0
  %1203 = vmatprep.subr.mxu0 0.0
  %1204 = vmatpush1.msra.mxu0 0.0
  %1205 = vmatprep.subr.mxu0 0.0
  %1206 = vmatpush1.msra.mxu0 0.0
  %1207 = vmatprep.subr.mxu0 0.0
  %1208 = vmatpush1.msra.mxu0 0.0
  %1209 = vmatprep.subr.mxu0 0.0
  %1210 = vmatpush1.msra.mxu0 0.0
  %1211 = vmatprep.subr.mxu0 0.0
  %1212 = vmatpush1.msra.mxu0 0.0
  %1213 = vmatprep.subr.mxu0 0.0
  %1214 = vmatpush1.msra.mxu0 0.0
  %1215 = vmatprep.subr.mxu0 0.0
  %1216 = vmatpush1.msra.mxu0 0.0
  %1217 = vmatprep.subr.mxu0 0.0
  %1218 = vmatpush1.msra.mxu0 0.0
  %1219 = vmatprep.subr.mxu0 0.0
  %1220 = vmatpush1.msra.mxu0 0.0
  %1221 = vmatprep.subr.mxu0 0.0
  %1222 = vmatpush1.msra.mxu0 0.0
  %1223 = vmatprep.subr.mxu0 0.0
  %1224 = vmatpush1.msra.mxu0 0.0
  %1225 = vmatprep.subr.mxu0 0.0
  %1226 = vmatpush1.msra.mxu0 0.0
  %1227 = vmatprep.subr.mxu0 0.0
  %1228 = vmatpush1.msra.mxu0 0.0
  %1229 = vmatprep.subr.mxu0 0.0
  %1230 = vmatpush1.msra.mxu0 0.0
  %1231 = vmatprep.subr.mxu0 0.0
  %1232 = vmatpush1.msra.mxu0 0.0
  %1233 = vmatprep.subr.mxu0 0.0
  %1234 = vmatpush1.msra.mxu0 0.0
  %1235 = vmatprep.subr.mxu0 0.0
  %1236 = vmatpush1.msra.mxu0 0.0
  %1237 = vmatprep.subr.mxu0 0.0
  %1238 = vmatpush1.msra.mxu0 0.0
  %1239 = vmatprep.subr.mxu0 0.0
  %1240 = vmatpush1.msra.mxu0 0.0
  %1241 = vmatprep.mubr.f32.mxu0 0.0
  %v1242 = vand.u32 %v29, 4294901760
  %1243 = vmatmul.mubr.f32.gmra.mrb[0].mxu0 %v1242
  %v1244 = vpop.f32.mrb[0].mxu0
  %v1245 = vadd.f32 %v1154, %v1244
  %v1246 = vpop.f32.mrb[0].mxu0
  %1247 = vmatprep.mubr.f32.mxu0 0.0
  %v1248 = vand.u32 %v32, 4294901760
  %1249 = vmatmul.mubr.f32.gmra.mrb[0].mxu0 %v1248
  %v1250 = vpop.f32.mrb[0].mxu0
  %v1251 = vadd.f32 %v1160, %v1250
  %v1252 = vpop.f32.mrb[0].mxu0
  %1253 = vmatprep.mubr.f32.mxu0 0.0
  %v1254 = vand.u32 %v35, 4294901760
  %1255 = vmatmul.mubr.f32.gmra.mrb[0].mxu0 %v1254
  %v1256 = vpop.f32.mrb[0].mxu0
  %v1257 = vadd.f32 %v1166, %v1256
  %v1258 = vpop.f32.mrb[0].mxu0
  %1259 = vmatprep.mubr.f32.mxu0 0.0
  %v1260 = vand.u32 %v38, 4294901760
  %1261 = vmatmul.mubr.f32.gmra.mrb[0].mxu0 %v1260
  %v1262 = vpop.f32.mrb[0].mxu0
  %v1263 = vadd.f32 %v1172, %v1262
  %v1264 = vpop.f32.mrb[0].mxu0
  %1265 = vdwg.mxu0
  %v1266 = vmax.f32 %v653, 0.0
  %v1267 = vmax.f32 %v655, 0.0
  %v1268 = vmax.f32 %v1245, 0.0
  %v1269 = vmax.f32 %v660, 0.0
  %v1270 = vmax.f32 %v662, 0.0
  %v1271 = vmax.f32 %v1251, 0.0
  %v1272 = vmax.f32 %v667, 0.0
  %v1273 = vmax.f32 %v669, 0.0
  %v1274 = vmax.f32 %v1257, 0.0
  %v1275 = vmax.f32 %v674, 0.0
  %v1276 = vmax.f32 %v676, 0.0
  %v1277 = vmax.f32 %v1263, 0.0
  %v1278 = vld [vmem:[%s2] sm:$0xff]
  %v1279 = vld [vmem:[%s2 + $0x8] sm:$0xff]
  %v1280 = vld [vmem:[%s2 + $0x10] sm:$0xff]
  %v1281 = vld [vmem:[%s2 + $0x18] sm:$0xff]
  %vm1282 = vcmask 261120
  %v1284 = vsel %vm1282, %v1278, 0
  %v1287 = vsel %vm1282, %v1279, 0
  %v1290 = vsel %vm1282, %v1280, 0
  %v1293 = vsel %vm1282, %v1281, 0
  %v1295 = vand.u32 %v1267, 4294901760
  %1296 = vmatprep.subr.mxu0 %v1295
  %v1297 = vand.u32 %v1266, 4294901760
  %1298 = vmatpush1.msra.mxu0 %v1297
  %v1299 = vand.u32 %v1270, 4294901760
  %1300 = vmatprep.subr.mxu0 %v1299
  %v1301 = vand.u32 %v1269, 4294901760
  %1302 = vmatpush1.msra.mxu0 %v1301
  %v1303 = vand.u32 %v1273, 4294901760
  %1304 = vmatprep.subr.mxu0 %v1303
  %v1305 = vand.u32 %v1272, 4294901760
  %1306 = vmatpush1.msra.mxu0 %v1305
  %v1307 = vand.u32 %v1276, 4294901760
  %1308 = vmatprep.subr.mxu0 %v1307
  %v1309 = vand.u32 %v1275, 4294901760
  %1310 = vmatpush1.msra.mxu0 %v1309
  %1311 = vmatprep.subr.mxu0 0.0
  %1312 = vmatpush1.msra.mxu0 0.0
  %1313 = vmatprep.subr.mxu0 0.0
  %1314 = vmatpush1.msra.mxu0 0.0
  %1315 = vmatprep.subr.mxu0 0.0
  %1316 = vmatpush1.msra.mxu0 0.0
  %1317 = vmatprep.subr.mxu0 0.0
  %1318 = vmatpush1.msra.mxu0 0.0
  %1319 = vmatprep.subr.mxu0 0.0
  %1320 = vmatpush1.msra.mxu0 0.0
  %1321 = vmatprep.subr.mxu0 0.0
  %1322 = vmatpush1.msra.mxu0 0.0
  %1323 = vmatprep.subr.mxu0 0.0
  %1324 = vmatpush1.msra.mxu0 0.0
  %1325 = vmatprep.subr.mxu0 0.0
  %1326 = vmatpush1.msra.mxu0 0.0
  %1327 = vmatprep.subr.mxu0 0.0
  %1328 = vmatpush1.msra.mxu0 0.0
  %1329 = vmatprep.subr.mxu0 0.0
  %1330 = vmatpush1.msra.mxu0 0.0
  %1331 = vmatprep.subr.mxu0 0.0
  %1332 = vmatpush1.msra.mxu0 0.0
  %1333 = vmatprep.subr.mxu0 0.0
  %1334 = vmatpush1.msra.mxu0 0.0
  %1335 = vmatprep.subr.mxu0 0.0
  %1336 = vmatpush1.msra.mxu0 0.0
  %1337 = vmatprep.subr.mxu0 0.0
  %1338 = vmatpush1.msra.mxu0 0.0
  %1339 = vmatprep.subr.mxu0 0.0
  %1340 = vmatpush1.msra.mxu0 0.0
  %1341 = vmatprep.subr.mxu0 0.0
  %1342 = vmatpush1.msra.mxu0 0.0
  %1343 = vmatprep.subr.mxu0 0.0
  %1344 = vmatpush1.msra.mxu0 0.0
  %1345 = vmatprep.subr.mxu0 0.0
  %1346 = vmatpush1.msra.mxu0 0.0
  %1347 = vmatprep.subr.mxu0 0.0
  %1348 = vmatpush1.msra.mxu0 0.0
  %1349 = vmatprep.subr.mxu0 0.0
  %1350 = vmatpush1.msra.mxu0 0.0
  %1351 = vmatprep.subr.mxu0 0.0
  %1352 = vmatpush1.msra.mxu0 0.0
  %1353 = vmatprep.subr.mxu0 0.0
  %1354 = vmatpush1.msra.mxu0 0.0
  %1355 = vmatprep.subr.mxu0 0.0
  %1356 = vmatpush1.msra.mxu0 0.0
  %1357 = vmatprep.subr.mxu0 0.0
  %1358 = vmatpush1.msra.mxu0 0.0
  %1359 = vmatprep.subr.mxu0 0.0
  %1360 = vmatpush1.msra.mxu0 0.0
  %1361 = vmatprep.subr.mxu0 0.0
  %1362 = vmatpush1.msra.mxu0 0.0
  %1363 = vmatprep.subr.mxu0 0.0
  %1364 = vmatpush1.msra.mxu0 0.0
  %1365 = vmatprep.subr.mxu0 0.0
  %1366 = vmatpush1.msra.mxu0 0.0
  %1367 = vmatprep.mubr.f32.mxu0 0.0
  %v1368 = vand.u32 %v1284, 4294901760
  %v1369 = vsub.f32 %v1284, %v1368
  %v1370 = vand.u32 %v1369, 4294901760
  %v1371 = vsub.f32 %v1369, %v1370
  %v1372 = vand.u32 %v1371, 4294901760
  %1373 = vmatmul.mubr.f32.gmra.mrb[0].mxu0 %v1372
  %v1374 = vpop.f32.mrb[0].mxu0
  %v1375 = vadd.f32 0.0, %v1374
  %v1376 = vpop.f32.mrb[0].mxu0
  %v1377 = vadd.f32 0.0, %v1376
  %1378 = vmatprep.mubr.f32.mxu0 0.0
  %v1379 = vand.u32 %v1287, 4294901760
  %v1380 = vsub.f32 %v1287, %v1379
  %v1381 = vand.u32 %v1380, 4294901760
  %v1382 = vsub.f32 %v1380, %v1381
  %v1383 = vand.u32 %v1382, 4294901760
  %1384 = vmatmul.mubr.f32.gmra.mrb[0].mxu0 %v1383
  %v1385 = vpop.f32.mrb[0].mxu0
  %v1386 = vadd.f32 0.0, %v1385
  %v1387 = vpop.f32.mrb[0].mxu0
  %v1388 = vadd.f32 0.0, %v1387
  %1389 = vmatprep.mubr.f32.mxu0 0.0
  %v1390 = vand.u32 %v1290, 4294901760
  %v1391 = vsub.f32 %v1290, %v1390
  %v1392 = vand.u32 %v1391, 4294901760
  %v1393 = vsub.f32 %v1391, %v1392
  %v1394 = vand.u32 %v1393, 4294901760
  %1395 = vmatmul.mubr.f32.gmra.mrb[0].mxu0 %v1394
  %v1396 = vpop.f32.mrb[0].mxu0
  %v1397 = vadd.f32 0.0, %v1396
  %v1398 = vpop.f32.mrb[0].mxu0
  %v1399 = vadd.f32 0.0, %v1398
  %1400 = vmatprep.mubr.f32.mxu0 0.0
  %v1401 = vand.u32 %v1293, 4294901760
  %v1402 = vsub.f32 %v1293, %v1401
  %v1403 = vand.u32 %v1402, 4294901760
  %v1404 = vsub.f32 %v1402, %v1403
  %v1405 = vand.u32 %v1404, 4294901760
  %1406 = vmatmul.mubr.f32.gmra.mrb[0].mxu0 %v1405
  %v1407 = vpop.f32.mrb[0].mxu0
  %v1408 = vadd.f32 0.0, %v1407
  %v1409 = vpop.f32.mrb[0].mxu0
  %v1410 = vadd.f32 0.0, %v1409
  %1411 = vdwg.mxu0
  %v1412 = vand.u32 %v1267, 4294901760
  %v1413 = vsub.f32 %v1267, %v1412
  %v1414 = vand.u32 %v1413, 4294901760
  %v1415 = vsub.f32 %v1413, %v1414
  %v1416 = vand.u32 %v1415, 4294901760
  %1417 = vmatprep.subr.mxu0 %v1416
  %v1418 = vand.u32 %v1266, 4294901760
  %v1419 = vsub.f32 %v1266, %v1418
  %v1420 = vand.u32 %v1419, 4294901760
  %v1421 = vsub.f32 %v1419, %v1420
  %v1422 = vand.u32 %v1421, 4294901760
  %1423 = vmatpush1.msra.mxu0 %v1422
  %v1424 = vand.u32 %v1270, 4294901760
  %v1425 = vsub.f32 %v1270, %v1424
  %v1426 = vand.u32 %v1425, 4294901760
  %v1427 = vsub.f32 %v1425, %v1426
  %v1428 = vand.u32 %v1427, 4294901760
  %1429 = vmatprep.subr.mxu0 %v1428
  %v1430 = vand.u32 %v1269, 4294901760
  %v1431 = vsub.f32 %v1269, %v1430
  %v1432 = vand.u32 %v1431, 4294901760
  %v1433 = vsub.f32 %v1431, %v1432
  %v1434 = vand.u32 %v1433, 4294901760
  %1435 = vmatpush1.msra.mxu0 %v1434
  %v1436 = vand.u32 %v1273, 4294901760
  %v1437 = vsub.f32 %v1273, %v1436
  %v1438 = vand.u32 %v1437, 4294901760
  %v1439 = vsub.f32 %v1437, %v1438
  %v1440 = vand.u32 %v1439, 4294901760
  %1441 = vmatprep.subr.mxu0 %v1440
  %v1442 = vand.u32 %v1272, 4294901760
  %v1443 = vsub.f32 %v1272, %v1442
  %v1444 = vand.u32 %v1443, 4294901760
  %v1445 = vsub.f32 %v1443, %v1444
  %v1446 = vand.u32 %v1445, 4294901760
  %1447 = vmatpush1.msra.mxu0 %v1446
  %v1448 = vand.u32 %v1276, 4294901760
  %v1449 = vsub.f32 %v1276, %v1448
  %v1450 = vand.u32 %v1449, 4294901760
  %v1451 = vsub.f32 %v1449, %v1450
  %v1452 = vand.u32 %v1451, 4294901760
  %1453 = vmatprep.subr.mxu0 %v1452
  %v1454 = vand.u32 %v1275, 4294901760
  %v1455 = vsub.f32 %v1275, %v1454
  %v1456 = vand.u32 %v1455, 4294901760
  %v1457 = vsub.f32 %v1455, %v1456
  %v1458 = vand.u32 %v1457, 4294901760
  %1459 = vmatpush1.msra.mxu0 %v1458
  %1460 = vmatprep.subr.mxu0 0.0
  %1461 = vmatpush1.msra.mxu0 0.0
  %1462 = vmatprep.subr.mxu0 0.0
  %1463 = vmatpush1.msra.mxu0 0.0
  %1464 = vmatprep.subr.mxu0 0.0
  %1465 = vmatpush1.msra.mxu0 0.0
  %1466 = vmatprep.subr.mxu0 0.0
  %1467 = vmatpush1.msra.mxu0 0.0
  %1468 = vmatprep.subr.mxu0 0.0
  %1469 = vmatpush1.msra.mxu0 0.0
  %1470 = vmatprep.subr.mxu0 0.0
  %1471 = vmatpush1.msra.mxu0 0.0
  %1472 = vmatprep.subr.mxu0 0.0
  %1473 = vmatpush1.msra.mxu0 0.0
  %1474 = vmatprep.subr.mxu0 0.0
  %1475 = vmatpush1.msra.mxu0 0.0
  %1476 = vmatprep.subr.mxu0 0.0
  %1477 = vmatpush1.msra.mxu0 0.0
  %1478 = vmatprep.subr.mxu0 0.0
  %1479 = vmatpush1.msra.mxu0 0.0
  %1480 = vmatprep.subr.mxu0 0.0
  %1481 = vmatpush1.msra.mxu0 0.0
  %1482 = vmatprep.subr.mxu0 0.0
  %1483 = vmatpush1.msra.mxu0 0.0
  %1484 = vmatprep.subr.mxu0 0.0
  %1485 = vmatpush1.msra.mxu0 0.0
  %1486 = vmatprep.subr.mxu0 0.0
  %1487 = vmatpush1.msra.mxu0 0.0
  %1488 = vmatprep.subr.mxu0 0.0
  %1489 = vmatpush1.msra.mxu0 0.0
  %1490 = vmatprep.subr.mxu0 0.0
  %1491 = vmatpush1.msra.mxu0 0.0
  %1492 = vmatprep.subr.mxu0 0.0
  %1493 = vmatpush1.msra.mxu0 0.0
  %1494 = vmatprep.subr.mxu0 0.0
  %1495 = vmatpush1.msra.mxu0 0.0
  %1496 = vmatprep.subr.mxu0 0.0
  %1497 = vmatpush1.msra.mxu0 0.0
  %1498 = vmatprep.subr.mxu0 0.0
  %1499 = vmatpush1.msra.mxu0 0.0
  %1500 = vmatprep.subr.mxu0 0.0
  %1501 = vmatpush1.msra.mxu0 0.0
  %1502 = vmatprep.subr.mxu0 0.0
  %1503 = vmatpush1.msra.mxu0 0.0
  %1504 = vmatprep.subr.mxu0 0.0
  %1505 = vmatpush1.msra.mxu0 0.0
  %1506 = vmatprep.subr.mxu0 0.0
  %1507 = vmatpush1.msra.mxu0 0.0
  %1508 = vmatprep.subr.mxu0 0.0
  %1509 = vmatpush1.msra.mxu0 0.0
  %1510 = vmatprep.subr.mxu0 0.0
  %1511 = vmatpush1.msra.mxu0 0.0
  %1512 = vmatprep.subr.mxu0 0.0
  %1513 = vmatpush1.msra.mxu0 0.0
  %1514 = vmatprep.subr.mxu0 0.0
  %1515 = vmatpush1.msra.mxu0 0.0
  %1516 = vmatprep.mubr.f32.mxu0 0.0
  %v1517 = vand.u32 %v1284, 4294901760
  %1518 = vmatmul.mubr.f32.gmra.mrb[0].mxu0 %v1517
  %v1519 = vpop.f32.mrb[0].mxu0
  %v1520 = vadd.f32 %v1375, %v1519
  %v1521 = vpop.f32.mrb[0].mxu0
  %v1522 = vadd.f32 %v1377, %v1521
  %1523 = vmatprep.mubr.f32.mxu0 0.0
  %v1524 = vand.u32 %v1287, 4294901760
  %1525 = vmatmul.mubr.f32.gmra.mrb[0].mxu0 %v1524
  %v1526 = vpop.f32.mrb[0].mxu0
  %v1527 = vadd.f32 %v1386, %v1526
  %v1528 = vpop.f32.mrb[0].mxu0
  %v1529 = vadd.f32 %v1388, %v1528
  %1530 = vmatprep.mubr.f32.mxu0 0.0
  %v1531 = vand.u32 %v1290, 4294901760
  %1532 = vmatmul.mubr.f32.gmra.mrb[0].mxu0 %v1531
  %v1533 = vpop.f32.mrb[0].mxu0
  %v1534 = vadd.f32 %v1397, %v1533
  %v1535 = vpop.f32.mrb[0].mxu0
  %v1536 = vadd.f32 %v1399, %v1535
  %1537 = vmatprep.mubr.f32.mxu0 0.0
  %v1538 = vand.u32 %v1293, 4294901760
  %1539 = vmatmul.mubr.f32.gmra.mrb[0].mxu0 %v1538
  %v1540 = vpop.f32.mrb[0].mxu0
  %v1541 = vadd.f32 %v1408, %v1540
  %v1542 = vpop.f32.mrb[0].mxu0
  %v1543 = vadd.f32 %v1410, %v1542
  %1544 = vdwg.mxu0
  %v1545 = vand.u32 %v1267, 4294901760
  %v1546 = vsub.f32 %v1267, %v1545
  %1547 = vmatprep.subr.mxu0 %v1546
  %v1548 = vand.u32 %v1266, 4294901760
  %v1549 = vsub.f32 %v1266, %v1548
  %1550 = vmatpush1.msra.mxu0 %v1549
  %v1551 = vand.u32 %v1270, 4294901760
  %v1552 = vsub.f32 %v1270, %v1551
  %1553 = vmatprep.subr.mxu0 %v1552
  %v1554 = vand.u32 %v1269, 4294901760
  %v1555 = vsub.f32 %v1269, %v1554
  %1556 = vmatpush1.msra.mxu0 %v1555
  %v1557 = vand.u32 %v1273, 4294901760
  %v1558 = vsub.f32 %v1273, %v1557
  %1559 = vmatprep.subr.mxu0 %v1558
  %v1560 = vand.u32 %v1272, 4294901760
  %v1561 = vsub.f32 %v1272, %v1560
  %1562 = vmatpush1.msra.mxu0 %v1561
  %v1563 = vand.u32 %v1276, 4294901760
  %v1564 = vsub.f32 %v1276, %v1563
  %1565 = vmatprep.subr.mxu0 %v1564
  %v1566 = vand.u32 %v1275, 4294901760
  %v1567 = vsub.f32 %v1275, %v1566
  %1568 = vmatpush1.msra.mxu0 %v1567
  %1569 = vmatprep.subr.mxu0 0.0
  %1570 = vmatpush1.msra.mxu0 0.0
  %1571 = vmatprep.subr.mxu0 0.0
  %1572 = vmatpush1.msra.mxu0 0.0
  %1573 = vmatprep.subr.mxu0 0.0
  %1574 = vmatpush1.msra.mxu0 0.0
  %1575 = vmatprep.subr.mxu0 0.0
  %1576 = vmatpush1.msra.mxu0 0.0
  %1577 = vmatprep.subr.mxu0 0.0
  %1578 = vmatpush1.msra.mxu0 0.0
  %1579 = vmatprep.subr.mxu0 0.0
  %1580 = vmatpush1.msra.mxu0 0.0
  %1581 = vmatprep.subr.mxu0 0.0
  %1582 = vmatpush1.msra.mxu0 0.0
  %1583 = vmatprep.subr.mxu0 0.0
  %1584 = vmatpush1.msra.mxu0 0.0
  %1585 = vmatprep.subr.mxu0 0.0
  %1586 = vmatpush1.msra.mxu0 0.0
  %1587 = vmatprep.subr.mxu0 0.0
  %1588 = vmatpush1.msra.mxu0 0.0
  %1589 = vmatprep.subr.mxu0 0.0
  %1590 = vmatpush1.msra.mxu0 0.0
  %1591 = vmatprep.subr.mxu0 0.0
  %1592 = vmatpush1.msra.mxu0 0.0
  %1593 = vmatprep.subr.mxu0 0.0
  %1594 = vmatpush1.msra.mxu0 0.0
  %1595 = vmatprep.subr.mxu0 0.0
  %1596 = vmatpush1.msra.mxu0 0.0
  %1597 = vmatprep.subr.mxu0 0.0
  %1598 = vmatpush1.msra.mxu0 0.0
  %1599 = vmatprep.subr.mxu0 0.0
  %1600 = vmatpush1.msra.mxu0 0.0
  %1601 = vmatprep.subr.mxu0 0.0
  %1602 = vmatpush1.msra.mxu0 0.0
  %1603 = vmatprep.subr.mxu0 0.0
  %1604 = vmatpush1.msra.mxu0 0.0
  %1605 = vmatprep.subr.mxu0 0.0
  %1606 = vmatpush1.msra.mxu0 0.0
  %1607 = vmatprep.subr.mxu0 0.0
  %1608 = vmatpush1.msra.mxu0 0.0
  %1609 = vmatprep.subr.mxu0 0.0
  %1610 = vmatpush1.msra.mxu0 0.0
  %1611 = vmatprep.subr.mxu0 0.0
  %1612 = vmatpush1.msra.mxu0 0.0
  %1613 = vmatprep.subr.mxu0 0.0
  %1614 = vmatpush1.msra.mxu0 0.0
  %1615 = vmatprep.subr.mxu0 0.0
  %1616 = vmatpush1.msra.mxu0 0.0
  %1617 = vmatprep.subr.mxu0 0.0
  %1618 = vmatpush1.msra.mxu0 0.0
  %1619 = vmatprep.subr.mxu0 0.0
  %1620 = vmatpush1.msra.mxu0 0.0
  %1621 = vmatprep.subr.mxu0 0.0
  %1622 = vmatpush1.msra.mxu0 0.0
  %1623 = vmatprep.subr.mxu0 0.0
  %1624 = vmatpush1.msra.mxu0 0.0
  %1625 = vmatprep.mubr.f32.mxu0 0.0
  %v1626 = vand.u32 %v1284, 4294901760
  %v1627 = vsub.f32 %v1284, %v1626
  %1628 = vmatmul.mubr.f32.gmra.mrb[0].mxu0 %v1627
  %v1629 = vpop.f32.mrb[0].mxu0
  %v1630 = vadd.f32 %v1520, %v1629
  %v1631 = vpop.f32.mrb[0].mxu0
  %v1632 = vadd.f32 %v1522, %v1631
  %1633 = vmatprep.mubr.f32.mxu0 0.0
  %v1634 = vand.u32 %v1287, 4294901760
  %v1635 = vsub.f32 %v1287, %v1634
  %1636 = vmatmul.mubr.f32.gmra.mrb[0].mxu0 %v1635
  %v1637 = vpop.f32.mrb[0].mxu0
  %v1638 = vadd.f32 %v1527, %v1637
  %v1639 = vpop.f32.mrb[0].mxu0
  %v1640 = vadd.f32 %v1529, %v1639
  %1641 = vmatprep.mubr.f32.mxu0 0.0
  %v1642 = vand.u32 %v1290, 4294901760
  %v1643 = vsub.f32 %v1290, %v1642
  %1644 = vmatmul.mubr.f32.gmra.mrb[0].mxu0 %v1643
  %v1645 = vpop.f32.mrb[0].mxu0
  %v1646 = vadd.f32 %v1534, %v1645
  %v1647 = vpop.f32.mrb[0].mxu0
  %v1648 = vadd.f32 %v1536, %v1647
  %1649 = vmatprep.mubr.f32.mxu0 0.0
  %v1650 = vand.u32 %v1293, 4294901760
  %v1651 = vsub.f32 %v1293, %v1650
  %1652 = vmatmul.mubr.f32.gmra.mrb[0].mxu0 %v1651
  %v1653 = vpop.f32.mrb[0].mxu0
  %v1654 = vadd.f32 %v1541, %v1653
  %v1655 = vpop.f32.mrb[0].mxu0
  %v1656 = vadd.f32 %v1543, %v1655
  %1657 = vdwg.mxu0
  %v1658 = vand.u32 %v1267, 4294901760
  %1659 = vmatprep.subr.mxu0 %v1658
  %v1660 = vand.u32 %v1266, 4294901760
  %1661 = vmatpush1.msra.mxu0 %v1660
  %v1662 = vand.u32 %v1270, 4294901760
  %1663 = vmatprep.subr.mxu0 %v1662
  %v1664 = vand.u32 %v1269, 4294901760
  %1665 = vmatpush1.msra.mxu0 %v1664
  %v1666 = vand.u32 %v1273, 4294901760
  %1667 = vmatprep.subr.mxu0 %v1666
  %v1668 = vand.u32 %v1272, 4294901760
  %1669 = vmatpush1.msra.mxu0 %v1668
  %v1670 = vand.u32 %v1276, 4294901760
  %1671 = vmatprep.subr.mxu0 %v1670
  %v1672 = vand.u32 %v1275, 4294901760
  %1673 = vmatpush1.msra.mxu0 %v1672
  %1674 = vmatprep.subr.mxu0 0.0
  %1675 = vmatpush1.msra.mxu0 0.0
  %1676 = vmatprep.subr.mxu0 0.0
  %1677 = vmatpush1.msra.mxu0 0.0
  %1678 = vmatprep.subr.mxu0 0.0
  %1679 = vmatpush1.msra.mxu0 0.0
  %1680 = vmatprep.subr.mxu0 0.0
  %1681 = vmatpush1.msra.mxu0 0.0
  %1682 = vmatprep.subr.mxu0 0.0
  %1683 = vmatpush1.msra.mxu0 0.0
  %1684 = vmatprep.subr.mxu0 0.0
  %1685 = vmatpush1.msra.mxu0 0.0
  %1686 = vmatprep.subr.mxu0 0.0
  %1687 = vmatpush1.msra.mxu0 0.0
  %1688 = vmatprep.subr.mxu0 0.0
  %1689 = vmatpush1.msra.mxu0 0.0
  %1690 = vmatprep.subr.mxu0 0.0
  %1691 = vmatpush1.msra.mxu0 0.0
  %1692 = vmatprep.subr.mxu0 0.0
  %1693 = vmatpush1.msra.mxu0 0.0
  %1694 = vmatprep.subr.mxu0 0.0
  %1695 = vmatpush1.msra.mxu0 0.0
  %1696 = vmatprep.subr.mxu0 0.0
  %1697 = vmatpush1.msra.mxu0 0.0
  %1698 = vmatprep.subr.mxu0 0.0
  %1699 = vmatpush1.msra.mxu0 0.0
  %1700 = vmatprep.subr.mxu0 0.0
  %1701 = vmatpush1.msra.mxu0 0.0
  %1702 = vmatprep.subr.mxu0 0.0
  %1703 = vmatpush1.msra.mxu0 0.0
  %1704 = vmatprep.subr.mxu0 0.0
  %1705 = vmatpush1.msra.mxu0 0.0
  %1706 = vmatprep.subr.mxu0 0.0
  %1707 = vmatpush1.msra.mxu0 0.0
  %1708 = vmatprep.subr.mxu0 0.0
  %1709 = vmatpush1.msra.mxu0 0.0
  %1710 = vmatprep.subr.mxu0 0.0
  %1711 = vmatpush1.msra.mxu0 0.0
  %1712 = vmatprep.subr.mxu0 0.0
  %1713 = vmatpush1.msra.mxu0 0.0
  %1714 = vmatprep.subr.mxu0 0.0
  %1715 = vmatpush1.msra.mxu0 0.0
  %1716 = vmatprep.subr.mxu0 0.0
  %1717 = vmatpush1.msra.mxu0 0.0
  %1718 = vmatprep.subr.mxu0 0.0
  %1719 = vmatpush1.msra.mxu0 0.0
  %1720 = vmatprep.subr.mxu0 0.0
  %1721 = vmatpush1.msra.mxu0 0.0
  %1722 = vmatprep.subr.mxu0 0.0
  %1723 = vmatpush1.msra.mxu0 0.0
  %1724 = vmatprep.subr.mxu0 0.0
  %1725 = vmatpush1.msra.mxu0 0.0
  %1726 = vmatprep.subr.mxu0 0.0
  %1727 = vmatpush1.msra.mxu0 0.0
  %1728 = vmatprep.subr.mxu0 0.0
  %1729 = vmatpush1.msra.mxu0 0.0
  %1730 = vmatprep.mubr.f32.mxu0 0.0
  %v1731 = vand.u32 %v1284, 4294901760
  %v1732 = vsub.f32 %v1284, %v1731
  %v1733 = vand.u32 %v1732, 4294901760
  %1734 = vmatmul.mubr.f32.gmra.mrb[0].mxu0 %v1733
  %v1735 = vpop.f32.mrb[0].mxu0
  %v1736 = vadd.f32 %v1630, %v1735
  %v1737 = vpop.f32.mrb[0].mxu0
  %v1738 = vadd.f32 %v1632, %v1737
  %1739 = vmatprep.mubr.f32.mxu0 0.0
  %v1740 = vand.u32 %v1287, 4294901760
  %v1741 = vsub.f32 %v1287, %v1740
  %v1742 = vand.u32 %v1741, 4294901760
  %1743 = vmatmul.mubr.f32.gmra.mrb[0].mxu0 %v1742
  %v1744 = vpop.f32.mrb[0].mxu0
  %v1745 = vadd.f32 %v1638, %v1744
  %v1746 = vpop.f32.mrb[0].mxu0
  %v1747 = vadd.f32 %v1640, %v1746
  %1748 = vmatprep.mubr.f32.mxu0 0.0
  %v1749 = vand.u32 %v1290, 4294901760
  %v1750 = vsub.f32 %v1290, %v1749
  %v1751 = vand.u32 %v1750, 4294901760
  %1752 = vmatmul.mubr.f32.gmra.mrb[0].mxu0 %v1751
  %v1753 = vpop.f32.mrb[0].mxu0
  %v1754 = vadd.f32 %v1646, %v1753
  %v1755 = vpop.f32.mrb[0].mxu0
  %v1756 = vadd.f32 %v1648, %v1755
  %1757 = vmatprep.mubr.f32.mxu0 0.0
  %v1758 = vand.u32 %v1293, 4294901760
  %v1759 = vsub.f32 %v1293, %v1758
  %v1760 = vand.u32 %v1759, 4294901760
  %1761 = vmatmul.mubr.f32.gmra.mrb[0].mxu0 %v1760
  %v1762 = vpop.f32.mrb[0].mxu0
  %v1763 = vadd.f32 %v1654, %v1762
  %v1764 = vpop.f32.mrb[0].mxu0
  %v1765 = vadd.f32 %v1656, %v1764
  %1766 = vdwg.mxu0
  %v1767 = vand.u32 %v1267, 4294901760
  %v1768 = vsub.f32 %v1267, %v1767
  %v1769 = vand.u32 %v1768, 4294901760
  %1770 = vmatprep.subr.mxu0 %v1769
  %v1771 = vand.u32 %v1266, 4294901760
  %v1772 = vsub.f32 %v1266, %v1771
  %v1773 = vand.u32 %v1772, 4294901760
  %1774 = vmatpush1.msra.mxu0 %v1773
  %v1775 = vand.u32 %v1270, 4294901760
  %v1776 = vsub.f32 %v1270, %v1775
  %v1777 = vand.u32 %v1776, 4294901760
  %1778 = vmatprep.subr.mxu0 %v1777
  %v1779 = vand.u32 %v1269, 4294901760
  %v1780 = vsub.f32 %v1269, %v1779
  %v1781 = vand.u32 %v1780, 4294901760
  %1782 = vmatpush1.msra.mxu0 %v1781
  %v1783 = vand.u32 %v1273, 4294901760
  %v1784 = vsub.f32 %v1273, %v1783
  %v1785 = vand.u32 %v1784, 4294901760
  %1786 = vmatprep.subr.mxu0 %v1785
  %v1787 = vand.u32 %v1272, 4294901760
  %v1788 = vsub.f32 %v1272, %v1787
  %v1789 = vand.u32 %v1788, 4294901760
  %1790 = vmatpush1.msra.mxu0 %v1789
  %v1791 = vand.u32 %v1276, 4294901760
  %v1792 = vsub.f32 %v1276, %v1791
  %v1793 = vand.u32 %v1792, 4294901760
  %1794 = vmatprep.subr.mxu0 %v1793
  %v1795 = vand.u32 %v1275, 4294901760
  %v1796 = vsub.f32 %v1275, %v1795
  %v1797 = vand.u32 %v1796, 4294901760
  %1798 = vmatpush1.msra.mxu0 %v1797
  %1799 = vmatprep.subr.mxu0 0.0
  %1800 = vmatpush1.msra.mxu0 0.0
  %1801 = vmatprep.subr.mxu0 0.0
  %1802 = vmatpush1.msra.mxu0 0.0
  %1803 = vmatprep.subr.mxu0 0.0
  %1804 = vmatpush1.msra.mxu0 0.0
  %1805 = vmatprep.subr.mxu0 0.0
  %1806 = vmatpush1.msra.mxu0 0.0
  %1807 = vmatprep.subr.mxu0 0.0
  %1808 = vmatpush1.msra.mxu0 0.0
  %1809 = vmatprep.subr.mxu0 0.0
  %1810 = vmatpush1.msra.mxu0 0.0
  %1811 = vmatprep.subr.mxu0 0.0
  %1812 = vmatpush1.msra.mxu0 0.0
  %1813 = vmatprep.subr.mxu0 0.0
  %1814 = vmatpush1.msra.mxu0 0.0
  %1815 = vmatprep.subr.mxu0 0.0
  %1816 = vmatpush1.msra.mxu0 0.0
  %1817 = vmatprep.subr.mxu0 0.0
  %1818 = vmatpush1.msra.mxu0 0.0
  %1819 = vmatprep.subr.mxu0 0.0
  %1820 = vmatpush1.msra.mxu0 0.0
  %1821 = vmatprep.subr.mxu0 0.0
  %1822 = vmatpush1.msra.mxu0 0.0
  %1823 = vmatprep.subr.mxu0 0.0
  %1824 = vmatpush1.msra.mxu0 0.0
  %1825 = vmatprep.subr.mxu0 0.0
  %1826 = vmatpush1.msra.mxu0 0.0
  %1827 = vmatprep.subr.mxu0 0.0
  %1828 = vmatpush1.msra.mxu0 0.0
  %1829 = vmatprep.subr.mxu0 0.0
  %1830 = vmatpush1.msra.mxu0 0.0
  %1831 = vmatprep.subr.mxu0 0.0
  %1832 = vmatpush1.msra.mxu0 0.0
  %1833 = vmatprep.subr.mxu0 0.0
  %1834 = vmatpush1.msra.mxu0 0.0
  %1835 = vmatprep.subr.mxu0 0.0
  %1836 = vmatpush1.msra.mxu0 0.0
  %1837 = vmatprep.subr.mxu0 0.0
  %1838 = vmatpush1.msra.mxu0 0.0
  %1839 = vmatprep.subr.mxu0 0.0
  %1840 = vmatpush1.msra.mxu0 0.0
  %1841 = vmatprep.subr.mxu0 0.0
  %1842 = vmatpush1.msra.mxu0 0.0
  %1843 = vmatprep.subr.mxu0 0.0
  %1844 = vmatpush1.msra.mxu0 0.0
  %1845 = vmatprep.subr.mxu0 0.0
  %1846 = vmatpush1.msra.mxu0 0.0
  %1847 = vmatprep.subr.mxu0 0.0
  %1848 = vmatpush1.msra.mxu0 0.0
  %1849 = vmatprep.subr.mxu0 0.0
  %1850 = vmatpush1.msra.mxu0 0.0
  %1851 = vmatprep.subr.mxu0 0.0
  %1852 = vmatpush1.msra.mxu0 0.0
  %1853 = vmatprep.subr.mxu0 0.0
  %1854 = vmatpush1.msra.mxu0 0.0
  %1855 = vmatprep.mubr.f32.mxu0 0.0
  %v1856 = vand.u32 %v1284, 4294901760
  %1857 = vmatmul.mubr.f32.gmra.mrb[0].mxu0 %v1856
  %v1858 = vpop.f32.mrb[0].mxu0
  %v1859 = vadd.f32 %v1736, %v1858
  %v1860 = vpop.f32.mrb[0].mxu0
  %v1861 = vadd.f32 %v1738, %v1860
  %1862 = vmatprep.mubr.f32.mxu0 0.0
  %v1863 = vand.u32 %v1287, 4294901760
  %1864 = vmatmul.mubr.f32.gmra.mrb[0].mxu0 %v1863
  %v1865 = vpop.f32.mrb[0].mxu0
  %v1866 = vadd.f32 %v1745, %v1865
  %v1867 = vpop.f32.mrb[0].mxu0
  %v1868 = vadd.f32 %v1747, %v1867
  %1869 = vmatprep.mubr.f32.mxu0 0.0
  %v1870 = vand.u32 %v1290, 4294901760
  %1871 = vmatmul.mubr.f32.gmra.mrb[0].mxu0 %v1870
  %v1872 = vpop.f32.mrb[0].mxu0
  %v1873 = vadd.f32 %v1754, %v1872
  %v1874 = vpop.f32.mrb[0].mxu0
  %v1875 = vadd.f32 %v1756, %v1874
  %1876 = vmatprep.mubr.f32.mxu0 0.0
  %v1877 = vand.u32 %v1293, 4294901760
  %1878 = vmatmul.mubr.f32.gmra.mrb[0].mxu0 %v1877
  %v1879 = vpop.f32.mrb[0].mxu0
  %v1880 = vadd.f32 %v1763, %v1879
  %v1881 = vpop.f32.mrb[0].mxu0
  %v1882 = vadd.f32 %v1765, %v1881
  %1883 = vdwg.mxu0
  %v1884 = vand.u32 %v1267, 4294901760
  %1885 = vmatprep.subr.mxu0 %v1884
  %v1886 = vand.u32 %v1266, 4294901760
  %1887 = vmatpush1.msra.mxu0 %v1886
  %v1888 = vand.u32 %v1270, 4294901760
  %1889 = vmatprep.subr.mxu0 %v1888
  %v1890 = vand.u32 %v1269, 4294901760
  %1891 = vmatpush1.msra.mxu0 %v1890
  %v1892 = vand.u32 %v1273, 4294901760
  %1893 = vmatprep.subr.mxu0 %v1892
  %v1894 = vand.u32 %v1272, 4294901760
  %1895 = vmatpush1.msra.mxu0 %v1894
  %v1896 = vand.u32 %v1276, 4294901760
  %1897 = vmatprep.subr.mxu0 %v1896
  %v1898 = vand.u32 %v1275, 4294901760
  %1899 = vmatpush1.msra.mxu0 %v1898
  %1900 = vmatprep.subr.mxu0 0.0
  %1901 = vmatpush1.msra.mxu0 0.0
  %1902 = vmatprep.subr.mxu0 0.0
  %1903 = vmatpush1.msra.mxu0 0.0
  %1904 = vmatprep.subr.mxu0 0.0
  %1905 = vmatpush1.msra.mxu0 0.0
  %1906 = vmatprep.subr.mxu0 0.0
  %1907 = vmatpush1.msra.mxu0 0.0
  %1908 = vmatprep.subr.mxu0 0.0
  %1909 = vmatpush1.msra.mxu0 0.0
  %1910 = vmatprep.subr.mxu0 0.0
  %1911 = vmatpush1.msra.mxu0 0.0
  %1912 = vmatprep.subr.mxu0 0.0
  %1913 = vmatpush1.msra.mxu0 0.0
  %1914 = vmatprep.subr.mxu0 0.0
  %1915 = vmatpush1.msra.mxu0 0.0
  %1916 = vmatprep.subr.mxu0 0.0
  %1917 = vmatpush1.msra.mxu0 0.0
  %1918 = vmatprep.subr.mxu0 0.0
  %1919 = vmatpush1.msra.mxu0 0.0
  %1920 = vmatprep.subr.mxu0 0.0
  %1921 = vmatpush1.msra.mxu0 0.0
  %1922 = vmatprep.subr.mxu0 0.0
  %1923 = vmatpush1.msra.mxu0 0.0
  %1924 = vmatprep.subr.mxu0 0.0
  %1925 = vmatpush1.msra.mxu0 0.0
  %1926 = vmatprep.subr.mxu0 0.0
  %1927 = vmatpush1.msra.mxu0 0.0
  %1928 = vmatprep.subr.mxu0 0.0
  %1929 = vmatpush1.msra.mxu0 0.0
  %1930 = vmatprep.subr.mxu0 0.0
  %1931 = vmatpush1.msra.mxu0 0.0
  %1932 = vmatprep.subr.mxu0 0.0
  %1933 = vmatpush1.msra.mxu0 0.0
  %1934 = vmatprep.subr.mxu0 0.0
  %1935 = vmatpush1.msra.mxu0 0.0
  %1936 = vmatprep.subr.mxu0 0.0
  %1937 = vmatpush1.msra.mxu0 0.0
  %1938 = vmatprep.subr.mxu0 0.0
  %1939 = vmatpush1.msra.mxu0 0.0
  %1940 = vmatprep.subr.mxu0 0.0
  %1941 = vmatpush1.msra.mxu0 0.0
  %1942 = vmatprep.subr.mxu0 0.0
  %1943 = vmatpush1.msra.mxu0 0.0
  %1944 = vmatprep.subr.mxu0 0.0
  %1945 = vmatpush1.msra.mxu0 0.0
  %1946 = vmatprep.subr.mxu0 0.0
  %1947 = vmatpush1.msra.mxu0 0.0
  %1948 = vmatprep.subr.mxu0 0.0
  %1949 = vmatpush1.msra.mxu0 0.0
  %1950 = vmatprep.subr.mxu0 0.0
  %1951 = vmatpush1.msra.mxu0 0.0
  %1952 = vmatprep.subr.mxu0 0.0
  %1953 = vmatpush1.msra.mxu0 0.0
  %1954 = vmatprep.subr.mxu0 0.0
  %1955 = vmatpush1.msra.mxu0 0.0
  %1956 = vmatprep.mubr.f32.mxu0 0.0
  %v1957 = vand.u32 %v1284, 4294901760
  %1958 = vmatmul.mubr.f32.gmra.mrb[0].mxu0 %v1957
  %v1959 = vpop.f32.mrb[0].mxu0
  %v1960 = vadd.f32 %v1859, %v1959
  %v1961 = vpop.f32.mrb[0].mxu0
  %v1962 = vadd.f32 %v1861, %v1961
  %1963 = vmatprep.mubr.f32.mxu0 0.0
  %v1964 = vand.u32 %v1287, 4294901760
  %1965 = vmatmul.mubr.f32.gmra.mrb[0].mxu0 %v1964
  %v1966 = vpop.f32.mrb[0].mxu0
  %v1967 = vadd.f32 %v1866, %v1966
  %v1968 = vpop.f32.mrb[0].mxu0
  %v1969 = vadd.f32 %v1868, %v1968
  %1970 = vmatprep.mubr.f32.mxu0 0.0
  %v1971 = vand.u32 %v1290, 4294901760
  %1972 = vmatmul.mubr.f32.gmra.mrb[0].mxu0 %v1971
  %v1973 = vpop.f32.mrb[0].mxu0
  %v1974 = vadd.f32 %v1873, %v1973
  %v1975 = vpop.f32.mrb[0].mxu0
  %v1976 = vadd.f32 %v1875, %v1975
  %1977 = vmatprep.mubr.f32.mxu0 0.0
  %v1978 = vand.u32 %v1293, 4294901760
  %1979 = vmatmul.mubr.f32.gmra.mrb[0].mxu0 %v1978
  %v1980 = vpop.f32.mrb[0].mxu0
  %v1981 = vadd.f32 %v1880, %v1980
  %v1982 = vpop.f32.mrb[0].mxu0
  %v1983 = vadd.f32 %v1882, %v1982
  %1984 = vdwg.mxu0
  %1985 = vmatprep.subr.mxu0 0.0
  %v1986 = vand.u32 %v1268, 4294901760
  %1987 = vmatpush1.msra.mxu0 %v1986
  %1988 = vmatprep.subr.mxu0 0.0
  %v1989 = vand.u32 %v1271, 4294901760
  %1990 = vmatpush1.msra.mxu0 %v1989
  %1991 = vmatprep.subr.mxu0 0.0
  %v1992 = vand.u32 %v1274, 4294901760
  %1993 = vmatpush1.msra.mxu0 %v1992
  %1994 = vmatprep.subr.mxu0 0.0
  %v1995 = vand.u32 %v1277, 4294901760
  %1996 = vmatpush1.msra.mxu0 %v1995
  %1997 = vmatprep.subr.mxu0 0.0
  %1998 = vmatpush1.msra.mxu0 0.0
  %1999 = vmatprep.subr.mxu0 0.0
  %2000 = vmatpush1.msra.mxu0 0.0
  %2001 = vmatprep.subr.mxu0 0.0
  %2002 = vmatpush1.msra.mxu0 0.0
  %2003 = vmatprep.subr.mxu0 0.0
  %2004 = vmatpush1.msra.mxu0 0.0
  %2005 = vmatprep.subr.mxu0 0.0
  %2006 = vmatpush1.msra.mxu0 0.0
  %2007 = vmatprep.subr.mxu0 0.0
  %2008 = vmatpush1.msra.mxu0 0.0
  %2009 = vmatprep.subr.mxu0 0.0
  %2010 = vmatpush1.msra.mxu0 0.0
  %2011 = vmatprep.subr.mxu0 0.0
  %2012 = vmatpush1.msra.mxu0 0.0
  %2013 = vmatprep.subr.mxu0 0.0
  %2014 = vmatpush1.msra.mxu0 0.0
  %2015 = vmatprep.subr.mxu0 0.0
  %2016 = vmatpush1.msra.mxu0 0.0
  %2017 = vmatprep.subr.mxu0 0.0
  %2018 = vmatpush1.msra.mxu0 0.0
  %2019 = vmatprep.subr.mxu0 0.0
  %2020 = vmatpush1.msra.mxu0 0.0
  %2021 = vmatprep.subr.mxu0 0.0
  %2022 = vmatpush1.msra.mxu0 0.0
  %2023 = vmatprep.subr.mxu0 0.0
  %2024 = vmatpush1.msra.mxu0 0.0
  %2025 = vmatprep.subr.mxu0 0.0
  %2026 = vmatpush1.msra.mxu0 0.0
  %2027 = vmatprep.subr.mxu0 0.0
  %2028 = vmatpush1.msra.mxu0 0.0
  %2029 = vmatprep.subr.mxu0 0.0
  %2030 = vmatpush1.msra.mxu0 0.0
  %2031 = vmatprep.subr.mxu0 0.0
  %2032 = vmatpush1.msra.mxu0 0.0
  %2033 = vmatprep.subr.mxu0 0.0
  %2034 = vmatpush1.msra.mxu0 0.0
  %2035 = vmatprep.subr.mxu0 0.0
  %2036 = vmatpush1.msra.mxu0 0.0
  %2037 = vmatprep.subr.mxu0 0.0
  %2038 = vmatpush1.msra.mxu0 0.0
  %2039 = vmatprep.subr.mxu0 0.0
  %2040 = vmatpush1.msra.mxu0 0.0
  %2041 = vmatprep.subr.mxu0 0.0
  %2042 = vmatpush1.msra.mxu0 0.0
  %2043 = vmatprep.subr.mxu0 0.0
  %2044 = vmatpush1.msra.mxu0 0.0
  %2045 = vmatprep.subr.mxu0 0.0
  %2046 = vmatpush1.msra.mxu0 0.0
  %2047 = vmatprep.subr.mxu0 0.0
  %2048 = vmatpush1.msra.mxu0 0.0
  %2049 = vmatprep.subr.mxu0 0.0
  %2050 = vmatpush1.msra.mxu0 0.0
  %2051 = vmatprep.subr.mxu0 0.0
  %2052 = vmatpush1.msra.mxu0 0.0
  %2053 = vmatprep.mubr.f32.mxu0 0.0
  %v2054 = vand.u32 %v1284, 4294901760
  %v2055 = vsub.f32 %v1284, %v2054
  %v2056 = vand.u32 %v2055, 4294901760
  %v2057 = vsub.f32 %v2055, %v2056
  %v2058 = vand.u32 %v2057, 4294901760
  %2059 = vmatmul.mubr.f32.gmra.mrb[0].mxu0 %v2058
  %v2060 = vpop.f32.mrb[0].mxu0
  %v2061 = vadd.f32 0.0, %v2060
  %v2062 = vpop.f32.mrb[0].mxu0
  %2063 = vmatprep.mubr.f32.mxu0 0.0
  %v2064 = vand.u32 %v1287, 4294901760
  %v2065 = vsub.f32 %v1287, %v2064
  %v2066 = vand.u32 %v2065, 4294901760
  %v2067 = vsub.f32 %v2065, %v2066
  %v2068 = vand.u32 %v2067, 4294901760
  %2069 = vmatmul.mubr.f32.gmra.mrb[0].mxu0 %v2068
  %v2070 = vpop.f32.mrb[0].mxu0
  %v2071 = vadd.f32 0.0, %v2070
  %v2072 = vpop.f32.mrb[0].mxu0
  %2073 = vmatprep.mubr.f32.mxu0 0.0
  %v2074 = vand.u32 %v1290, 4294901760
  %v2075 = vsub.f32 %v1290, %v2074
  %v2076 = vand.u32 %v2075, 4294901760
  %v2077 = vsub.f32 %v2075, %v2076
  %v2078 = vand.u32 %v2077, 4294901760
  %2079 = vmatmul.mubr.f32.gmra.mrb[0].mxu0 %v2078
  %v2080 = vpop.f32.mrb[0].mxu0
  %v2081 = vadd.f32 0.0, %v2080
  %v2082 = vpop.f32.mrb[0].mxu0
  %2083 = vmatprep.mubr.f32.mxu0 0.0
  %v2084 = vand.u32 %v1293, 4294901760
  %v2085 = vsub.f32 %v1293, %v2084
  %v2086 = vand.u32 %v2085, 4294901760
  %v2087 = vsub.f32 %v2085, %v2086
  %v2088 = vand.u32 %v2087, 4294901760
  %2089 = vmatmul.mubr.f32.gmra.mrb[0].mxu0 %v2088
  %v2090 = vpop.f32.mrb[0].mxu0
  %v2091 = vadd.f32 0.0, %v2090
  %v2092 = vpop.f32.mrb[0].mxu0
  %2093 = vdwg.mxu0
  %2094 = vmatprep.subr.mxu0 0.0
  %v2095 = vand.u32 %v1268, 4294901760
  %v2096 = vsub.f32 %v1268, %v2095
  %v2097 = vand.u32 %v2096, 4294901760
  %v2098 = vsub.f32 %v2096, %v2097
  %v2099 = vand.u32 %v2098, 4294901760
  %2100 = vmatpush1.msra.mxu0 %v2099
  %2101 = vmatprep.subr.mxu0 0.0
  %v2102 = vand.u32 %v1271, 4294901760
  %v2103 = vsub.f32 %v1271, %v2102
  %v2104 = vand.u32 %v2103, 4294901760
  %v2105 = vsub.f32 %v2103, %v2104
  %v2106 = vand.u32 %v2105, 4294901760
  %2107 = vmatpush1.msra.mxu0 %v2106
  %2108 = vmatprep.subr.mxu0 0.0
  %v2109 = vand.u32 %v1274, 4294901760
  %v2110 = vsub.f32 %v1274, %v2109
  %v2111 = vand.u32 %v2110, 4294901760
  %v2112 = vsub.f32 %v2110, %v2111
  %v2113 = vand.u32 %v2112, 4294901760
  %2114 = vmatpush1.msra.mxu0 %v2113
  %2115 = vmatprep.subr.mxu0 0.0
  %v2116 = vand.u32 %v1277, 4294901760
  %v2117 = vsub.f32 %v1277, %v2116
  %v2118 = vand.u32 %v2117, 4294901760
  %v2119 = vsub.f32 %v2117, %v2118
  %v2120 = vand.u32 %v2119, 4294901760
  %2121 = vmatpush1.msra.mxu0 %v2120
  %2122 = vmatprep.subr.mxu0 0.0
  %2123 = vmatpush1.msra.mxu0 0.0
  %2124 = vmatprep.subr.mxu0 0.0
  %2125 = vmatpush1.msra.mxu0 0.0
  %2126 = vmatprep.subr.mxu0 0.0
  %2127 = vmatpush1.msra.mxu0 0.0
  %2128 = vmatprep.subr.mxu0 0.0
  %2129 = vmatpush1.msra.mxu0 0.0
  %2130 = vmatprep.subr.mxu0 0.0
  %2131 = vmatpush1.msra.mxu0 0.0
  %2132 = vmatprep.subr.mxu0 0.0
  %2133 = vmatpush1.msra.mxu0 0.0
  %2134 = vmatprep.subr.mxu0 0.0
  %2135 = vmatpush1.msra.mxu0 0.0
  %2136 = vmatprep.subr.mxu0 0.0
  %2137 = vmatpush1.msra.mxu0 0.0
  %2138 = vmatprep.subr.mxu0 0.0
  %2139 = vmatpush1.msra.mxu0 0.0
  %2140 = vmatprep.subr.mxu0 0.0
  %2141 = vmatpush1.msra.mxu0 0.0
  %2142 = vmatprep.subr.mxu0 0.0
  %2143 = vmatpush1.msra.mxu0 0.0
  %2144 = vmatprep.subr.mxu0 0.0
  %2145 = vmatpush1.msra.mxu0 0.0
  %2146 = vmatprep.subr.mxu0 0.0
  %2147 = vmatpush1.msra.mxu0 0.0
  %2148 = vmatprep.subr.mxu0 0.0
  %2149 = vmatpush1.msra.mxu0 0.0
  %2150 = vmatprep.subr.mxu0 0.0
  %2151 = vmatpush1.msra.mxu0 0.0
  %2152 = vmatprep.subr.mxu0 0.0
  %2153 = vmatpush1.msra.mxu0 0.0
  %2154 = vmatprep.subr.mxu0 0.0
  %2155 = vmatpush1.msra.mxu0 0.0
  %2156 = vmatprep.subr.mxu0 0.0
  %2157 = vmatpush1.msra.mxu0 0.0
  %2158 = vmatprep.subr.mxu0 0.0
  %2159 = vmatpush1.msra.mxu0 0.0
  %2160 = vmatprep.subr.mxu0 0.0
  %2161 = vmatpush1.msra.mxu0 0.0
  %2162 = vmatprep.subr.mxu0 0.0
  %2163 = vmatpush1.msra.mxu0 0.0
  %2164 = vmatprep.subr.mxu0 0.0
  %2165 = vmatpush1.msra.mxu0 0.0
  %2166 = vmatprep.subr.mxu0 0.0
  %2167 = vmatpush1.msra.mxu0 0.0
  %2168 = vmatprep.subr.mxu0 0.0
  %2169 = vmatpush1.msra.mxu0 0.0
  %2170 = vmatprep.subr.mxu0 0.0
  %2171 = vmatpush1.msra.mxu0 0.0
  %2172 = vmatprep.subr.mxu0 0.0
  %2173 = vmatpush1.msra.mxu0 0.0
  %2174 = vmatprep.subr.mxu0 0.0
  %2175 = vmatpush1.msra.mxu0 0.0
  %2176 = vmatprep.subr.mxu0 0.0
  %2177 = vmatpush1.msra.mxu0 0.0
  %2178 = vmatprep.mubr.f32.mxu0 0.0
  %v2179 = vand.u32 %v1284, 4294901760
  %2180 = vmatmul.mubr.f32.gmra.mrb[0].mxu0 %v2179
  %v2181 = vpop.f32.mrb[0].mxu0
  %v2182 = vadd.f32 %v2061, %v2181
  %v2183 = vpop.f32.mrb[0].mxu0
  %2184 = vmatprep.mubr.f32.mxu0 0.0
  %v2185 = vand.u32 %v1287, 4294901760
  %2186 = vmatmul.mubr.f32.gmra.mrb[0].mxu0 %v2185
  %v2187 = vpop.f32.mrb[0].mxu0
  %v2188 = vadd.f32 %v2071, %v2187
  %v2189 = vpop.f32.mrb[0].mxu0
  %2190 = vmatprep.mubr.f32.mxu0 0.0
  %v2191 = vand.u32 %v1290, 4294901760
  %2192 = vmatmul.mubr.f32.gmra.mrb[0].mxu0 %v2191
  %v2193 = vpop.f32.mrb[0].mxu0
  %v2194 = vadd.f32 %v2081, %v2193
  %v2195 = vpop.f32.mrb[0].mxu0
  %2196 = vmatprep.mubr.f32.mxu0 0.0
  %v2197 = vand.u32 %v1293, 4294901760
  %2198 = vmatmul.mubr.f32.gmra.mrb[0].mxu0 %v2197
  %v2199 = vpop.f32.mrb[0].mxu0
  %v2200 = vadd.f32 %v2091, %v2199
  %v2201 = vpop.f32.mrb[0].mxu0
  %2202 = vdwg.mxu0
  %2203 = vmatprep.subr.mxu0 0.0
  %v2204 = vand.u32 %v1268, 4294901760
  %v2205 = vsub.f32 %v1268, %v2204
  %2206 = vmatpush1.msra.mxu0 %v2205
  %2207 = vmatprep.subr.mxu0 0.0
  %v2208 = vand.u32 %v1271, 4294901760
  %v2209 = vsub.f32 %v1271, %v2208
  %2210 = vmatpush1.msra.mxu0 %v2209
  %2211 = vmatprep.subr.mxu0 0.0
  %v2212 = vand.u32 %v1274, 4294901760
  %v2213 = vsub.f32 %v1274, %v2212
  %2214 = vmatpush1.msra.mxu0 %v2213
  %2215 = vmatprep.subr.mxu0 0.0
  %v2216 = vand.u32 %v1277, 4294901760
  %v2217 = vsub.f32 %v1277, %v2216
  %2218 = vmatpush1.msra.mxu0 %v2217
  %2219 = vmatprep.subr.mxu0 0.0
  %2220 = vmatpush1.msra.mxu0 0.0
  %2221 = vmatprep.subr.mxu0 0.0
  %2222 = vmatpush1.msra.mxu0 0.0
  %2223 = vmatprep.subr.mxu0 0.0
  %2224 = vmatpush1.msra.mxu0 0.0
  %2225 = vmatprep.subr.mxu0 0.0
  %2226 = vmatpush1.msra.mxu0 0.0
  %2227 = vmatprep.subr.mxu0 0.0
  %2228 = vmatpush1.msra.mxu0 0.0
  %2229 = vmatprep.subr.mxu0 0.0
  %2230 = vmatpush1.msra.mxu0 0.0
  %2231 = vmatprep.subr.mxu0 0.0
  %2232 = vmatpush1.msra.mxu0 0.0
  %2233 = vmatprep.subr.mxu0 0.0
  %2234 = vmatpush1.msra.mxu0 0.0
  %2235 = vmatprep.subr.mxu0 0.0
  %2236 = vmatpush1.msra.mxu0 0.0
  %2237 = vmatprep.subr.mxu0 0.0
  %2238 = vmatpush1.msra.mxu0 0.0
  %2239 = vmatprep.subr.mxu0 0.0
  %2240 = vmatpush1.msra.mxu0 0.0
  %2241 = vmatprep.subr.mxu0 0.0
  %2242 = vmatpush1.msra.mxu0 0.0
  %2243 = vmatprep.subr.mxu0 0.0
  %2244 = vmatpush1.msra.mxu0 0.0
  %2245 = vmatprep.subr.mxu0 0.0
  %2246 = vmatpush1.msra.mxu0 0.0
  %2247 = vmatprep.subr.mxu0 0.0
  %2248 = vmatpush1.msra.mxu0 0.0
  %2249 = vmatprep.subr.mxu0 0.0
  %2250 = vmatpush1.msra.mxu0 0.0
  %2251 = vmatprep.subr.mxu0 0.0
  %2252 = vmatpush1.msra.mxu0 0.0
  %2253 = vmatprep.subr.mxu0 0.0
  %2254 = vmatpush1.msra.mxu0 0.0
  %2255 = vmatprep.subr.mxu0 0.0
  %2256 = vmatpush1.msra.mxu0 0.0
  %2257 = vmatprep.subr.mxu0 0.0
  %2258 = vmatpush1.msra.mxu0 0.0
  %2259 = vmatprep.subr.mxu0 0.0
  %2260 = vmatpush1.msra.mxu0 0.0
  %2261 = vmatprep.subr.mxu0 0.0
  %2262 = vmatpush1.msra.mxu0 0.0
  %2263 = vmatprep.subr.mxu0 0.0
  %2264 = vmatpush1.msra.mxu0 0.0
  %2265 = vmatprep.subr.mxu0 0.0
  %2266 = vmatpush1.msra.mxu0 0.0
  %2267 = vmatprep.subr.mxu0 0.0
  %2268 = vmatpush1.msra.mxu0 0.0
  %2269 = vmatprep.subr.mxu0 0.0
  %2270 = vmatpush1.msra.mxu0 0.0
  %2271 = vmatprep.subr.mxu0 0.0
  %2272 = vmatpush1.msra.mxu0 0.0
  %2273 = vmatprep.subr.mxu0 0.0
  %2274 = vmatpush1.msra.mxu0 0.0
  %2275 = vmatprep.mubr.f32.mxu0 0.0
  %v2276 = vand.u32 %v1284, 4294901760
  %v2277 = vsub.f32 %v1284, %v2276
  %2278 = vmatmul.mubr.f32.gmra.mrb[0].mxu0 %v2277
  %v2279 = vpop.f32.mrb[0].mxu0
  %v2280 = vadd.f32 %v2182, %v2279
  %v2281 = vpop.f32.mrb[0].mxu0
  %2282 = vmatprep.mubr.f32.mxu0 0.0
  %v2283 = vand.u32 %v1287, 4294901760
  %v2284 = vsub.f32 %v1287, %v2283
  %2285 = vmatmul.mubr.f32.gmra.mrb[0].mxu0 %v2284
  %v2286 = vpop.f32.mrb[0].mxu0
  %v2287 = vadd.f32 %v2188, %v2286
  %v2288 = vpop.f32.mrb[0].mxu0
  %2289 = vmatprep.mubr.f32.mxu0 0.0
  %v2290 = vand.u32 %v1290, 4294901760
  %v2291 = vsub.f32 %v1290, %v2290
  %2292 = vmatmul.mubr.f32.gmra.mrb[0].mxu0 %v2291
  %v2293 = vpop.f32.mrb[0].mxu0
  %v2294 = vadd.f32 %v2194, %v2293
  %v2295 = vpop.f32.mrb[0].mxu0
  %2296 = vmatprep.mubr.f32.mxu0 0.0
  %v2297 = vand.u32 %v1293, 4294901760
  %v2298 = vsub.f32 %v1293, %v2297
  %2299 = vmatmul.mubr.f32.gmra.mrb[0].mxu0 %v2298
  %v2300 = vpop.f32.mrb[0].mxu0
  %v2301 = vadd.f32 %v2200, %v2300
  %v2302 = vpop.f32.mrb[0].mxu0
  %2303 = vdwg.mxu0
  %2304 = vmatprep.subr.mxu0 0.0
  %v2305 = vand.u32 %v1268, 4294901760
  %2306 = vmatpush1.msra.mxu0 %v2305
  %2307 = vmatprep.subr.mxu0 0.0
  %v2308 = vand.u32 %v1271, 4294901760
  %2309 = vmatpush1.msra.mxu0 %v2308
  %2310 = vmatprep.subr.mxu0 0.0
  %v2311 = vand.u32 %v1274, 4294901760
  %2312 = vmatpush1.msra.mxu0 %v2311
  %2313 = vmatprep.subr.mxu0 0.0
  %v2314 = vand.u32 %v1277, 4294901760
  %2315 = vmatpush1.msra.mxu0 %v2314
  %2316 = vmatprep.subr.mxu0 0.0
  %2317 = vmatpush1.msra.mxu0 0.0
  %2318 = vmatprep.subr.mxu0 0.0
  %2319 = vmatpush1.msra.mxu0 0.0
  %2320 = vmatprep.subr.mxu0 0.0
  %2321 = vmatpush1.msra.mxu0 0.0
  %2322 = vmatprep.subr.mxu0 0.0
  %2323 = vmatpush1.msra.mxu0 0.0
  %2324 = vmatprep.subr.mxu0 0.0
  %2325 = vmatpush1.msra.mxu0 0.0
  %2326 = vmatprep.subr.mxu0 0.0
  %2327 = vmatpush1.msra.mxu0 0.0
  %2328 = vmatprep.subr.mxu0 0.0
  %2329 = vmatpush1.msra.mxu0 0.0
  %2330 = vmatprep.subr.mxu0 0.0
  %2331 = vmatpush1.msra.mxu0 0.0
  %2332 = vmatprep.subr.mxu0 0.0
  %2333 = vmatpush1.msra.mxu0 0.0
  %2334 = vmatprep.subr.mxu0 0.0
  %2335 = vmatpush1.msra.mxu0 0.0
  %2336 = vmatprep.subr.mxu0 0.0
  %2337 = vmatpush1.msra.mxu0 0.0
  %2338 = vmatprep.subr.mxu0 0.0
  %2339 = vmatpush1.msra.mxu0 0.0
  %2340 = vmatprep.subr.mxu0 0.0
  %2341 = vmatpush1.msra.mxu0 0.0
  %2342 = vmatprep.subr.mxu0 0.0
  %2343 = vmatpush1.msra.mxu0 0.0
  %2344 = vmatprep.subr.mxu0 0.0
  %2345 = vmatpush1.msra.mxu0 0.0
  %2346 = vmatprep.subr.mxu0 0.0
  %2347 = vmatpush1.msra.mxu0 0.0
  %2348 = vmatprep.subr.mxu0 0.0
  %2349 = vmatpush1.msra.mxu0 0.0
  %2350 = vmatprep.subr.mxu0 0.0
  %2351 = vmatpush1.msra.mxu0 0.0
  %2352 = vmatprep.subr.mxu0 0.0
  %2353 = vmatpush1.msra.mxu0 0.0
  %2354 = vmatprep.subr.mxu0 0.0
  %2355 = vmatpush1.msra.mxu0 0.0
  %2356 = vmatprep.subr.mxu0 0.0
  %2357 = vmatpush1.msra.mxu0 0.0
  %2358 = vmatprep.subr.mxu0 0.0
  %2359 = vmatpush1.msra.mxu0 0.0
  %2360 = vmatprep.subr.mxu0 0.0
  %2361 = vmatpush1.msra.mxu0 0.0
  %2362 = vmatprep.subr.mxu0 0.0
  %2363 = vmatpush1.msra.mxu0 0.0
  %2364 = vmatprep.subr.mxu0 0.0
  %2365 = vmatpush1.msra.mxu0 0.0
  %2366 = vmatprep.subr.mxu0 0.0
  %2367 = vmatpush1.msra.mxu0 0.0
  %2368 = vmatprep.subr.mxu0 0.0
  %2369 = vmatpush1.msra.mxu0 0.0
  %2370 = vmatprep.subr.mxu0 0.0
  %2371 = vmatpush1.msra.mxu0 0.0
  %2372 = vmatprep.mubr.f32.mxu0 0.0
  %v2373 = vand.u32 %v1284, 4294901760
  %v2374 = vsub.f32 %v1284, %v2373
  %v2375 = vand.u32 %v2374, 4294901760
  %2376 = vmatmul.mubr.f32.gmra.mrb[0].mxu0 %v2375
  %v2377 = vpop.f32.mrb[0].mxu0
  %v2378 = vadd.f32 %v2280, %v2377
  %v2379 = vpop.f32.mrb[0].mxu0
  %2380 = vmatprep.mubr.f32.mxu0 0.0
  %v2381 = vand.u32 %v1287, 4294901760
  %v2382 = vsub.f32 %v1287, %v2381
  %v2383 = vand.u32 %v2382, 4294901760
  %2384 = vmatmul.mubr.f32.gmra.mrb[0].mxu0 %v2383
  %v2385 = vpop.f32.mrb[0].mxu0
  %v2386 = vadd.f32 %v2287, %v2385
  %v2387 = vpop.f32.mrb[0].mxu0
  %2388 = vmatprep.mubr.f32.mxu0 0.0
  %v2389 = vand.u32 %v1290, 4294901760
  %v2390 = vsub.f32 %v1290, %v2389
  %v2391 = vand.u32 %v2390, 4294901760
  %2392 = vmatmul.mubr.f32.gmra.mrb[0].mxu0 %v2391
  %v2393 = vpop.f32.mrb[0].mxu0
  %v2394 = vadd.f32 %v2294, %v2393
  %v2395 = vpop.f32.mrb[0].mxu0
  %2396 = vmatprep.mubr.f32.mxu0 0.0
  %v2397 = vand.u32 %v1293, 4294901760
  %v2398 = vsub.f32 %v1293, %v2397
  %v2399 = vand.u32 %v2398, 4294901760
  %2400 = vmatmul.mubr.f32.gmra.mrb[0].mxu0 %v2399
  %v2401 = vpop.f32.mrb[0].mxu0
  %v2402 = vadd.f32 %v2301, %v2401
  %v2403 = vpop.f32.mrb[0].mxu0
  %2404 = vdwg.mxu0
  %2405 = vmatprep.subr.mxu0 0.0
  %v2406 = vand.u32 %v1268, 4294901760
  %v2407 = vsub.f32 %v1268, %v2406
  %v2408 = vand.u32 %v2407, 4294901760
  %2409 = vmatpush1.msra.mxu0 %v2408
  %2410 = vmatprep.subr.mxu0 0.0
  %v2411 = vand.u32 %v1271, 4294901760
  %v2412 = vsub.f32 %v1271, %v2411
  %v2413 = vand.u32 %v2412, 4294901760
  %2414 = vmatpush1.msra.mxu0 %v2413
  %2415 = vmatprep.subr.mxu0 0.0
  %v2416 = vand.u32 %v1274, 4294901760
  %v2417 = vsub.f32 %v1274, %v2416
  %v2418 = vand.u32 %v2417, 4294901760
  %2419 = vmatpush1.msra.mxu0 %v2418
  %2420 = vmatprep.subr.mxu0 0.0
  %v2421 = vand.u32 %v1277, 4294901760
  %v2422 = vsub.f32 %v1277, %v2421
  %v2423 = vand.u32 %v2422, 4294901760
  %2424 = vmatpush1.msra.mxu0 %v2423
  %2425 = vmatprep.subr.mxu0 0.0
  %2426 = vmatpush1.msra.mxu0 0.0
  %2427 = vmatprep.subr.mxu0 0.0
  %2428 = vmatpush1.msra.mxu0 0.0
  %2429 = vmatprep.subr.mxu0 0.0
  %2430 = vmatpush1.msra.mxu0 0.0
  %2431 = vmatprep.subr.mxu0 0.0
  %2432 = vmatpush1.msra.mxu0 0.0
  %2433 = vmatprep.subr.mxu0 0.0
  %2434 = vmatpush1.msra.mxu0 0.0
  %2435 = vmatprep.subr.mxu0 0.0
  %2436 = vmatpush1.msra.mxu0 0.0
  %2437 = vmatprep.subr.mxu0 0.0
  %2438 = vmatpush1.msra.mxu0 0.0
  %2439 = vmatprep.subr.mxu0 0.0
  %2440 = vmatpush1.msra.mxu0 0.0
  %2441 = vmatprep.subr.mxu0 0.0
  %2442 = vmatpush1.msra.mxu0 0.0
  %2443 = vmatprep.subr.mxu0 0.0
  %2444 = vmatpush1.msra.mxu0 0.0
  %2445 = vmatprep.subr.mxu0 0.0
  %2446 = vmatpush1.msra.mxu0 0.0
  %2447 = vmatprep.subr.mxu0 0.0
  %2448 = vmatpush1.msra.mxu0 0.0
  %2449 = vmatprep.subr.mxu0 0.0
  %2450 = vmatpush1.msra.mxu0 0.0
  %2451 = vmatprep.subr.mxu0 0.0
  %2452 = vmatpush1.msra.mxu0 0.0
  %2453 = vmatprep.subr.mxu0 0.0
  %2454 = vmatpush1.msra.mxu0 0.0
  %2455 = vmatprep.subr.mxu0 0.0
  %2456 = vmatpush1.msra.mxu0 0.0
  %2457 = vmatprep.subr.mxu0 0.0
  %2458 = vmatpush1.msra.mxu0 0.0
  %2459 = vmatprep.subr.mxu0 0.0
  %2460 = vmatpush1.msra.mxu0 0.0
  %2461 = vmatprep.subr.mxu0 0.0
  %2462 = vmatpush1.msra.mxu0 0.0
  %2463 = vmatprep.subr.mxu0 0.0
  %2464 = vmatpush1.msra.mxu0 0.0
  %2465 = vmatprep.subr.mxu0 0.0
  %2466 = vmatpush1.msra.mxu0 0.0
  %2467 = vmatprep.subr.mxu0 0.0
  %2468 = vmatpush1.msra.mxu0 0.0
  %2469 = vmatprep.subr.mxu0 0.0
  %2470 = vmatpush1.msra.mxu0 0.0
  %2471 = vmatprep.subr.mxu0 0.0
  %2472 = vmatpush1.msra.mxu0 0.0
  %2473 = vmatprep.subr.mxu0 0.0
  %2474 = vmatpush1.msra.mxu0 0.0
  %2475 = vmatprep.subr.mxu0 0.0
  %2476 = vmatpush1.msra.mxu0 0.0
  %2477 = vmatprep.subr.mxu0 0.0
  %2478 = vmatpush1.msra.mxu0 0.0
  %2479 = vmatprep.subr.mxu0 0.0
  %2480 = vmatpush1.msra.mxu0 0.0
  %2481 = vmatprep.mubr.f32.mxu0 0.0
  %v2482 = vand.u32 %v1284, 4294901760
  %2483 = vmatmul.mubr.f32.gmra.mrb[0].mxu0 %v2482
  %v2484 = vpop.f32.mrb[0].mxu0
  %v2485 = vadd.f32 %v2378, %v2484
  %v2486 = vpop.f32.mrb[0].mxu0
  %2487 = vmatprep.mubr.f32.mxu0 0.0
  %v2488 = vand.u32 %v1287, 4294901760
  %2489 = vmatmul.mubr.f32.gmra.mrb[0].mxu0 %v2488
  %v2490 = vpop.f32.mrb[0].mxu0
  %v2491 = vadd.f32 %v2386, %v2490
  %v2492 = vpop.f32.mrb[0].mxu0
  %2493 = vmatprep.mubr.f32.mxu0 0.0
  %v2494 = vand.u32 %v1290, 4294901760
  %2495 = vmatmul.mubr.f32.gmra.mrb[0].mxu0 %v2494
  %v2496 = vpop.f32.mrb[0].mxu0
  %v2497 = vadd.f32 %v2394, %v2496
  %v2498 = vpop.f32.mrb[0].mxu0
  %2499 = vmatprep.mubr.f32.mxu0 0.0
  %v2500 = vand.u32 %v1293, 4294901760
  %2501 = vmatmul.mubr.f32.gmra.mrb[0].mxu0 %v2500
  %v2502 = vpop.f32.mrb[0].mxu0
  %v2503 = vadd.f32 %v2402, %v2502
  %v2504 = vpop.f32.mrb[0].mxu0
  %2505 = vdwg.mxu0
  %2506 = vmatprep.subr.mxu0 0.0
  %v2507 = vand.u32 %v1268, 4294901760
  %2508 = vmatpush1.msra.mxu0 %v2507
  %2509 = vmatprep.subr.mxu0 0.0
  %v2510 = vand.u32 %v1271, 4294901760
  %2511 = vmatpush1.msra.mxu0 %v2510
  %2512 = vmatprep.subr.mxu0 0.0
  %v2513 = vand.u32 %v1274, 4294901760
  %2514 = vmatpush1.msra.mxu0 %v2513
  %2515 = vmatprep.subr.mxu0 0.0
  %v2516 = vand.u32 %v1277, 4294901760
  %2517 = vmatpush1.msra.mxu0 %v2516
  %2518 = vmatprep.subr.mxu0 0.0
  %2519 = vmatpush1.msra.mxu0 0.0
  %2520 = vmatprep.subr.mxu0 0.0
  %2521 = vmatpush1.msra.mxu0 0.0
  %2522 = vmatprep.subr.mxu0 0.0
  %2523 = vmatpush1.msra.mxu0 0.0
  %2524 = vmatprep.subr.mxu0 0.0
  %2525 = vmatpush1.msra.mxu0 0.0
  %2526 = vmatprep.subr.mxu0 0.0
  %2527 = vmatpush1.msra.mxu0 0.0
  %2528 = vmatprep.subr.mxu0 0.0
  %2529 = vmatpush1.msra.mxu0 0.0
  %2530 = vmatprep.subr.mxu0 0.0
  %2531 = vmatpush1.msra.mxu0 0.0
  %2532 = vmatprep.subr.mxu0 0.0
  %2533 = vmatpush1.msra.mxu0 0.0
  %2534 = vmatprep.subr.mxu0 0.0
  %2535 = vmatpush1.msra.mxu0 0.0
  %2536 = vmatprep.subr.mxu0 0.0
  %2537 = vmatpush1.msra.mxu0 0.0
  %2538 = vmatprep.subr.mxu0 0.0
  %2539 = vmatpush1.msra.mxu0 0.0
  %2540 = vmatprep.subr.mxu0 0.0
  %2541 = vmatpush1.msra.mxu0 0.0
  %2542 = vmatprep.subr.mxu0 0.0
  %2543 = vmatpush1.msra.mxu0 0.0
  %2544 = vmatprep.subr.mxu0 0.0
  %2545 = vmatpush1.msra.mxu0 0.0
  %2546 = vmatprep.subr.mxu0 0.0
  %2547 = vmatpush1.msra.mxu0 0.0
  %2548 = vmatprep.subr.mxu0 0.0
  %2549 = vmatpush1.msra.mxu0 0.0
  %2550 = vmatprep.subr.mxu0 0.0
  %2551 = vmatpush1.msra.mxu0 0.0
  %2552 = vmatprep.subr.mxu0 0.0
  %2553 = vmatpush1.msra.mxu0 0.0
  %2554 = vmatprep.subr.mxu0 0.0
  %2555 = vmatpush1.msra.mxu0 0.0
  %2556 = vmatprep.subr.mxu0 0.0
  %2557 = vmatpush1.msra.mxu0 0.0
  %2558 = vmatprep.subr.mxu0 0.0
  %2559 = vmatpush1.msra.mxu0 0.0
  %2560 = vmatprep.subr.mxu0 0.0
  %2561 = vmatpush1.msra.mxu0 0.0
  %2562 = vmatprep.subr.mxu0 0.0
  %2563 = vmatpush1.msra.mxu0 0.0
  %2564 = vmatprep.subr.mxu0 0.0
  %2565 = vmatpush1.msra.mxu0 0.0
  %2566 = vmatprep.subr.mxu0 0.0
  %2567 = vmatpush1.msra.mxu0 0.0
  %2568 = vmatprep.subr.mxu0 0.0
  %2569 = vmatpush1.msra.mxu0 0.0
  %2570 = vmatprep.subr.mxu0 0.0
  %2571 = vmatpush1.msra.mxu0 0.0
  %2572 = vmatprep.subr.mxu0 0.0
  %2573 = vmatpush1.msra.mxu0 0.0
  %2574 = vmatprep.mubr.f32.mxu0 0.0
  %v2575 = vand.u32 %v1284, 4294901760
  %2576 = vmatmul.mubr.f32.gmra.mrb[0].mxu0 %v2575
  %v2577 = vpop.f32.mrb[0].mxu0
  %v2578 = vadd.f32 %v2485, %v2577
  %v2579 = vpop.f32.mrb[0].mxu0
  %2580 = vmatprep.mubr.f32.mxu0 0.0
  %v2581 = vand.u32 %v1287, 4294901760
  %2582 = vmatmul.mubr.f32.gmra.mrb[0].mxu0 %v2581
  %v2583 = vpop.f32.mrb[0].mxu0
  %v2584 = vadd.f32 %v2491, %v2583
  %v2585 = vpop.f32.mrb[0].mxu0
  %2586 = vmatprep.mubr.f32.mxu0 0.0
  %v2587 = vand.u32 %v1290, 4294901760
  %2588 = vmatmul.mubr.f32.gmra.mrb[0].mxu0 %v2587
  %v2589 = vpop.f32.mrb[0].mxu0
  %v2590 = vadd.f32 %v2497, %v2589
  %v2591 = vpop.f32.mrb[0].mxu0
  %2592 = vmatprep.mubr.f32.mxu0 0.0
  %v2593 = vand.u32 %v1293, 4294901760
  %2594 = vmatmul.mubr.f32.gmra.mrb[0].mxu0 %v2593
  %v2595 = vpop.f32.mrb[0].mxu0
  %v2596 = vadd.f32 %v2503, %v2595
  %v2597 = vpop.f32.mrb[0].mxu0
  %2598 = vdwg.mxu0
  %v2599 = vmax.f32 %v1960, 0.0
  %v2600 = vmax.f32 %v1962, 0.0
  %v2601 = vmax.f32 %v2578, 0.0
  %v2602 = vmax.f32 %v1967, 0.0
  %v2603 = vmax.f32 %v1969, 0.0
  %v2604 = vmax.f32 %v2584, 0.0
  %v2605 = vmax.f32 %v1974, 0.0
  %v2606 = vmax.f32 %v1976, 0.0
  %v2607 = vmax.f32 %v2590, 0.0
  %v2608 = vmax.f32 %v1981, 0.0
  %v2609 = vmax.f32 %v1983, 0.0
  %v2610 = vmax.f32 %v2596, 0.0
  %v2611 = vld [vmem:[%s3] sm:$0xff]
  %v2613 = vsel %vm1282, %v2611, 0
  %v2615 = vand.u32 %v2600, 4294901760
  %2616 = vmatprep.subr.mxu0 %v2615
  %v2617 = vand.u32 %v2599, 4294901760
  %2618 = vmatpush1.msra.mxu0 %v2617
  %v2619 = vand.u32 %v2603, 4294901760
  %2620 = vmatprep.subr.mxu0 %v2619
  %v2621 = vand.u32 %v2602, 4294901760
  %2622 = vmatpush1.msra.mxu0 %v2621
  %v2623 = vand.u32 %v2606, 4294901760
  %2624 = vmatprep.subr.mxu0 %v2623
  %v2625 = vand.u32 %v2605, 4294901760
  %2626 = vmatpush1.msra.mxu0 %v2625
  %v2627 = vand.u32 %v2609, 4294901760
  %2628 = vmatprep.subr.mxu0 %v2627
  %v2629 = vand.u32 %v2608, 4294901760
  %2630 = vmatpush1.msra.mxu0 %v2629
  %2631 = vmatprep.subr.mxu0 0.0
  %2632 = vmatpush1.msra.mxu0 0.0
  %2633 = vmatprep.subr.mxu0 0.0
  %2634 = vmatpush1.msra.mxu0 0.0
  %2635 = vmatprep.subr.mxu0 0.0
  %2636 = vmatpush1.msra.mxu0 0.0
  %2637 = vmatprep.subr.mxu0 0.0
  %2638 = vmatpush1.msra.mxu0 0.0
  %2639 = vmatprep.subr.mxu0 0.0
  %2640 = vmatpush1.msra.mxu0 0.0
  %2641 = vmatprep.subr.mxu0 0.0
  %2642 = vmatpush1.msra.mxu0 0.0
  %2643 = vmatprep.subr.mxu0 0.0
  %2644 = vmatpush1.msra.mxu0 0.0
  %2645 = vmatprep.subr.mxu0 0.0
  %2646 = vmatpush1.msra.mxu0 0.0
  %2647 = vmatprep.subr.mxu0 0.0
  %2648 = vmatpush1.msra.mxu0 0.0
  %2649 = vmatprep.subr.mxu0 0.0
  %2650 = vmatpush1.msra.mxu0 0.0
  %2651 = vmatprep.subr.mxu0 0.0
  %2652 = vmatpush1.msra.mxu0 0.0
  %2653 = vmatprep.subr.mxu0 0.0
  %2654 = vmatpush1.msra.mxu0 0.0
  %2655 = vmatprep.subr.mxu0 0.0
  %2656 = vmatpush1.msra.mxu0 0.0
  %2657 = vmatprep.subr.mxu0 0.0
  %2658 = vmatpush1.msra.mxu0 0.0
  %2659 = vmatprep.subr.mxu0 0.0
  %2660 = vmatpush1.msra.mxu0 0.0
  %2661 = vmatprep.subr.mxu0 0.0
  %2662 = vmatpush1.msra.mxu0 0.0
  %2663 = vmatprep.subr.mxu0 0.0
  %2664 = vmatpush1.msra.mxu0 0.0
  %2665 = vmatprep.subr.mxu0 0.0
  %2666 = vmatpush1.msra.mxu0 0.0
  %2667 = vmatprep.subr.mxu0 0.0
  %2668 = vmatpush1.msra.mxu0 0.0
  %2669 = vmatprep.subr.mxu0 0.0
  %2670 = vmatpush1.msra.mxu0 0.0
  %2671 = vmatprep.subr.mxu0 0.0
  %2672 = vmatpush1.msra.mxu0 0.0
  %2673 = vmatprep.subr.mxu0 0.0
  %2674 = vmatpush1.msra.mxu0 0.0
  %2675 = vmatprep.subr.mxu0 0.0
  %2676 = vmatpush1.msra.mxu0 0.0
  %2677 = vmatprep.subr.mxu0 0.0
  %2678 = vmatpush1.msra.mxu0 0.0
  %2679 = vmatprep.subr.mxu0 0.0
  %2680 = vmatpush1.msra.mxu0 0.0
  %2681 = vmatprep.subr.mxu0 0.0
  %2682 = vmatpush1.msra.mxu0 0.0
  %2683 = vmatprep.subr.mxu0 0.0
  %2684 = vmatpush1.msra.mxu0 0.0
  %2685 = vmatprep.subr.mxu0 0.0
  %2686 = vmatpush1.msra.mxu0 0.0
  %2687 = vmatprep.mubr.f32.mxu0 0.0
  %v2688 = vand.u32 %v2613, 4294901760
  %v2689 = vsub.f32 %v2613, %v2688
  %v2690 = vand.u32 %v2689, 4294901760
  %v2691 = vsub.f32 %v2689, %v2690
  %v2692 = vand.u32 %v2691, 4294901760
  %2693 = vmatmul.mubr.f32.gmra.mrb[0].mxu0 %v2692
  %v2694 = vpop.f32.mrb[0].mxu0
  %v2695 = vadd.f32 0.0, %v2694
  %v2696 = vpop.f32.mrb[0].mxu0
  %v2697 = vadd.f32 0.0, %v2696
  %2698 = vdwg.mxu0
  %v2699 = vand.u32 %v2600, 4294901760
  %v2700 = vsub.f32 %v2600, %v2699
  %v2701 = vand.u32 %v2700, 4294901760
  %v2702 = vsub.f32 %v2700, %v2701
  %v2703 = vand.u32 %v2702, 4294901760
  %2704 = vmatprep.subr.mxu0 %v2703
  %v2705 = vand.u32 %v2599, 4294901760
  %v2706 = vsub.f32 %v2599, %v2705
  %v2707 = vand.u32 %v2706, 4294901760
  %v2708 = vsub.f32 %v2706, %v2707
  %v2709 = vand.u32 %v2708, 4294901760
  %2710 = vmatpush1.msra.mxu0 %v2709
  %v2711 = vand.u32 %v2603, 4294901760
  %v2712 = vsub.f32 %v2603, %v2711
  %v2713 = vand.u32 %v2712, 4294901760
  %v2714 = vsub.f32 %v2712, %v2713
  %v2715 = vand.u32 %v2714, 4294901760
  %2716 = vmatprep.subr.mxu0 %v2715
  %v2717 = vand.u32 %v2602, 4294901760
  %v2718 = vsub.f32 %v2602, %v2717
  %v2719 = vand.u32 %v2718, 4294901760
  %v2720 = vsub.f32 %v2718, %v2719
  %v2721 = vand.u32 %v2720, 4294901760
  %2722 = vmatpush1.msra.mxu0 %v2721
  %v2723 = vand.u32 %v2606, 4294901760
  %v2724 = vsub.f32 %v2606, %v2723
  %v2725 = vand.u32 %v2724, 4294901760
  %v2726 = vsub.f32 %v2724, %v2725
  %v2727 = vand.u32 %v2726, 4294901760
  %2728 = vmatprep.subr.mxu0 %v2727
  %v2729 = vand.u32 %v2605, 4294901760
  %v2730 = vsub.f32 %v2605, %v2729
  %v2731 = vand.u32 %v2730, 4294901760
  %v2732 = vsub.f32 %v2730, %v2731
  %v2733 = vand.u32 %v2732, 4294901760
  %2734 = vmatpush1.msra.mxu0 %v2733
  %v2735 = vand.u32 %v2609, 4294901760
  %v2736 = vsub.f32 %v2609, %v2735
  %v2737 = vand.u32 %v2736, 4294901760
  %v2738 = vsub.f32 %v2736, %v2737
  %v2739 = vand.u32 %v2738, 4294901760
  %2740 = vmatprep.subr.mxu0 %v2739
  %v2741 = vand.u32 %v2608, 4294901760
  %v2742 = vsub.f32 %v2608, %v2741
  %v2743 = vand.u32 %v2742, 4294901760
  %v2744 = vsub.f32 %v2742, %v2743
  %v2745 = vand.u32 %v2744, 4294901760
  %2746 = vmatpush1.msra.mxu0 %v2745
  %2747 = vmatprep.subr.mxu0 0.0
  %2748 = vmatpush1.msra.mxu0 0.0
  %2749 = vmatprep.subr.mxu0 0.0
  %2750 = vmatpush1.msra.mxu0 0.0
  %2751 = vmatprep.subr.mxu0 0.0
  %2752 = vmatpush1.msra.mxu0 0.0
  %2753 = vmatprep.subr.mxu0 0.0
  %2754 = vmatpush1.msra.mxu0 0.0
  %2755 = vmatprep.subr.mxu0 0.0
  %2756 = vmatpush1.msra.mxu0 0.0
  %2757 = vmatprep.subr.mxu0 0.0
  %2758 = vmatpush1.msra.mxu0 0.0
  %2759 = vmatprep.subr.mxu0 0.0
  %2760 = vmatpush1.msra.mxu0 0.0
  %2761 = vmatprep.subr.mxu0 0.0
  %2762 = vmatpush1.msra.mxu0 0.0
  %2763 = vmatprep.subr.mxu0 0.0
  %2764 = vmatpush1.msra.mxu0 0.0
  %2765 = vmatprep.subr.mxu0 0.0
  %2766 = vmatpush1.msra.mxu0 0.0
  %2767 = vmatprep.subr.mxu0 0.0
  %2768 = vmatpush1.msra.mxu0 0.0
  %2769 = vmatprep.subr.mxu0 0.0
  %2770 = vmatpush1.msra.mxu0 0.0
  %2771 = vmatprep.subr.mxu0 0.0
  %2772 = vmatpush1.msra.mxu0 0.0
  %2773 = vmatprep.subr.mxu0 0.0
  %2774 = vmatpush1.msra.mxu0 0.0
  %2775 = vmatprep.subr.mxu0 0.0
  %2776 = vmatpush1.msra.mxu0 0.0
  %2777 = vmatprep.subr.mxu0 0.0
  %2778 = vmatpush1.msra.mxu0 0.0
  %2779 = vmatprep.subr.mxu0 0.0
  %2780 = vmatpush1.msra.mxu0 0.0
  %2781 = vmatprep.subr.mxu0 0.0
  %2782 = vmatpush1.msra.mxu0 0.0
  %2783 = vmatprep.subr.mxu0 0.0
  %2784 = vmatpush1.msra.mxu0 0.0
  %2785 = vmatprep.subr.mxu0 0.0
  %2786 = vmatpush1.msra.mxu0 0.0
  %2787 = vmatprep.subr.mxu0 0.0
  %2788 = vmatpush1.msra.mxu0 0.0
  %2789 = vmatprep.subr.mxu0 0.0
  %2790 = vmatpush1.msra.mxu0 0.0
  %2791 = vmatprep.subr.mxu0 0.0
  %2792 = vmatpush1.msra.mxu0 0.0
  %2793 = vmatprep.subr.mxu0 0.0
  %2794 = vmatpush1.msra.mxu0 0.0
  %2795 = vmatprep.subr.mxu0 0.0
  %2796 = vmatpush1.msra.mxu0 0.0
  %2797 = vmatprep.subr.mxu0 0.0
  %2798 = vmatpush1.msra.mxu0 0.0
  %2799 = vmatprep.subr.mxu0 0.0
  %2800 = vmatpush1.msra.mxu0 0.0
  %2801 = vmatprep.subr.mxu0 0.0
  %2802 = vmatpush1.msra.mxu0 0.0
  %2803 = vmatprep.mubr.f32.mxu0 0.0
  %v2804 = vand.u32 %v2613, 4294901760
  %2805 = vmatmul.mubr.f32.gmra.mrb[0].mxu0 %v2804
  %v2806 = vpop.f32.mrb[0].mxu0
  %v2807 = vadd.f32 %v2695, %v2806
  %v2808 = vpop.f32.mrb[0].mxu0
  %v2809 = vadd.f32 %v2697, %v2808
  %2810 = vdwg.mxu0
  %v2811 = vand.u32 %v2600, 4294901760
  %v2812 = vsub.f32 %v2600, %v2811
  %2813 = vmatprep.subr.mxu0 %v2812
  %v2814 = vand.u32 %v2599, 4294901760
  %v2815 = vsub.f32 %v2599, %v2814
  %2816 = vmatpush1.msra.mxu0 %v2815
  %v2817 = vand.u32 %v2603, 4294901760
  %v2818 = vsub.f32 %v2603, %v2817
  %2819 = vmatprep.subr.mxu0 %v2818
  %v2820 = vand.u32 %v2602, 4294901760
  %v2821 = vsub.f32 %v2602, %v2820
  %2822 = vmatpush1.msra.mxu0 %v2821
  %v2823 = vand.u32 %v2606, 4294901760
  %v2824 = vsub.f32 %v2606, %v2823
  %2825 = vmatprep.subr.mxu0 %v2824
  %v2826 = vand.u32 %v2605, 4294901760
  %v2827 = vsub.f32 %v2605, %v2826
  %2828 = vmatpush1.msra.mxu0 %v2827
  %v2829 = vand.u32 %v2609, 4294901760
  %v2830 = vsub.f32 %v2609, %v2829
  %2831 = vmatprep.subr.mxu0 %v2830
  %v2832 = vand.u32 %v2608, 4294901760
  %v2833 = vsub.f32 %v2608, %v2832
  %2834 = vmatpush1.msra.mxu0 %v2833
  %2835 = vmatprep.subr.mxu0 0.0
  %2836 = vmatpush1.msra.mxu0 0.0
  %2837 = vmatprep.subr.mxu0 0.0
  %2838 = vmatpush1.msra.mxu0 0.0
  %2839 = vmatprep.subr.mxu0 0.0
  %2840 = vmatpush1.msra.mxu0 0.0
  %2841 = vmatprep.subr.mxu0 0.0
  %2842 = vmatpush1.msra.mxu0 0.0
  %2843 = vmatprep.subr.mxu0 0.0
  %2844 = vmatpush1.msra.mxu0 0.0
  %2845 = vmatprep.subr.mxu0 0.0
  %2846 = vmatpush1.msra.mxu0 0.0
  %2847 = vmatprep.subr.mxu0 0.0
  %2848 = vmatpush1.msra.mxu0 0.0
  %2849 = vmatprep.subr.mxu0 0.0
  %2850 = vmatpush1.msra.mxu0 0.0
  %2851 = vmatprep.subr.mxu0 0.0
  %2852 = vmatpush1.msra.mxu0 0.0
  %2853 = vmatprep.subr.mxu0 0.0
  %2854 = vmatpush1.msra.mxu0 0.0
  %2855 = vmatprep.subr.mxu0 0.0
  %2856 = vmatpush1.msra.mxu0 0.0
  %2857 = vmatprep.subr.mxu0 0.0
  %2858 = vmatpush1.msra.mxu0 0.0
  %2859 = vmatprep.subr.mxu0 0.0
  %2860 = vmatpush1.msra.mxu0 0.0
  %2861 = vmatprep.subr.mxu0 0.0
  %2862 = vmatpush1.msra.mxu0 0.0
  %2863 = vmatprep.subr.mxu0 0.0
  %2864 = vmatpush1.msra.mxu0 0.0
  %2865 = vmatprep.subr.mxu0 0.0
  %2866 = vmatpush1.msra.mxu0 0.0
  %2867 = vmatprep.subr.mxu0 0.0
  %2868 = vmatpush1.msra.mxu0 0.0
  %2869 = vmatprep.subr.mxu0 0.0
  %2870 = vmatpush1.msra.mxu0 0.0
  %2871 = vmatprep.subr.mxu0 0.0
  %2872 = vmatpush1.msra.mxu0 0.0
  %2873 = vmatprep.subr.mxu0 0.0
  %2874 = vmatpush1.msra.mxu0 0.0
  %2875 = vmatprep.subr.mxu0 0.0
  %2876 = vmatpush1.msra.mxu0 0.0
  %2877 = vmatprep.subr.mxu0 0.0
  %2878 = vmatpush1.msra.mxu0 0.0
  %2879 = vmatprep.subr.mxu0 0.0
  %2880 = vmatpush1.msra.mxu0 0.0
  %2881 = vmatprep.subr.mxu0 0.0
  %2882 = vmatpush1.msra.mxu0 0.0
  %2883 = vmatprep.subr.mxu0 0.0
  %2884 = vmatpush1.msra.mxu0 0.0
  %2885 = vmatprep.subr.mxu0 0.0
  %2886 = vmatpush1.msra.mxu0 0.0
  %2887 = vmatprep.subr.mxu0 0.0
  %2888 = vmatpush1.msra.mxu0 0.0
  %2889 = vmatprep.subr.mxu0 0.0
  %2890 = vmatpush1.msra.mxu0 0.0
  %2891 = vmatprep.mubr.f32.mxu0 0.0
  %v2892 = vand.u32 %v2613, 4294901760
  %v2893 = vsub.f32 %v2613, %v2892
  %2894 = vmatmul.mubr.f32.gmra.mrb[0].mxu0 %v2893
  %v2895 = vpop.f32.mrb[0].mxu0
  %v2896 = vadd.f32 %v2807, %v2895
  %v2897 = vpop.f32.mrb[0].mxu0
  %v2898 = vadd.f32 %v2809, %v2897
  %2899 = vdwg.mxu0
  %v2900 = vand.u32 %v2600, 4294901760
  %2901 = vmatprep.subr.mxu0 %v2900
  %v2902 = vand.u32 %v2599, 4294901760
  %2903 = vmatpush1.msra.mxu0 %v2902
  %v2904 = vand.u32 %v2603, 4294901760
  %2905 = vmatprep.subr.mxu0 %v2904
  %v2906 = vand.u32 %v2602, 4294901760
  %2907 = vmatpush1.msra.mxu0 %v2906
  %v2908 = vand.u32 %v2606, 4294901760
  %2909 = vmatprep.subr.mxu0 %v2908
  %v2910 = vand.u32 %v2605, 4294901760
  %2911 = vmatpush1.msra.mxu0 %v2910
  %v2912 = vand.u32 %v2609, 4294901760
  %2913 = vmatprep.subr.mxu0 %v2912
  %v2914 = vand.u32 %v2608, 4294901760
  %2915 = vmatpush1.msra.mxu0 %v2914
  %2916 = vmatprep.subr.mxu0 0.0
  %2917 = vmatpush1.msra.mxu0 0.0
  %2918 = vmatprep.subr.mxu0 0.0
  %2919 = vmatpush1.msra.mxu0 0.0
  %2920 = vmatprep.subr.mxu0 0.0
  %2921 = vmatpush1.msra.mxu0 0.0
  %2922 = vmatprep.subr.mxu0 0.0
  %2923 = vmatpush1.msra.mxu0 0.0
  %2924 = vmatprep.subr.mxu0 0.0
  %2925 = vmatpush1.msra.mxu0 0.0
  %2926 = vmatprep.subr.mxu0 0.0
  %2927 = vmatpush1.msra.mxu0 0.0
  %2928 = vmatprep.subr.mxu0 0.0
  %2929 = vmatpush1.msra.mxu0 0.0
  %2930 = vmatprep.subr.mxu0 0.0
  %2931 = vmatpush1.msra.mxu0 0.0
  %2932 = vmatprep.subr.mxu0 0.0
  %2933 = vmatpush1.msra.mxu0 0.0
  %2934 = vmatprep.subr.mxu0 0.0
  %2935 = vmatpush1.msra.mxu0 0.0
  %2936 = vmatprep.subr.mxu0 0.0
  %2937 = vmatpush1.msra.mxu0 0.0
  %2938 = vmatprep.subr.mxu0 0.0
  %2939 = vmatpush1.msra.mxu0 0.0
  %2940 = vmatprep.subr.mxu0 0.0
  %2941 = vmatpush1.msra.mxu0 0.0
  %2942 = vmatprep.subr.mxu0 0.0
  %2943 = vmatpush1.msra.mxu0 0.0
  %2944 = vmatprep.subr.mxu0 0.0
  %2945 = vmatpush1.msra.mxu0 0.0
  %2946 = vmatprep.subr.mxu0 0.0
  %2947 = vmatpush1.msra.mxu0 0.0
  %2948 = vmatprep.subr.mxu0 0.0
  %2949 = vmatpush1.msra.mxu0 0.0
  %2950 = vmatprep.subr.mxu0 0.0
  %2951 = vmatpush1.msra.mxu0 0.0
  %2952 = vmatprep.subr.mxu0 0.0
  %2953 = vmatpush1.msra.mxu0 0.0
  %2954 = vmatprep.subr.mxu0 0.0
  %2955 = vmatpush1.msra.mxu0 0.0
  %2956 = vmatprep.subr.mxu0 0.0
  %2957 = vmatpush1.msra.mxu0 0.0
  %2958 = vmatprep.subr.mxu0 0.0
  %2959 = vmatpush1.msra.mxu0 0.0
  %2960 = vmatprep.subr.mxu0 0.0
  %2961 = vmatpush1.msra.mxu0 0.0
  %2962 = vmatprep.subr.mxu0 0.0
  %2963 = vmatpush1.msra.mxu0 0.0
  %2964 = vmatprep.subr.mxu0 0.0
  %2965 = vmatpush1.msra.mxu0 0.0
  %2966 = vmatprep.subr.mxu0 0.0
  %2967 = vmatpush1.msra.mxu0 0.0
  %2968 = vmatprep.subr.mxu0 0.0
  %2969 = vmatpush1.msra.mxu0 0.0
  %2970 = vmatprep.subr.mxu0 0.0
  %2971 = vmatpush1.msra.mxu0 0.0
  %2972 = vmatprep.mubr.f32.mxu0 0.0
  %v2973 = vand.u32 %v2613, 4294901760
  %v2974 = vsub.f32 %v2613, %v2973
  %v2975 = vand.u32 %v2974, 4294901760
  %2976 = vmatmul.mubr.f32.gmra.mrb[0].mxu0 %v2975
  %v2977 = vpop.f32.mrb[0].mxu0
  %v2978 = vadd.f32 %v2896, %v2977
  %v2979 = vpop.f32.mrb[0].mxu0
  %v2980 = vadd.f32 %v2898, %v2979
  %2981 = vdwg.mxu0
  %v2982 = vand.u32 %v2600, 4294901760
  %v2983 = vsub.f32 %v2600, %v2982
  %v2984 = vand.u32 %v2983, 4294901760
  %2985 = vmatprep.subr.mxu0 %v2984
  %v2986 = vand.u32 %v2599, 4294901760
  %v2987 = vsub.f32 %v2599, %v2986
  %v2988 = vand.u32 %v2987, 4294901760
  %2989 = vmatpush1.msra.mxu0 %v2988
  %v2990 = vand.u32 %v2603, 4294901760
  %v2991 = vsub.f32 %v2603, %v2990
  %v2992 = vand.u32 %v2991, 4294901760
  %2993 = vmatprep.subr.mxu0 %v2992
  %v2994 = vand.u32 %v2602, 4294901760
  %v2995 = vsub.f32 %v2602, %v2994
  %v2996 = vand.u32 %v2995, 4294901760
  %2997 = vmatpush1.msra.mxu0 %v2996
  %v2998 = vand.u32 %v2606, 4294901760
  %v2999 = vsub.f32 %v2606, %v2998
  %v3000 = vand.u32 %v2999, 4294901760
  %3001 = vmatprep.subr.mxu0 %v3000
  %v3002 = vand.u32 %v2605, 4294901760
  %v3003 = vsub.f32 %v2605, %v3002
  %v3004 = vand.u32 %v3003, 4294901760
  %3005 = vmatpush1.msra.mxu0 %v3004
  %v3006 = vand.u32 %v2609, 4294901760
  %v3007 = vsub.f32 %v2609, %v3006
  %v3008 = vand.u32 %v3007, 4294901760
  %3009 = vmatprep.subr.mxu0 %v3008
  %v3010 = vand.u32 %v2608, 4294901760
  %v3011 = vsub.f32 %v2608, %v3010
  %v3012 = vand.u32 %v3011, 4294901760
  %3013 = vmatpush1.msra.mxu0 %v3012
  %3014 = vmatprep.subr.mxu0 0.0
  %3015 = vmatpush1.msra.mxu0 0.0
  %3016 = vmatprep.subr.mxu0 0.0
  %3017 = vmatpush1.msra.mxu0 0.0
  %3018 = vmatprep.subr.mxu0 0.0
  %3019 = vmatpush1.msra.mxu0 0.0
  %3020 = vmatprep.subr.mxu0 0.0
  %3021 = vmatpush1.msra.mxu0 0.0
  %3022 = vmatprep.subr.mxu0 0.0
  %3023 = vmatpush1.msra.mxu0 0.0
  %3024 = vmatprep.subr.mxu0 0.0
  %3025 = vmatpush1.msra.mxu0 0.0
  %3026 = vmatprep.subr.mxu0 0.0
  %3027 = vmatpush1.msra.mxu0 0.0
  %3028 = vmatprep.subr.mxu0 0.0
  %3029 = vmatpush1.msra.mxu0 0.0
  %3030 = vmatprep.subr.mxu0 0.0
  %3031 = vmatpush1.msra.mxu0 0.0
  %3032 = vmatprep.subr.mxu0 0.0
  %3033 = vmatpush1.msra.mxu0 0.0
  %3034 = vmatprep.subr.mxu0 0.0
  %3035 = vmatpush1.msra.mxu0 0.0
  %3036 = vmatprep.subr.mxu0 0.0
  %3037 = vmatpush1.msra.mxu0 0.0
  %3038 = vmatprep.subr.mxu0 0.0
  %3039 = vmatpush1.msra.mxu0 0.0
  %3040 = vmatprep.subr.mxu0 0.0
  %3041 = vmatpush1.msra.mxu0 0.0
  %3042 = vmatprep.subr.mxu0 0.0
  %3043 = vmatpush1.msra.mxu0 0.0
  %3044 = vmatprep.subr.mxu0 0.0
  %3045 = vmatpush1.msra.mxu0 0.0
  %3046 = vmatprep.subr.mxu0 0.0
  %3047 = vmatpush1.msra.mxu0 0.0
  %3048 = vmatprep.subr.mxu0 0.0
  %3049 = vmatpush1.msra.mxu0 0.0
  %3050 = vmatprep.subr.mxu0 0.0
  %3051 = vmatpush1.msra.mxu0 0.0
  %3052 = vmatprep.subr.mxu0 0.0
  %3053 = vmatpush1.msra.mxu0 0.0
  %3054 = vmatprep.subr.mxu0 0.0
  %3055 = vmatpush1.msra.mxu0 0.0
  %3056 = vmatprep.subr.mxu0 0.0
  %3057 = vmatpush1.msra.mxu0 0.0
  %3058 = vmatprep.subr.mxu0 0.0
  %3059 = vmatpush1.msra.mxu0 0.0
  %3060 = vmatprep.subr.mxu0 0.0
  %3061 = vmatpush1.msra.mxu0 0.0
  %3062 = vmatprep.subr.mxu0 0.0
  %3063 = vmatpush1.msra.mxu0 0.0
  %3064 = vmatprep.subr.mxu0 0.0
  %3065 = vmatpush1.msra.mxu0 0.0
  %3066 = vmatprep.subr.mxu0 0.0
  %3067 = vmatpush1.msra.mxu0 0.0
  %3068 = vmatprep.subr.mxu0 0.0
  %3069 = vmatpush1.msra.mxu0 0.0
  %3070 = vmatprep.mubr.f32.mxu0 0.0
  %v3071 = vand.u32 %v2613, 4294901760
  %3072 = vmatmul.mubr.f32.gmra.mrb[0].mxu0 %v3071
  %v3073 = vpop.f32.mrb[0].mxu0
  %v3074 = vadd.f32 %v2978, %v3073
  %v3075 = vpop.f32.mrb[0].mxu0
  %v3076 = vadd.f32 %v2980, %v3075
  %3077 = vdwg.mxu0
  %v3078 = vand.u32 %v2600, 4294901760
  %3079 = vmatprep.subr.mxu0 %v3078
  %v3080 = vand.u32 %v2599, 4294901760
  %3081 = vmatpush1.msra.mxu0 %v3080
  %v3082 = vand.u32 %v2603, 4294901760
  %3083 = vmatprep.subr.mxu0 %v3082
  %v3084 = vand.u32 %v2602, 4294901760
  %3085 = vmatpush1.msra.mxu0 %v3084
  %v3086 = vand.u32 %v2606, 4294901760
  %3087 = vmatprep.subr.mxu0 %v3086
  %v3088 = vand.u32 %v2605, 4294901760
  %3089 = vmatpush1.msra.mxu0 %v3088
  %v3090 = vand.u32 %v2609, 4294901760
  %3091 = vmatprep.subr.mxu0 %v3090
  %v3092 = vand.u32 %v2608, 4294901760
  %3093 = vmatpush1.msra.mxu0 %v3092
  %3094 = vmatprep.subr.mxu0 0.0
  %3095 = vmatpush1.msra.mxu0 0.0
  %3096 = vmatprep.subr.mxu0 0.0
  %3097 = vmatpush1.msra.mxu0 0.0
  %3098 = vmatprep.subr.mxu0 0.0
  %3099 = vmatpush1.msra.mxu0 0.0
  %3100 = vmatprep.subr.mxu0 0.0
  %3101 = vmatpush1.msra.mxu0 0.0
  %3102 = vmatprep.subr.mxu0 0.0
  %3103 = vmatpush1.msra.mxu0 0.0
  %3104 = vmatprep.subr.mxu0 0.0
  %3105 = vmatpush1.msra.mxu0 0.0
  %3106 = vmatprep.subr.mxu0 0.0
  %3107 = vmatpush1.msra.mxu0 0.0
  %3108 = vmatprep.subr.mxu0 0.0
  %3109 = vmatpush1.msra.mxu0 0.0
  %3110 = vmatprep.subr.mxu0 0.0
  %3111 = vmatpush1.msra.mxu0 0.0
  %3112 = vmatprep.subr.mxu0 0.0
  %3113 = vmatpush1.msra.mxu0 0.0
  %3114 = vmatprep.subr.mxu0 0.0
  %3115 = vmatpush1.msra.mxu0 0.0
  %3116 = vmatprep.subr.mxu0 0.0
  %3117 = vmatpush1.msra.mxu0 0.0
  %3118 = vmatprep.subr.mxu0 0.0
  %3119 = vmatpush1.msra.mxu0 0.0
  %3120 = vmatprep.subr.mxu0 0.0
  %3121 = vmatpush1.msra.mxu0 0.0
  %3122 = vmatprep.subr.mxu0 0.0
  %3123 = vmatpush1.msra.mxu0 0.0
  %3124 = vmatprep.subr.mxu0 0.0
  %3125 = vmatpush1.msra.mxu0 0.0
  %3126 = vmatprep.subr.mxu0 0.0
  %3127 = vmatpush1.msra.mxu0 0.0
  %3128 = vmatprep.subr.mxu0 0.0
  %3129 = vmatpush1.msra.mxu0 0.0
  %3130 = vmatprep.subr.mxu0 0.0
  %3131 = vmatpush1.msra.mxu0 0.0
  %3132 = vmatprep.subr.mxu0 0.0
  %3133 = vmatpush1.msra.mxu0 0.0
  %3134 = vmatprep.subr.mxu0 0.0
  %3135 = vmatpush1.msra.mxu0 0.0
  %3136 = vmatprep.subr.mxu0 0.0
  %3137 = vmatpush1.msra.mxu0 0.0
  %3138 = vmatprep.subr.mxu0 0.0
  %3139 = vmatpush1.msra.mxu0 0.0
  %3140 = vmatprep.subr.mxu0 0.0
  %3141 = vmatpush1.msra.mxu0 0.0
  %3142 = vmatprep.subr.mxu0 0.0
  %3143 = vmatpush1.msra.mxu0 0.0
  %3144 = vmatprep.subr.mxu0 0.0
  %3145 = vmatpush1.msra.mxu0 0.0
  %3146 = vmatprep.subr.mxu0 0.0
  %3147 = vmatpush1.msra.mxu0 0.0
  %3148 = vmatprep.subr.mxu0 0.0
  %3149 = vmatpush1.msra.mxu0 0.0
  %3150 = vmatprep.mubr.f32.mxu0 0.0
  %v3151 = vand.u32 %v2613, 4294901760
  %3152 = vmatmul.mubr.f32.gmra.mrb[0].mxu0 %v3151
  %v3153 = vpop.f32.mrb[0].mxu0
  %v3154 = vadd.f32 %v3074, %v3153
  %v3155 = vpop.f32.mrb[0].mxu0
  %v3156 = vadd.f32 %v3076, %v3155
  %3157 = vdwg.mxu0
  %3158 = vmatprep.subr.mxu0 0.0
  %v3159 = vand.u32 %v2601, 4294901760
  %3160 = vmatpush1.msra.mxu0 %v3159
  %3161 = vmatprep.subr.mxu0 0.0
  %v3162 = vand.u32 %v2604, 4294901760
  %3163 = vmatpush1.msra.mxu0 %v3162
  %3164 = vmatprep.subr.mxu0 0.0
  %v3165 = vand.u32 %v2607, 4294901760
  %3166 = vmatpush1.msra.mxu0 %v3165
  %3167 = vmatprep.subr.mxu0 0.0
  %v3168 = vand.u32 %v2610, 4294901760
  %3169 = vmatpush1.msra.mxu0 %v3168
  %3170 = vmatprep.subr.mxu0 0.0
  %3171 = vmatpush1.msra.mxu0 0.0
  %3172 = vmatprep.subr.mxu0 0.0
  %3173 = vmatpush1.msra.mxu0 0.0
  %3174 = vmatprep.subr.mxu0 0.0
  %3175 = vmatpush1.msra.mxu0 0.0
  %3176 = vmatprep.subr.mxu0 0.0
  %3177 = vmatpush1.msra.mxu0 0.0
  %3178 = vmatprep.subr.mxu0 0.0
  %3179 = vmatpush1.msra.mxu0 0.0
  %3180 = vmatprep.subr.mxu0 0.0
  %3181 = vmatpush1.msra.mxu0 0.0
  %3182 = vmatprep.subr.mxu0 0.0
  %3183 = vmatpush1.msra.mxu0 0.0
  %3184 = vmatprep.subr.mxu0 0.0
  %3185 = vmatpush1.msra.mxu0 0.0
  %3186 = vmatprep.subr.mxu0 0.0
  %3187 = vmatpush1.msra.mxu0 0.0
  %3188 = vmatprep.subr.mxu0 0.0
  %3189 = vmatpush1.msra.mxu0 0.0
  %3190 = vmatprep.subr.mxu0 0.0
  %3191 = vmatpush1.msra.mxu0 0.0
  %3192 = vmatprep.subr.mxu0 0.0
  %3193 = vmatpush1.msra.mxu0 0.0
  %3194 = vmatprep.subr.mxu0 0.0
  %3195 = vmatpush1.msra.mxu0 0.0
  %3196 = vmatprep.subr.mxu0 0.0
  %3197 = vmatpush1.msra.mxu0 0.0
  %3198 = vmatprep.subr.mxu0 0.0
  %3199 = vmatpush1.msra.mxu0 0.0
  %3200 = vmatprep.subr.mxu0 0.0
  %3201 = vmatpush1.msra.mxu0 0.0
  %3202 = vmatprep.subr.mxu0 0.0
  %3203 = vmatpush1.msra.mxu0 0.0
  %3204 = vmatprep.subr.mxu0 0.0
  %3205 = vmatpush1.msra.mxu0 0.0
  %3206 = vmatprep.subr.mxu0 0.0
  %3207 = vmatpush1.msra.mxu0 0.0
  %3208 = vmatprep.subr.mxu0 0.0
  %3209 = vmatpush1.msra.mxu0 0.0
  %3210 = vmatprep.subr.mxu0 0.0
  %3211 = vmatpush1.msra.mxu0 0.0
  %3212 = vmatprep.subr.mxu0 0.0
  %3213 = vmatpush1.msra.mxu0 0.0
  %3214 = vmatprep.subr.mxu0 0.0
  %3215 = vmatpush1.msra.mxu0 0.0
  %3216 = vmatprep.subr.mxu0 0.0
  %3217 = vmatpush1.msra.mxu0 0.0
  %3218 = vmatprep.subr.mxu0 0.0
  %3219 = vmatpush1.msra.mxu0 0.0
  %3220 = vmatprep.subr.mxu0 0.0
  %3221 = vmatpush1.msra.mxu0 0.0
  %3222 = vmatprep.subr.mxu0 0.0
  %3223 = vmatpush1.msra.mxu0 0.0
  %3224 = vmatprep.subr.mxu0 0.0
  %3225 = vmatpush1.msra.mxu0 0.0
  %3226 = vmatprep.mubr.f32.mxu0 0.0
  %v3227 = vand.u32 %v2613, 4294901760
  %v3228 = vsub.f32 %v2613, %v3227
  %v3229 = vand.u32 %v3228, 4294901760
  %v3230 = vsub.f32 %v3228, %v3229
  %v3231 = vand.u32 %v3230, 4294901760
  %3232 = vmatmul.mubr.f32.gmra.mrb[0].mxu0 %v3231
  %v3233 = vpop.f32.mrb[0].mxu0
  %v3234 = vadd.f32 0.0, %v3233
  %v3235 = vpop.f32.mrb[0].mxu0
  %3236 = vdwg.mxu0
  %3237 = vmatprep.subr.mxu0 0.0
  %v3238 = vand.u32 %v2601, 4294901760
  %v3239 = vsub.f32 %v2601, %v3238
  %v3240 = vand.u32 %v3239, 4294901760
  %v3241 = vsub.f32 %v3239, %v3240
  %v3242 = vand.u32 %v3241, 4294901760
  %3243 = vmatpush1.msra.mxu0 %v3242
  %3244 = vmatprep.subr.mxu0 0.0
  %v3245 = vand.u32 %v2604, 4294901760
  %v3246 = vsub.f32 %v2604, %v3245
  %v3247 = vand.u32 %v3246, 4294901760
  %v3248 = vsub.f32 %v3246, %v3247
  %v3249 = vand.u32 %v3248, 4294901760
  %3250 = vmatpush1.msra.mxu0 %v3249
  %3251 = vmatprep.subr.mxu0 0.0
  %v3252 = vand.u32 %v2607, 4294901760
  %v3253 = vsub.f32 %v2607, %v3252
  %v3254 = vand.u32 %v3253, 4294901760
  %v3255 = vsub.f32 %v3253, %v3254
  %v3256 = vand.u32 %v3255, 4294901760
  %3257 = vmatpush1.msra.mxu0 %v3256
  %3258 = vmatprep.subr.mxu0 0.0
  %v3259 = vand.u32 %v2610, 4294901760
  %v3260 = vsub.f32 %v2610, %v3259
  %v3261 = vand.u32 %v3260, 4294901760
  %v3262 = vsub.f32 %v3260, %v3261
  %v3263 = vand.u32 %v3262, 4294901760
  %3264 = vmatpush1.msra.mxu0 %v3263
  %3265 = vmatprep.subr.mxu0 0.0
  %3266 = vmatpush1.msra.mxu0 0.0
  %3267 = vmatprep.subr.mxu0 0.0
  %3268 = vmatpush1.msra.mxu0 0.0
  %3269 = vmatprep.subr.mxu0 0.0
  %3270 = vmatpush1.msra.mxu0 0.0
  %3271 = vmatprep.subr.mxu0 0.0
  %3272 = vmatpush1.msra.mxu0 0.0
  %3273 = vmatprep.subr.mxu0 0.0
  %3274 = vmatpush1.msra.mxu0 0.0
  %3275 = vmatprep.subr.mxu0 0.0
  %3276 = vmatpush1.msra.mxu0 0.0
  %3277 = vmatprep.subr.mxu0 0.0
  %3278 = vmatpush1.msra.mxu0 0.0
  %3279 = vmatprep.subr.mxu0 0.0
  %3280 = vmatpush1.msra.mxu0 0.0
  %3281 = vmatprep.subr.mxu0 0.0
  %3282 = vmatpush1.msra.mxu0 0.0
  %3283 = vmatprep.subr.mxu0 0.0
  %3284 = vmatpush1.msra.mxu0 0.0
  %3285 = vmatprep.subr.mxu0 0.0
  %3286 = vmatpush1.msra.mxu0 0.0
  %3287 = vmatprep.subr.mxu0 0.0
  %3288 = vmatpush1.msra.mxu0 0.0
  %3289 = vmatprep.subr.mxu0 0.0
  %3290 = vmatpush1.msra.mxu0 0.0
  %3291 = vmatprep.subr.mxu0 0.0
  %3292 = vmatpush1.msra.mxu0 0.0
  %3293 = vmatprep.subr.mxu0 0.0
  %3294 = vmatpush1.msra.mxu0 0.0
  %3295 = vmatprep.subr.mxu0 0.0
  %3296 = vmatpush1.msra.mxu0 0.0
  %3297 = vmatprep.subr.mxu0 0.0
  %3298 = vmatpush1.msra.mxu0 0.0
  %3299 = vmatprep.subr.mxu0 0.0
  %3300 = vmatpush1.msra.mxu0 0.0
  %3301 = vmatprep.subr.mxu0 0.0
  %3302 = vmatpush1.msra.mxu0 0.0
  %3303 = vmatprep.subr.mxu0 0.0
  %3304 = vmatpush1.msra.mxu0 0.0
  %3305 = vmatprep.subr.mxu0 0.0
  %3306 = vmatpush1.msra.mxu0 0.0
  %3307 = vmatprep.subr.mxu0 0.0
  %3308 = vmatpush1.msra.mxu0 0.0
  %3309 = vmatprep.subr.mxu0 0.0
  %3310 = vmatpush1.msra.mxu0 0.0
  %3311 = vmatprep.subr.mxu0 0.0
  %3312 = vmatpush1.msra.mxu0 0.0
  %3313 = vmatprep.subr.mxu0 0.0
  %3314 = vmatpush1.msra.mxu0 0.0
  %3315 = vmatprep.subr.mxu0 0.0
  %3316 = vmatpush1.msra.mxu0 0.0
  %3317 = vmatprep.subr.mxu0 0.0
  %3318 = vmatpush1.msra.mxu0 0.0
  %3319 = vmatprep.subr.mxu0 0.0
  %3320 = vmatpush1.msra.mxu0 0.0
  %3321 = vmatprep.mubr.f32.mxu0 0.0
  %v3322 = vand.u32 %v2613, 4294901760
  %3323 = vmatmul.mubr.f32.gmra.mrb[0].mxu0 %v3322
  %v3324 = vpop.f32.mrb[0].mxu0
  %v3325 = vadd.f32 %v3234, %v3324
  %v3326 = vpop.f32.mrb[0].mxu0
  %3327 = vdwg.mxu0
  %3328 = vmatprep.subr.mxu0 0.0
  %v3329 = vand.u32 %v2601, 4294901760
  %v3330 = vsub.f32 %v2601, %v3329
  %3331 = vmatpush1.msra.mxu0 %v3330
  %3332 = vmatprep.subr.mxu0 0.0
  %v3333 = vand.u32 %v2604, 4294901760
  %v3334 = vsub.f32 %v2604, %v3333
  %3335 = vmatpush1.msra.mxu0 %v3334
  %3336 = vmatprep.subr.mxu0 0.0
  %v3337 = vand.u32 %v2607, 4294901760
  %v3338 = vsub.f32 %v2607, %v3337
  %3339 = vmatpush1.msra.mxu0 %v3338
  %3340 = vmatprep.subr.mxu0 0.0
  %v3341 = vand.u32 %v2610, 4294901760
  %v3342 = vsub.f32 %v2610, %v3341
  %3343 = vmatpush1.msra.mxu0 %v3342
  %3344 = vmatprep.subr.mxu0 0.0
  %3345 = vmatpush1.msra.mxu0 0.0
  %3346 = vmatprep.subr.mxu0 0.0
  %3347 = vmatpush1.msra.mxu0 0.0
  %3348 = vmatprep.subr.mxu0 0.0
  %3349 = vmatpush1.msra.mxu0 0.0
  %3350 = vmatprep.subr.mxu0 0.0
  %3351 = vmatpush1.msra.mxu0 0.0
  %3352 = vmatprep.subr.mxu0 0.0
  %3353 = vmatpush1.msra.mxu0 0.0
  %3354 = vmatprep.subr.mxu0 0.0
  %3355 = vmatpush1.msra.mxu0 0.0
  %3356 = vmatprep.subr.mxu0 0.0
  %3357 = vmatpush1.msra.mxu0 0.0
  %3358 = vmatprep.subr.mxu0 0.0
  %3359 = vmatpush1.msra.mxu0 0.0
  %3360 = vmatprep.subr.mxu0 0.0
  %3361 = vmatpush1.msra.mxu0 0.0
  %3362 = vmatprep.subr.mxu0 0.0
  %3363 = vmatpush1.msra.mxu0 0.0
  %3364 = vmatprep.subr.mxu0 0.0
  %3365 = vmatpush1.msra.mxu0 0.0
  %3366 = vmatprep.subr.mxu0 0.0
  %3367 = vmatpush1.msra.mxu0 0.0
  %3368 = vmatprep.subr.mxu0 0.0
  %3369 = vmatpush1.msra.mxu0 0.0
  %3370 = vmatprep.subr.mxu0 0.0
  %3371 = vmatpush1.msra.mxu0 0.0
  %3372 = vmatprep.subr.mxu0 0.0
  %3373 = vmatpush1.msra.mxu0 0.0
  %3374 = vmatprep.subr.mxu0 0.0
  %3375 = vmatpush1.msra.mxu0 0.0
  %3376 = vmatprep.subr.mxu0 0.0
  %3377 = vmatpush1.msra.mxu0 0.0
  %3378 = vmatprep.subr.mxu0 0.0
  %3379 = vmatpush1.msra.mxu0 0.0
  %3380 = vmatprep.subr.mxu0 0.0
  %3381 = vmatpush1.msra.mxu0 0.0
  %3382 = vmatprep.subr.mxu0 0.0
  %3383 = vmatpush1.msra.mxu0 0.0
  %3384 = vmatprep.subr.mxu0 0.0
  %3385 = vmatpush1.msra.mxu0 0.0
  %3386 = vmatprep.subr.mxu0 0.0
  %3387 = vmatpush1.msra.mxu0 0.0
  %3388 = vmatprep.subr.mxu0 0.0
  %3389 = vmatpush1.msra.mxu0 0.0
  %3390 = vmatprep.subr.mxu0 0.0
  %3391 = vmatpush1.msra.mxu0 0.0
  %3392 = vmatprep.subr.mxu0 0.0
  %3393 = vmatpush1.msra.mxu0 0.0
  %3394 = vmatprep.subr.mxu0 0.0
  %3395 = vmatpush1.msra.mxu0 0.0
  %3396 = vmatprep.subr.mxu0 0.0
  %3397 = vmatpush1.msra.mxu0 0.0
  %3398 = vmatprep.subr.mxu0 0.0
  %3399 = vmatpush1.msra.mxu0 0.0
  %3400 = vmatprep.mubr.f32.mxu0 0.0
  %v3401 = vand.u32 %v2613, 4294901760
  %v3402 = vsub.f32 %v2613, %v3401
  %3403 = vmatmul.mubr.f32.gmra.mrb[0].mxu0 %v3402
  %v3404 = vpop.f32.mrb[0].mxu0
  %v3405 = vadd.f32 %v3325, %v3404
  %v3406 = vpop.f32.mrb[0].mxu0
  %3407 = vdwg.mxu0
  %3408 = vmatprep.subr.mxu0 0.0
  %v3409 = vand.u32 %v2601, 4294901760
  %3410 = vmatpush1.msra.mxu0 %v3409
  %3411 = vmatprep.subr.mxu0 0.0
  %v3412 = vand.u32 %v2604, 4294901760
  %3413 = vmatpush1.msra.mxu0 %v3412
  %3414 = vmatprep.subr.mxu0 0.0
  %v3415 = vand.u32 %v2607, 4294901760
  %3416 = vmatpush1.msra.mxu0 %v3415
  %3417 = vmatprep.subr.mxu0 0.0
  %v3418 = vand.u32 %v2610, 4294901760
  %3419 = vmatpush1.msra.mxu0 %v3418
  %3420 = vmatprep.subr.mxu0 0.0
  %3421 = vmatpush1.msra.mxu0 0.0
  %3422 = vmatprep.subr.mxu0 0.0
  %3423 = vmatpush1.msra.mxu0 0.0
  %3424 = vmatprep.subr.mxu0 0.0
  %3425 = vmatpush1.msra.mxu0 0.0
  %3426 = vmatprep.subr.mxu0 0.0
  %3427 = vmatpush1.msra.mxu0 0.0
  %3428 = vmatprep.subr.mxu0 0.0
  %3429 = vmatpush1.msra.mxu0 0.0
  %3430 = vmatprep.subr.mxu0 0.0
  %3431 = vmatpush1.msra.mxu0 0.0
  %3432 = vmatprep.subr.mxu0 0.0
  %3433 = vmatpush1.msra.mxu0 0.0
  %3434 = vmatprep.subr.mxu0 0.0
  %3435 = vmatpush1.msra.mxu0 0.0
  %3436 = vmatprep.subr.mxu0 0.0
  %3437 = vmatpush1.msra.mxu0 0.0
  %3438 = vmatprep.subr.mxu0 0.0
  %3439 = vmatpush1.msra.mxu0 0.0
  %3440 = vmatprep.subr.mxu0 0.0
  %3441 = vmatpush1.msra.mxu0 0.0
  %3442 = vmatprep.subr.mxu0 0.0
  %3443 = vmatpush1.msra.mxu0 0.0
  %3444 = vmatprep.subr.mxu0 0.0
  %3445 = vmatpush1.msra.mxu0 0.0
  %3446 = vmatprep.subr.mxu0 0.0
  %3447 = vmatpush1.msra.mxu0 0.0
  %3448 = vmatprep.subr.mxu0 0.0
  %3449 = vmatpush1.msra.mxu0 0.0
  %3450 = vmatprep.subr.mxu0 0.0
  %3451 = vmatpush1.msra.mxu0 0.0
  %3452 = vmatprep.subr.mxu0 0.0
  %3453 = vmatpush1.msra.mxu0 0.0
  %3454 = vmatprep.subr.mxu0 0.0
  %3455 = vmatpush1.msra.mxu0 0.0
  %3456 = vmatprep.subr.mxu0 0.0
  %3457 = vmatpush1.msra.mxu0 0.0
  %3458 = vmatprep.subr.mxu0 0.0
  %3459 = vmatpush1.msra.mxu0 0.0
  %3460 = vmatprep.subr.mxu0 0.0
  %3461 = vmatpush1.msra.mxu0 0.0
  %3462 = vmatprep.subr.mxu0 0.0
  %3463 = vmatpush1.msra.mxu0 0.0
  %3464 = vmatprep.subr.mxu0 0.0
  %3465 = vmatpush1.msra.mxu0 0.0
  %3466 = vmatprep.subr.mxu0 0.0
  %3467 = vmatpush1.msra.mxu0 0.0
  %3468 = vmatprep.subr.mxu0 0.0
  %3469 = vmatpush1.msra.mxu0 0.0
  %3470 = vmatprep.subr.mxu0 0.0
  %3471 = vmatpush1.msra.mxu0 0.0
  %3472 = vmatprep.subr.mxu0 0.0
  %3473 = vmatpush1.msra.mxu0 0.0
  %3474 = vmatprep.subr.mxu0 0.0
  %3475 = vmatpush1.msra.mxu0 0.0
  %3476 = vmatprep.mubr.f32.mxu0 0.0
  %v3477 = vand.u32 %v2613, 4294901760
  %v3478 = vsub.f32 %v2613, %v3477
  %v3479 = vand.u32 %v3478, 4294901760
  %3480 = vmatmul.mubr.f32.gmra.mrb[0].mxu0 %v3479
  %v3481 = vpop.f32.mrb[0].mxu0
  %v3482 = vadd.f32 %v3405, %v3481
  %v3483 = vpop.f32.mrb[0].mxu0
  %3484 = vdwg.mxu0
  %3485 = vmatprep.subr.mxu0 0.0
  %v3486 = vand.u32 %v2601, 4294901760
  %v3487 = vsub.f32 %v2601, %v3486
  %v3488 = vand.u32 %v3487, 4294901760
  %3489 = vmatpush1.msra.mxu0 %v3488
  %3490 = vmatprep.subr.mxu0 0.0
  %v3491 = vand.u32 %v2604, 4294901760
  %v3492 = vsub.f32 %v2604, %v3491
  %v3493 = vand.u32 %v3492, 4294901760
  %3494 = vmatpush1.msra.mxu0 %v3493
  %3495 = vmatprep.subr.mxu0 0.0
  %v3496 = vand.u32 %v2607, 4294901760
  %v3497 = vsub.f32 %v2607, %v3496
  %v3498 = vand.u32 %v3497, 4294901760
  %3499 = vmatpush1.msra.mxu0 %v3498
  %3500 = vmatprep.subr.mxu0 0.0
  %v3501 = vand.u32 %v2610, 4294901760
  %v3502 = vsub.f32 %v2610, %v3501
  %v3503 = vand.u32 %v3502, 4294901760
  %3504 = vmatpush1.msra.mxu0 %v3503
  %3505 = vmatprep.subr.mxu0 0.0
  %3506 = vmatpush1.msra.mxu0 0.0
  %3507 = vmatprep.subr.mxu0 0.0
  %3508 = vmatpush1.msra.mxu0 0.0
  %3509 = vmatprep.subr.mxu0 0.0
  %3510 = vmatpush1.msra.mxu0 0.0
  %3511 = vmatprep.subr.mxu0 0.0
  %3512 = vmatpush1.msra.mxu0 0.0
  %3513 = vmatprep.subr.mxu0 0.0
  %3514 = vmatpush1.msra.mxu0 0.0
  %3515 = vmatprep.subr.mxu0 0.0
  %3516 = vmatpush1.msra.mxu0 0.0
  %3517 = vmatprep.subr.mxu0 0.0
  %3518 = vmatpush1.msra.mxu0 0.0
  %3519 = vmatprep.subr.mxu0 0.0
  %3520 = vmatpush1.msra.mxu0 0.0
  %3521 = vmatprep.subr.mxu0 0.0
  %3522 = vmatpush1.msra.mxu0 0.0
  %3523 = vmatprep.subr.mxu0 0.0
  %3524 = vmatpush1.msra.mxu0 0.0
  %3525 = vmatprep.subr.mxu0 0.0
  %3526 = vmatpush1.msra.mxu0 0.0
  %3527 = vmatprep.subr.mxu0 0.0
  %3528 = vmatpush1.msra.mxu0 0.0
  %3529 = vmatprep.subr.mxu0 0.0
  %3530 = vmatpush1.msra.mxu0 0.0
  %3531 = vmatprep.subr.mxu0 0.0
  %3532 = vmatpush1.msra.mxu0 0.0
  %3533 = vmatprep.subr.mxu0 0.0
  %3534 = vmatpush1.msra.mxu0 0.0
  %3535 = vmatprep.subr.mxu0 0.0
  %3536 = vmatpush1.msra.mxu0 0.0
  %3537 = vmatprep.subr.mxu0 0.0
  %3538 = vmatpush1.msra.mxu0 0.0
  %3539 = vmatprep.subr.mxu0 0.0
  %3540 = vmatpush1.msra.mxu0 0.0
  %3541 = vmatprep.subr.mxu0 0.0
  %3542 = vmatpush1.msra.mxu0 0.0
  %3543 = vmatprep.subr.mxu0 0.0
  %3544 = vmatpush1.msra.mxu0 0.0
  %3545 = vmatprep.subr.mxu0 0.0
  %3546 = vmatpush1.msra.mxu0 0.0
  %3547 = vmatprep.subr.mxu0 0.0
  %3548 = vmatpush1.msra.mxu0 0.0
  %3549 = vmatprep.subr.mxu0 0.0
  %3550 = vmatpush1.msra.mxu0 0.0
  %3551 = vmatprep.subr.mxu0 0.0
  %3552 = vmatpush1.msra.mxu0 0.0
  %3553 = vmatprep.subr.mxu0 0.0
  %3554 = vmatpush1.msra.mxu0 0.0
  %3555 = vmatprep.subr.mxu0 0.0
  %3556 = vmatpush1.msra.mxu0 0.0
  %3557 = vmatprep.subr.mxu0 0.0
  %3558 = vmatpush1.msra.mxu0 0.0
  %3559 = vmatprep.subr.mxu0 0.0
  %3560 = vmatpush1.msra.mxu0 0.0
  %3561 = vmatprep.mubr.f32.mxu0 0.0
  %v3562 = vand.u32 %v2613, 4294901760
  %3563 = vmatmul.mubr.f32.gmra.mrb[0].mxu0 %v3562
  %v3564 = vpop.f32.mrb[0].mxu0
  %v3565 = vadd.f32 %v3482, %v3564
  %v3566 = vpop.f32.mrb[0].mxu0
  %3567 = vdwg.mxu0
  %3568 = vmatprep.subr.mxu0 0.0
  %v3569 = vand.u32 %v2601, 4294901760
  %3570 = vmatpush1.msra.mxu0 %v3569
  %3571 = vmatprep.subr.mxu0 0.0
  %v3572 = vand.u32 %v2604, 4294901760
  %3573 = vmatpush1.msra.mxu0 %v3572
  %3574 = vmatprep.subr.mxu0 0.0
  %v3575 = vand.u32 %v2607, 4294901760
  %3576 = vmatpush1.msra.mxu0 %v3575
  %3577 = vmatprep.subr.mxu0 0.0
  %v3578 = vand.u32 %v2610, 4294901760
  %3579 = vmatpush1.msra.mxu0 %v3578
  %3580 = vmatprep.subr.mxu0 0.0
  %3581 = vmatpush1.msra.mxu0 0.0
  %3582 = vmatprep.subr.mxu0 0.0
  %3583 = vmatpush1.msra.mxu0 0.0
  %3584 = vmatprep.subr.mxu0 0.0
  %3585 = vmatpush1.msra.mxu0 0.0
  %3586 = vmatprep.subr.mxu0 0.0
  %3587 = vmatpush1.msra.mxu0 0.0
  %3588 = vmatprep.subr.mxu0 0.0
  %3589 = vmatpush1.msra.mxu0 0.0
  %3590 = vmatprep.subr.mxu0 0.0
  %3591 = vmatpush1.msra.mxu0 0.0
  %3592 = vmatprep.subr.mxu0 0.0
  %3593 = vmatpush1.msra.mxu0 0.0
  %3594 = vmatprep.subr.mxu0 0.0
  %3595 = vmatpush1.msra.mxu0 0.0
  %3596 = vmatprep.subr.mxu0 0.0
  %3597 = vmatpush1.msra.mxu0 0.0
  %3598 = vmatprep.subr.mxu0 0.0
  %3599 = vmatpush1.msra.mxu0 0.0
  %3600 = vmatprep.subr.mxu0 0.0
  %3601 = vmatpush1.msra.mxu0 0.0
  %3602 = vmatprep.subr.mxu0 0.0
  %3603 = vmatpush1.msra.mxu0 0.0
  %3604 = vmatprep.subr.mxu0 0.0
  %3605 = vmatpush1.msra.mxu0 0.0
  %3606 = vmatprep.subr.mxu0 0.0
  %3607 = vmatpush1.msra.mxu0 0.0
  %3608 = vmatprep.subr.mxu0 0.0
  %3609 = vmatpush1.msra.mxu0 0.0
  %3610 = vmatprep.subr.mxu0 0.0
  %3611 = vmatpush1.msra.mxu0 0.0
  %3612 = vmatprep.subr.mxu0 0.0
  %3613 = vmatpush1.msra.mxu0 0.0
  %3614 = vmatprep.subr.mxu0 0.0
  %3615 = vmatpush1.msra.mxu0 0.0
  %3616 = vmatprep.subr.mxu0 0.0
  %3617 = vmatpush1.msra.mxu0 0.0
  %3618 = vmatprep.subr.mxu0 0.0
  %3619 = vmatpush1.msra.mxu0 0.0
  %3620 = vmatprep.subr.mxu0 0.0
  %3621 = vmatpush1.msra.mxu0 0.0
  %3622 = vmatprep.subr.mxu0 0.0
  %3623 = vmatpush1.msra.mxu0 0.0
  %3624 = vmatprep.subr.mxu0 0.0
  %3625 = vmatpush1.msra.mxu0 0.0
  %3626 = vmatprep.subr.mxu0 0.0
  %3627 = vmatpush1.msra.mxu0 0.0
  %3628 = vmatprep.subr.mxu0 0.0
  %3629 = vmatpush1.msra.mxu0 0.0
  %3630 = vmatprep.subr.mxu0 0.0
  %3631 = vmatpush1.msra.mxu0 0.0
  %3632 = vmatprep.subr.mxu0 0.0
  %3633 = vmatpush1.msra.mxu0 0.0
  %3634 = vmatprep.subr.mxu0 0.0
  %3635 = vmatpush1.msra.mxu0 0.0
  %3636 = vmatprep.mubr.f32.mxu0 0.0
  %v3637 = vand.u32 %v2613, 4294901760
  %3638 = vmatmul.mubr.f32.gmra.mrb[0].mxu0 %v3637
  %v3639 = vpop.f32.mrb[0].mxu0
  %v3640 = vadd.f32 %v3565, %v3639
  %v3641 = vpop.f32.mrb[0].mxu0
  %3642 = vdwg.mxu0
  %v3643 = vmax.f32 %v3154, 0.0
  %v3644 = vmax.f32 %v3156, 0.0
  %v3645 = vmax.f32 %v3640, 0.0
  %3646 = vst [vmem:[%s4] sm:$0xff] %v3643
  %3647 = vst [vmem:[%s4 + $0x8] sm:$0xff] %v3644
  %3648 = vst [vmem:[%s4 + $0x10] sm:$0xff] %v3645
  // Predicated region
  $region18: #{_calc_padding_pppad_fwd.4} parent=0 // pred_check
    _
  $region19: #{_calc_padding_pppad_fwd.4} parent=0 // pred_check_branch
    %3650 = sbr.rel (0) target = $region21
  $region20: #{_calc_padding_pppad_fwd.4} parent=0 // pred_region
    _
  $region21: #{_calc_padding_pppad_fwd.4} parent=0 // pred_fallthru
    _
  // Predicated region
  $region22: #{_calc_padding_pppad_fwd.4} parent=0 // pred_check
    _
  $region23: #{_calc_padding_pppad_fwd.4} parent=0 // pred_check_branch
    %3652 = sbr.rel (0) target = $region25
  $region24: #{_calc_padding_pppad_fwd.4} parent=0 // pred_region
    _
  $region25: #{_calc_padding_pppad_fwd.4} parent=0 // pred_fallthru
    _

</llo_original>
